<compile_context>
chip_gen: v7x
topology: tpu7x:2x2x1
jax: 0.10.0
libtpu: 0.0.40
codegen_flags: <defaults>
</compile_context>

<pallas_src>
import functools

import jax
import jax.numpy as jnp
from jax import lax
from jax.experimental import pallas as pl
from jax.experimental.pallas import tpu as pltpu

# ---------------- problem sizes (small, consistent with the module) ----------
VOCAB_SIZE = 50
PAD_IDX = 0
EMB_DIM = 32       # args.embedding_dim
HIDDEN_DIM = 32    # args.hidden_dim
Z_DIM = 8          # args.z_dim
N_CLASSES = 4      # args.n_classes
GAMMA = 1.0        # args.gamma
EPS = 1e-6         # args.eps
BATCH = 8
SEQ_LEN = 16
N_INSTANCES = 2    # independent (tokens, y) instances batched per pallas_call

# ---------------- packed weight-slab layout: one [WEIGHT_ROWS, H] input ------
OFF_WIH0 = 0                               # [E, H]  W_ih_l0^T
OFF_WHH0 = OFF_WIH0 + EMB_DIM              # [H, H]  W_hh_l0^T
OFF_WIH1 = OFF_WHH0 + HIDDEN_DIM           # [H, H]  W_ih_l1^T
OFF_WHH1 = OFF_WIH1 + HIDDEN_DIM           # [H, H]  W_hh_l1^T
OFF_WO   = OFF_WHH1 + HIDDEN_DIM           # [Z, H]  W_out (contract last dims)
OFF_B0   = OFF_WO + Z_DIM                  # [H]     b_ih_l0 + b_hh_l0
OFF_B1   = OFF_B0 + 1                      # [H]     b_ih_l1 + b_hh_l1
OFF_WA   = OFF_B1 + 1                      # [H]     attention weight
OFF_BA   = OFF_WA + 1                      # scalar  attention bias (bcast lanes)
OFF_BO   = OFF_BA + 1                      # [Z]     output bias in lanes 0:Z
WEIGHT_ROWS = ((OFF_BO + 1 + 7) // 8) * 8  # pad rows to a sublane multiple (144)


# --------------------------- fused forward kernel ----------------------------
def fused_kernel(emb_ref, mask_ref, onehot_ref, wslab_ref,
                 probs_ref, loss_ref, work_ref, *, gamma, eps):
    """One grid step == one independent (tokens, y) problem instance.

    emb_ref    [B*L, E]   embeddings (gather done by XLA in the wrapper)
    mask_ref   [B*L, 1]   padding mask, flattened like the RNN output rows
    onehot_ref [B, C]     one-hot labels (per-instance, hence not in the slab)
    wslab_ref  [WEIGHT_ROWS, H]  all weights/biases packed into one VMEM input
    probs_ref  [B, C]     log-probs output
    loss_ref   [1, 1]     summed NLL loss output
    work_ref   [B*L, H]   scratch: x@Wih0+b0, rows overwritten in-place with h2
    """
    BL, H = work_ref.shape
    B, C = onehot_ref.shape
    L = BL // B

    # ---- unpack the slab once (static slices of a single DMA'd input) -------
    wih0 = wslab_ref[OFF_WIH0:OFF_WIH0 + EMB_DIM, :]                  # [E, H]
    # recurrent weights in bf16: single-pass MXU on the serial chain
    whh0 = wslab_ref[OFF_WHH0:OFF_WHH0 + H, :].astype(jnp.bfloat16)   # [H, H]
    wih1 = wslab_ref[OFF_WIH1:OFF_WIH1 + H, :].astype(jnp.bfloat16)   # [H, H]
    whh1 = wslab_ref[OFF_WHH1:OFF_WHH1 + H, :].astype(jnp.bfloat16)   # [H, H]
    wo = wslab_ref[OFF_WO:OFF_WO + Z_DIM, :]                          # [Z, H]
    b0 = wslab_ref[OFF_B0:OFF_B0 + 1, :]                              # [1, H]
    # hoisted broadcast (JAX does not CSE broadcast_in_dim inside the loop)
    b1 = jnp.broadcast_to(wslab_ref[OFF_B1:OFF_B1 + 1, :], (L, H))    # [L, H]
    wa = wslab_ref[OFF_WA:OFF_WA + 1, :]                              # [1, H]
    ba = wslab_ref[OFF_BA:OFF_BA + 1, 0:1]                            # [1, 1]
    bo = wslab_ref[OFF_BO:OFF_BO + 1, 0:Z_DIM]                        # [1, Z]

    # ---- layer-1 input projection, hoisted off the serial recurrence --------
    work_ref[...] = (jnp.dot(emb_ref[...], wih0,
                             preferred_element_type=jnp.float32) + b0)

    # ---- 2-layer ReLU RNN (recurrence over the batch axis; "RNN batch" = L) -
    def step(t, carry):
        h1, h2 = carry                                   # bf16 [L, H] carries
        r = pl.multiple_of(t * L, L)
        xp = work_ref[pl.ds(r, L), :]                    # [L, H] pre-projected
        h1f = jnp.maximum(
            xp + jnp.dot(h1, whh0, preferred_element_type=jnp.float32), 0.0)
        h1b = h1f.astype(jnp.bfloat16)
        # Kept as two dots on purpose: h2_prev@whh1 only depends on the
        # previous h2, so it sits OFF the serial critical path; fusing
        # [L,2H]@[2H,H] would put a K=64 contraction ON the chain plus a
        # lane concat/roll per step.
        h2f = jnp.maximum(
            jnp.dot(h1b, wih1, preferred_element_type=jnp.float32)
            + jnp.dot(h2, whh1, preferred_element_type=jnp.float32)
            + b1, 0.0)
        # reuse the consumed xproj rows to stash h2 for the pooled epilogue
        work_ref[pl.ds(r, L), :] = h2f
        return (h1b, h2f.astype(jnp.bfloat16))

    init = (jnp.zeros((L, H), jnp.bfloat16), jnp.zeros((L, H), jnp.bfloat16))
    lax.fori_loop(0, B, step, init, unroll=True)

    # ---- attention pooling, deferred to a batched epilogue ------------------
    h2_all = work_ref[...]                                            # [BL, H]
    score = jnp.sum(h2_all * wa, axis=1, keepdims=True) + ba          # [BL, 1]
    # subtracting one GLOBAL constant is exact after per-example normalization
    score = score - jnp.max(score)
    a_all = jnp.exp(score) * mask_ref[...]                            # [BL, 1]
    # block-diagonal segment matrix S[b, i] = 1 iff row i belongs to example b
    seg_r = lax.broadcasted_iota(jnp.int32, (B, BL), 0)
    seg_c = lax.broadcasted_iota(jnp.int32, (B, BL), 1)
    seg = ((seg_c >= seg_r * L) & (seg_c < (seg_r + 1) * L)).astype(jnp.float32)
    denom = jnp.dot(seg, a_all, preferred_element_type=jnp.float32)   # [B, 1]
    pooled = jnp.dot(seg, a_all * h2_all,
                     preferred_element_type=jnp.float32)              # [B, H]
    # exact divide, matching the reference's a.sum(dim=1).pow(-1) (no eps;
    # an all-padding example is inf in the reference too)
    pooled = pooled / denom

    # ---- output projection + DWAC head ---------------------------------------
    z = lax.dot_general(pooled, wo, (((1,), (1,)), ((), ())),
                        preferred_element_type=jnp.float32) + bo      # [B, Z]
    onehot = onehot_ref[...]                                          # [B, C]

    # Gram matrix z @ z.T without an explicit transpose (contract last dims).
    G = lax.dot_general(z, z, (((1,), (1,)), ((), ())),
                        preferred_element_type=jnp.float32)           # [B, B]
    ri = lax.broadcasted_iota(jnp.int32, (B, B), 0)
    ci = lax.broadcasted_iota(jnp.int32, (B, B), 1)
    eye = ri == ci
    norm_col = jnp.sum(z * z, axis=1, keepdims=True)                  # [B, 1]
    norm_row = jnp.sum(jnp.where(eye, G, 0.0), axis=0, keepdims=True)  # [1, B]
    dists = -2.0 * G + norm_row + norm_col                # squared distances
    k = jnp.where(eye, 0.0, jnp.exp(-0.5 * gamma * dists))  # Gaussian, 0 diag
    class_dists = jnp.dot(k, onehot,
                          preferred_element_type=jnp.float32) + eps   # [B, C]
    row_sum = jnp.sum(class_dists, axis=1, keepdims=True)
    probs = jnp.log(class_dists) - jnp.log(row_sum)       # log-probs, no divide
    probs_ref[...] = probs
    # NLLLoss(reduction='sum'): -sum_i log p[i, y_i]
    nll = jnp.sum(jnp.sum(probs * onehot, axis=1, keepdims=True),
                  axis=0, keepdims=True)                              # [1, 1]
    loss_ref[...] = -nll


# ------------------------------- wrappers ------------------------------------
def init_params(key):
    keys = jax.random.split(key, 13)
    emb = jax.random.normal(keys[0], (VOCAB_SIZE, EMB_DIM), jnp.float32)
    emb = emb.at[PAD_IDX].set(0.0)                 # padding_idx row is zero
    s = 1.0 / (HIDDEN_DIM ** 0.5)

    def u(k, shape):
        return jax.random.uniform(k, shape, jnp.float32, -s, s)

    return dict(
        embedding=emb,
        w_ih0=u(keys[1], (HIDDEN_DIM, EMB_DIM)),
        w_hh0=u(keys[2], (HIDDEN_DIM, HIDDEN_DIM)),
        b_ih0=u(keys[3], (HIDDEN_DIM,)),
        b_hh0=u(keys[4], (HIDDEN_DIM,)),
        w_ih1=u(keys[5], (HIDDEN_DIM, HIDDEN_DIM)),
        w_hh1=u(keys[6], (HIDDEN_DIM, HIDDEN_DIM)),
        b_ih1=u(keys[7], (HIDDEN_DIM,)),
        b_hh1=u(keys[8], (HIDDEN_DIM,)),
        w_attn=u(keys[9], (1, HIDDEN_DIM)),
        b_attn=u(keys[10], (1,)),
        w_out=u(keys[11], (Z_DIM, HIDDEN_DIM)),
        b_out=u(keys[12], (Z_DIM,)),
    )


def pack_weight_slab(params):
    """Pack every weight/bias into a single [WEIGHT_ROWS, H] f32 slab (1 DMA)."""
    H = HIDDEN_DIM
    slab = jnp.zeros((WEIGHT_ROWS, H), jnp.float32)
    slab = slab.at[OFF_WIH0:OFF_WIH0 + EMB_DIM].set(params['w_ih0'].T)
    slab = slab.at[OFF_WHH0:OFF_WHH0 + H].set(params['w_hh0'].T)
    slab = slab.at[OFF_WIH1:OFF_WIH1 + H].set(params['w_ih1'].T)
    slab = slab.at[OFF_WHH1:OFF_WHH1 + H].set(params['w_hh1'].T)
    slab = slab.at[OFF_WO:OFF_WO + Z_DIM].set(params['w_out'])
    slab = slab.at[OFF_B0].set(params['b_ih0'] + params['b_hh0'])
    slab = slab.at[OFF_B1].set(params['b_ih1'] + params['b_hh1'])
    slab = slab.at[OFF_WA].set(params['w_attn'][0])
    slab = slab.at[OFF_BA].set(jnp.full((H,), params['b_attn'][0]))
    slab = slab.at[OFF_BO, :Z_DIM].set(params['b_out'])
    return slab


def forward_batched(tokens, y, embedding, weight_slab):
    """tokens [N, B, L] int32, y [N, B] int32 -> per-instance probs / losses."""
    N, B, L = tokens.shape
    # glue kept in XLA: embedding gather, padding mask, one-hot class mask
    emb = embedding[tokens].reshape(N, B * L, EMB_DIM)                 # [N, B*L, E]
    mask = (tokens != PAD_IDX).astype(jnp.float32).reshape(N, B * L, 1)
    onehot = jax.nn.one_hot(y, N_CLASSES, dtype=jnp.float32)           # [N, B, C]

    probs, loss = pl.pallas_call(
        functools.partial(fused_kernel, gamma=GAMMA, eps=EPS),
        grid=(N,),
        in_specs=[
            pl.BlockSpec((None, B * L, EMB_DIM), lambda n: (n, 0, 0)),
            pl.BlockSpec((None, B * L, 1), lambda n: (n, 0, 0)),
            pl.BlockSpec((None, B, N_CLASSES), lambda n: (n, 0, 0)),
            # shared weight slab: same block index every step -> fetched once
            pl.BlockSpec((WEIGHT_ROWS, HIDDEN_DIM), lambda n: (0, 0)),
        ],
        out_specs=(
            pl.BlockSpec((None, B, N_CLASSES), lambda n: (n, 0, 0)),
            pl.BlockSpec((None, 1, 1), lambda n: (n, 0, 0)),
        ),
        out_shape=(jax.ShapeDtypeStruct((N, B, N_CLASSES), jnp.float32),
                   jax.ShapeDtypeStruct((N, 1, 1), jnp.float32)),
        scratch_shapes=[pltpu.VMEM((B * L, HIDDEN_DIM), jnp.float32)],
        compiler_params=pltpu.CompilerParams(
            dimension_semantics=("parallel",)),   # shards instances over TCs (v7x)
    )(emb, mask, onehot, weight_slab)

    total_loss = loss[:, 0, 0]                                         # [N]
    return {'probs': probs, 'loss': total_loss / B, 'total_loss': total_loss}


def forward(tokens, y, params):
    """Single-instance forward, matching the reference module's interface."""
    weight_slab = pack_weight_slab(params)
    out = forward_batched(tokens[None], y[None], params['embedding'], weight_slab)
    return {'probs': out['probs'][0],
            'loss': out['loss'][0],
            'total_loss': out['total_loss'][0]}


if __name__ == "__main__":
    key = jax.random.PRNGKey(0)
    kp, kx, ky = jax.random.split(key, 3)

    params = init_params(kp)
    weight_slab = pack_weight_slab(params)     # packed once, reused per call

    tokens = jax.random.randint(kx, (N_INSTANCES, BATCH, SEQ_LEN),
                                1, VOCAB_SIZE, dtype=jnp.int32)
    tokens = tokens.at[:, :, SEQ_LEN - 4:].set(PAD_IDX)   # padding at the end
    y = jax.random.randint(ky, (N_INSTANCES, BATCH), 0, N_CLASSES, dtype=jnp.int32)

    # batched path: N independent instances in one pallas_call (parallel grid)
    out = jax.jit(forward_batched)(tokens, y, params['embedding'], weight_slab)
    jax.block_until_ready(out)
    assert out['probs'].shape == (N_INSTANCES, BATCH, N_CLASSES)
    assert jnp.isfinite(out['probs']).all()
    assert jnp.isfinite(out['total_loss']).all()

    # single-instance path (reference-style interface)
    single = jax.jit(forward)(tokens[0], y[0], params)
    jax.block_until_ready(single)
    assert single['probs'].shape == (BATCH, N_CLASSES)
    assert jnp.isfinite(single['probs']).all()
    assert jnp.isfinite(single['loss'])

    print("KERNEL_OK")
</pallas_src>

<mosaic_0001>
module attributes {stable_mosaic.version = 11 : i64} {
  func.func @fused_kernel(%arg0: i32, %arg1: memref<1x128x32xf32, #tpu.memory_space<vmem>>, %arg2: memref<1x128x1xf32, #tpu.memory_space<vmem>>, %arg3: memref<1x8x4xf32, #tpu.memory_space<vmem>>, %arg4: memref<144x32xf32, #tpu.memory_space<vmem>>, %arg5: memref<1x8x4xf32, #tpu.memory_space<vmem>>, %arg6: memref<1x1x1xf32, #tpu.memory_space<vmem>>, %arg7: memref<128x32xf32, #tpu.memory_space<vmem>>) attributes {dimension_semantics = [#tpu.dimension_semantics<parallel>], iteration_bounds = array<i64: 2>, scalar_prefetch = 0 : i64, scratch_operands = 1 : i64, tpu.core_type = #tpu.core_type<tc>, window_params = [{transform_indices = @transform_0, window_bounds = array<i64: 1, 128, 32>}, {transform_indices = @transform_1, window_bounds = array<i64: 1, 128, 1>}, {transform_indices = @transform_2, window_bounds = array<i64: 1, 8, 4>}, {pipeline_mode = #tpu.pipeline_mode<synchronous>, transform_indices = @transform_3, window_bounds = array<i64: 144, 32>}, {transform_indices = @transform_4, window_bounds = array<i64: 1, 8, 4>}, {transform_indices = @transform_5, window_bounds = array<i64: 1, 1, 1>}]} {
    %c0 = arith.constant 0 : index
    %c0_0 = arith.constant 0 : index
    %0 = vector.load %arg4[%c0, %c0_0] : memref<144x32xf32, #tpu.memory_space<vmem>>, vector<32x32xf32>
    %c32 = arith.constant 32 : index
    %c0_1 = arith.constant 0 : index
    %1 = vector.load %arg4[%c32, %c0_1] : memref<144x32xf32, #tpu.memory_space<vmem>>, vector<32x32xf32>
    %2 = arith.truncf %1 : vector<32x32xf32> to vector<32x32xbf16>
    %c64 = arith.constant 64 : index
    %c0_2 = arith.constant 0 : index
    %3 = vector.load %arg4[%c64, %c0_2] : memref<144x32xf32, #tpu.memory_space<vmem>>, vector<32x32xf32>
    %4 = arith.truncf %3 : vector<32x32xf32> to vector<32x32xbf16>
    %c96 = arith.constant 96 : index
    %c0_3 = arith.constant 0 : index
    %5 = vector.load %arg4[%c96, %c0_3] : memref<144x32xf32, #tpu.memory_space<vmem>>, vector<32x32xf32>
    %6 = arith.truncf %5 : vector<32x32xf32> to vector<32x32xbf16>
    %c128 = arith.constant 128 : index
    %c0_4 = arith.constant 0 : index
    %7 = vector.load %arg4[%c128, %c0_4] : memref<144x32xf32, #tpu.memory_space<vmem>>, vector<8x32xf32>
    %c136 = arith.constant 136 : index
    %c0_5 = arith.constant 0 : index
    %8 = vector.load %arg4[%c136, %c0_5] : memref<144x32xf32, #tpu.memory_space<vmem>>, vector<1x32xf32>
    %c137 = arith.constant 137 : index
    %c0_6 = arith.constant 0 : index
    %9 = vector.load %arg4[%c137, %c0_6] : memref<144x32xf32, #tpu.memory_space<vmem>>, vector<1x32xf32>
    %10 = vector.shape_cast %9 : vector<1x32xf32> to vector<1x32xf32>
    %11 = vector.broadcast %10 : vector<1x32xf32> to vector<16x32xf32>
    %c138 = arith.constant 138 : index
    %c0_7 = arith.constant 0 : index
    %12 = vector.load %arg4[%c138, %c0_7] : memref<144x32xf32, #tpu.memory_space<vmem>>, vector<1x32xf32>
    %c139 = arith.constant 139 : index
    %c0_8 = arith.constant 0 : index
    %13 = vector.load %arg4[%c139, %c0_8] : memref<144x32xf32, #tpu.memory_space<vmem>>, vector<1x1xf32>
    %c140 = arith.constant 140 : index
    %c0_9 = arith.constant 0 : index
    %14 = vector.load %arg4[%c140, %c0_9] : memref<144x32xf32, #tpu.memory_space<vmem>>, vector<1x8xf32>
    %c0_10 = arith.constant 0 : index
    %c0_11 = arith.constant 0 : index
    %c0_12 = arith.constant 0 : index
    %15 = vector.load %arg1[%c0_10, %c0_11, %c0_12] : memref<1x128x32xf32, #tpu.memory_space<vmem>>, vector<1x128x32xf32>
    %16 = vector.shape_cast %15 : vector<1x128x32xf32> to vector<128x32xf32>
    %cst = arith.constant dense<0.000000e+00> : vector<128x32xf32>
    %17 = tpu.matmul %16, %0, %cst {dimension_numbers = #tpu.dot_dimension_numbers<[1], [0], [0], [1], [0, 0, 1, 1], [], []>} : vector<128x32xf32>, vector<32x32xf32>, vector<128x32xf32> -> vector<128x32xf32>
    %18 = vector.broadcast %8 : vector<1x32xf32> to vector<128x32xf32>
    %19 = arith.addf %17, %18 : vector<128x32xf32>
    %c0_13 = arith.constant 0 : index
    %c0_14 = arith.constant 0 : index
    %20 = vector.load %arg7[%c0_13, %c0_14] : memref<128x32xf32, #tpu.memory_space<vmem>>, vector<128x32xf32>
    tpu.vector_store %arg7[%c0_13, %c0_14], %19 {strides = array<i32>} : memref<128x32xf32, #tpu.memory_space<vmem>>, vector<128x32xf32>,
    %cst_15 = arith.constant 0.000000e+00 : bf16
    %21 = vector.broadcast %cst_15 : bf16 to vector<16x32xbf16>
    %cst_16 = arith.constant 0.000000e+00 : bf16
    %22 = vector.broadcast %cst_16 : bf16 to vector<16x32xbf16>
    %c0_i32 = arith.constant 0 : i32
    %c16_i32 = arith.constant 16 : i32
    %23 = arith.muli %c0_i32, %c16_i32 : i32
    %24 = tpu.assume_multiple %23, 16 : i32
    %25 = arith.index_cast %24 : i32 to index
    %c0_17 = arith.constant 0 : index
    %26 = vector.load %arg7[%25, %c0_17] : memref<128x32xf32, #tpu.memory_space<vmem>>, vector<16x32xf32>
    %cst_18 = arith.constant dense<0.000000e+00> : vector<16x32xf32>
    %27 = tpu.matmul %21, %2, %cst_18 {dimension_numbers = #tpu.dot_dimension_numbers<[1], [0], [0], [1], [0, 0, 1, 1], [], []>} : vector<16x32xbf16>, vector<32x32xbf16>, vector<16x32xf32> -> vector<16x32xf32>
    %28 = arith.addf %26, %27 : vector<16x32xf32>
    %cst_19 = arith.constant 0.000000e+00 : f32
    %29 = vector.broadcast %cst_19 : f32 to vector<16x32xf32>
    %30 = arith.maximumf %28, %29 : vector<16x32xf32>
    %31 = arith.truncf %30 : vector<16x32xf32> to vector<16x32xbf16>
    %cst_20 = arith.constant dense<0.000000e+00> : vector<16x32xf32>
    %32 = tpu.matmul %31, %4, %cst_20 {dimension_numbers = #tpu.dot_dimension_numbers<[1], [0], [0], [1], [0, 0, 1, 1], [], []>} : vector<16x32xbf16>, vector<32x32xbf16>, vector<16x32xf32> -> vector<16x32xf32>
    %cst_21 = arith.constant dense<0.000000e+00> : vector<16x32xf32>
    %33 = tpu.matmul %22, %6, %cst_21 {dimension_numbers = #tpu.dot_dimension_numbers<[1], [0], [0], [1], [0, 0, 1, 1], [], []>} : vector<16x32xbf16>, vector<32x32xbf16>, vector<16x32xf32> -> vector<16x32xf32>
    %34 = arith.addf %32, %33 : vector<16x32xf32>
    %35 = arith.addf %34, %11 : vector<16x32xf32>
    %cst_22 = arith.constant 0.000000e+00 : f32
    %36 = vector.broadcast %cst_22 : f32 to vector<16x32xf32>
    %37 = arith.maximumf %35, %36 : vector<16x32xf32>
    %38 = arith.index_cast %24 : i32 to index
    %c0_23 = arith.constant 0 : index
    %39 = vector.load %arg7[%38, %c0_23] : memref<128x32xf32, #tpu.memory_space<vmem>>, vector<16x32xf32>
    tpu.vector_store %arg7[%38, %c0_23], %37 {strides = array<i32>} : memref<128x32xf32, #tpu.memory_space<vmem>>, vector<16x32xf32>,
    %40 = arith.truncf %37 : vector<16x32xf32> to vector<16x32xbf16>
    %c1_i32 = arith.constant 1 : i32
    %c16_i32_24 = arith.constant 16 : i32
    %41 = arith.muli %c1_i32, %c16_i32_24 : i32
    %42 = tpu.assume_multiple %41, 16 : i32
    %43 = arith.index_cast %42 : i32 to index
    %c0_25 = arith.constant 0 : index
    %44 = vector.load %arg7[%43, %c0_25] : memref<128x32xf32, #tpu.memory_space<vmem>>, vector<16x32xf32>
    %cst_26 = arith.constant dense<0.000000e+00> : vector<16x32xf32>
    %45 = tpu.matmul %31, %2, %cst_26 {dimension_numbers = #tpu.dot_dimension_numbers<[1], [0], [0], [1], [0, 0, 1, 1], [], []>} : vector<16x32xbf16>, vector<32x32xbf16>, vector<16x32xf32> -> vector<16x32xf32>
    %46 = arith.addf %44, %45 : vector<16x32xf32>
    %cst_27 = arith.constant 0.000000e+00 : f32
    %47 = vector.broadcast %cst_27 : f32 to vector<16x32xf32>
    %48 = arith.maximumf %46, %47 : vector<16x32xf32>
    %49 = arith.truncf %48 : vector<16x32xf32> to vector<16x32xbf16>
    %cst_28 = arith.constant dense<0.000000e+00> : vector<16x32xf32>
    %50 = tpu.matmul %49, %4, %cst_28 {dimension_numbers = #tpu.dot_dimension_numbers<[1], [0], [0], [1], [0, 0, 1, 1], [], []>} : vector<16x32xbf16>, vector<32x32xbf16>, vector<16x32xf32> -> vector<16x32xf32>
    %cst_29 = arith.constant dense<0.000000e+00> : vector<16x32xf32>
    %51 = tpu.matmul %40, %6, %cst_29 {dimension_numbers = #tpu.dot_dimension_numbers<[1], [0], [0], [1], [0, 0, 1, 1], [], []>} : vector<16x32xbf16>, vector<32x32xbf16>, vector<16x32xf32> -> vector<16x32xf32>
    %52 = arith.addf %50, %51 : vector<16x32xf32>
    %53 = arith.addf %52, %11 : vector<16x32xf32>
    %cst_30 = arith.constant 0.000000e+00 : f32
    %54 = vector.broadcast %cst_30 : f32 to vector<16x32xf32>
    %55 = arith.maximumf %53, %54 : vector<16x32xf32>
    %56 = arith.index_cast %42 : i32 to index
    %c0_31 = arith.constant 0 : index
    %57 = vector.load %arg7[%56, %c0_31] : memref<128x32xf32, #tpu.memory_space<vmem>>, vector<16x32xf32>
    tpu.vector_store %arg7[%56, %c0_31], %55 {strides = array<i32>} : memref<128x32xf32, #tpu.memory_space<vmem>>, vector<16x32xf32>,
    %58 = arith.truncf %55 : vector<16x32xf32> to vector<16x32xbf16>
    %c2_i32 = arith.constant 2 : i32
    %c16_i32_32 = arith.constant 16 : i32
    %59 = arith.muli %c2_i32, %c16_i32_32 : i32
    %60 = tpu.assume_multiple %59, 16 : i32
    %61 = arith.index_cast %60 : i32 to index
    %c0_33 = arith.constant 0 : index
    %62 = vector.load %arg7[%61, %c0_33] : memref<128x32xf32, #tpu.memory_space<vmem>>, vector<16x32xf32>
    %cst_34 = arith.constant dense<0.000000e+00> : vector<16x32xf32>
    %63 = tpu.matmul %49, %2, %cst_34 {dimension_numbers = #tpu.dot_dimension_numbers<[1], [0], [0], [1], [0, 0, 1, 1], [], []>} : vector<16x32xbf16>, vector<32x32xbf16>, vector<16x32xf32> -> vector<16x32xf32>
    %64 = arith.addf %62, %63 : vector<16x32xf32>
    %cst_35 = arith.constant 0.000000e+00 : f32
    %65 = vector.broadcast %cst_35 : f32 to vector<16x32xf32>
    %66 = arith.maximumf %64, %65 : vector<16x32xf32>
    %67 = arith.truncf %66 : vector<16x32xf32> to vector<16x32xbf16>
    %cst_36 = arith.constant dense<0.000000e+00> : vector<16x32xf32>
    %68 = tpu.matmul %67, %4, %cst_36 {dimension_numbers = #tpu.dot_dimension_numbers<[1], [0], [0], [1], [0, 0, 1, 1], [], []>} : vector<16x32xbf16>, vector<32x32xbf16>, vector<16x32xf32> -> vector<16x32xf32>
    %cst_37 = arith.constant dense<0.000000e+00> : vector<16x32xf32>
    %69 = tpu.matmul %58, %6, %cst_37 {dimension_numbers = #tpu.dot_dimension_numbers<[1], [0], [0], [1], [0, 0, 1, 1], [], []>} : vector<16x32xbf16>, vector<32x32xbf16>, vector<16x32xf32> -> vector<16x32xf32>
    %70 = arith.addf %68, %69 : vector<16x32xf32>
    %71 = arith.addf %70, %11 : vector<16x32xf32>
    %cst_38 = arith.constant 0.000000e+00 : f32
    %72 = vector.broadcast %cst_38 : f32 to vector<16x32xf32>
    %73 = arith.maximumf %71, %72 : vector<16x32xf32>
    %74 = arith.index_cast %60 : i32 to index
    %c0_39 = arith.constant 0 : index
    %75 = vector.load %arg7[%74, %c0_39] : memref<128x32xf32, #tpu.memory_space<vmem>>, vector<16x32xf32>
    tpu.vector_store %arg7[%74, %c0_39], %73 {strides = array<i32>} : memref<128x32xf32, #tpu.memory_space<vmem>>, vector<16x32xf32>,
    %76 = arith.truncf %73 : vector<16x32xf32> to vector<16x32xbf16>
    %c3_i32 = arith.constant 3 : i32
    %c16_i32_40 = arith.constant 16 : i32
    %77 = arith.muli %c3_i32, %c16_i32_40 : i32
    %78 = tpu.assume_multiple %77, 16 : i32
    %79 = arith.index_cast %78 : i32 to index
    %c0_41 = arith.constant 0 : index
    %80 = vector.load %arg7[%79, %c0_41] : memref<128x32xf32, #tpu.memory_space<vmem>>, vector<16x32xf32>
    %cst_42 = arith.constant dense<0.000000e+00> : vector<16x32xf32>
    %81 = tpu.matmul %67, %2, %cst_42 {dimension_numbers = #tpu.dot_dimension_numbers<[1], [0], [0], [1], [0, 0, 1, 1], [], []>} : vector<16x32xbf16>, vector<32x32xbf16>, vector<16x32xf32> -> vector<16x32xf32>
    %82 = arith.addf %80, %81 : vector<16x32xf32>
    %cst_43 = arith.constant 0.000000e+00 : f32
    %83 = vector.broadcast %cst_43 : f32 to vector<16x32xf32>
    %84 = arith.maximumf %82, %83 : vector<16x32xf32>
    %85 = arith.truncf %84 : vector<16x32xf32> to vector<16x32xbf16>
    %cst_44 = arith.constant dense<0.000000e+00> : vector<16x32xf32>
    %86 = tpu.matmul %85, %4, %cst_44 {dimension_numbers = #tpu.dot_dimension_numbers<[1], [0], [0], [1], [0, 0, 1, 1], [], []>} : vector<16x32xbf16>, vector<32x32xbf16>, vector<16x32xf32> -> vector<16x32xf32>
    %cst_45 = arith.constant dense<0.000000e+00> : vector<16x32xf32>
    %87 = tpu.matmul %76, %6, %cst_45 {dimension_numbers = #tpu.dot_dimension_numbers<[1], [0], [0], [1], [0, 0, 1, 1], [], []>} : vector<16x32xbf16>, vector<32x32xbf16>, vector<16x32xf32> -> vector<16x32xf32>
    %88 = arith.addf %86, %87 : vector<16x32xf32>
    %89 = arith.addf %88, %11 : vector<16x32xf32>
    %cst_46 = arith.constant 0.000000e+00 : f32
    %90 = vector.broadcast %cst_46 : f32 to vector<16x32xf32>
    %91 = arith.maximumf %89, %90 : vector<16x32xf32>
    %92 = arith.index_cast %78 : i32 to index
    %c0_47 = arith.constant 0 : index
    %93 = vector.load %arg7[%92, %c0_47] : memref<128x32xf32, #tpu.memory_space<vmem>>, vector<16x32xf32>
    tpu.vector_store %arg7[%92, %c0_47], %91 {strides = array<i32>} : memref<128x32xf32, #tpu.memory_space<vmem>>, vector<16x32xf32>,
    %94 = arith.truncf %91 : vector<16x32xf32> to vector<16x32xbf16>
    %c4_i32 = arith.constant 4 : i32
    %c16_i32_48 = arith.constant 16 : i32
    %95 = arith.muli %c4_i32, %c16_i32_48 : i32
    %96 = tpu.assume_multiple %95, 16 : i32
    %97 = arith.index_cast %96 : i32 to index
    %c0_49 = arith.constant 0 : index
    %98 = vector.load %arg7[%97, %c0_49] : memref<128x32xf32, #tpu.memory_space<vmem>>, vector<16x32xf32>
    %cst_50 = arith.constant dense<0.000000e+00> : vector<16x32xf32>
    %99 = tpu.matmul %85, %2, %cst_50 {dimension_numbers = #tpu.dot_dimension_numbers<[1], [0], [0], [1], [0, 0, 1, 1], [], []>} : vector<16x32xbf16>, vector<32x32xbf16>, vector<16x32xf32> -> vector<16x32xf32>
    %100 = arith.addf %98, %99 : vector<16x32xf32>
    %cst_51 = arith.constant 0.000000e+00 : f32
    %101 = vector.broadcast %cst_51 : f32 to vector<16x32xf32>
    %102 = arith.maximumf %100, %101 : vector<16x32xf32>
    %103 = arith.truncf %102 : vector<16x32xf32> to vector<16x32xbf16>
    %cst_52 = arith.constant dense<0.000000e+00> : vector<16x32xf32>
    %104 = tpu.matmul %103, %4, %cst_52 {dimension_numbers = #tpu.dot_dimension_numbers<[1], [0], [0], [1], [0, 0, 1, 1], [], []>} : vector<16x32xbf16>, vector<32x32xbf16>, vector<16x32xf32> -> vector<16x32xf32>
    %cst_53 = arith.constant dense<0.000000e+00> : vector<16x32xf32>
    %105 = tpu.matmul %94, %6, %cst_53 {dimension_numbers = #tpu.dot_dimension_numbers<[1], [0], [0], [1], [0, 0, 1, 1], [], []>} : vector<16x32xbf16>, vector<32x32xbf16>, vector<16x32xf32> -> vector<16x32xf32>
    %106 = arith.addf %104, %105 : vector<16x32xf32>
    %107 = arith.addf %106, %11 : vector<16x32xf32>
    %cst_54 = arith.constant 0.000000e+00 : f32
    %108 = vector.broadcast %cst_54 : f32 to vector<16x32xf32>
    %109 = arith.maximumf %107, %108 : vector<16x32xf32>
    %110 = arith.index_cast %96 : i32 to index
    %c0_55 = arith.constant 0 : index
    %111 = vector.load %arg7[%110, %c0_55] : memref<128x32xf32, #tpu.memory_space<vmem>>, vector<16x32xf32>
    tpu.vector_store %arg7[%110, %c0_55], %109 {strides = array<i32>} : memref<128x32xf32, #tpu.memory_space<vmem>>, vector<16x32xf32>,
    %112 = arith.truncf %109 : vector<16x32xf32> to vector<16x32xbf16>
    %c5_i32 = arith.constant 5 : i32
    %c16_i32_56 = arith.constant 16 : i32
    %113 = arith.muli %c5_i32, %c16_i32_56 : i32
    %114 = tpu.assume_multiple %113, 16 : i32
    %115 = arith.index_cast %114 : i32 to index
    %c0_57 = arith.constant 0 : index
    %116 = vector.load %arg7[%115, %c0_57] : memref<128x32xf32, #tpu.memory_space<vmem>>, vector<16x32xf32>
    %cst_58 = arith.constant dense<0.000000e+00> : vector<16x32xf32>
    %117 = tpu.matmul %103, %2, %cst_58 {dimension_numbers = #tpu.dot_dimension_numbers<[1], [0], [0], [1], [0, 0, 1, 1], [], []>} : vector<16x32xbf16>, vector<32x32xbf16>, vector<16x32xf32> -> vector<16x32xf32>
    %118 = arith.addf %116, %117 : vector<16x32xf32>
    %cst_59 = arith.constant 0.000000e+00 : f32
    %119 = vector.broadcast %cst_59 : f32 to vector<16x32xf32>
    %120 = arith.maximumf %118, %119 : vector<16x32xf32>
    %121 = arith.truncf %120 : vector<16x32xf32> to vector<16x32xbf16>
    %cst_60 = arith.constant dense<0.000000e+00> : vector<16x32xf32>
    %122 = tpu.matmul %121, %4, %cst_60 {dimension_numbers = #tpu.dot_dimension_numbers<[1], [0], [0], [1], [0, 0, 1, 1], [], []>} : vector<16x32xbf16>, vector<32x32xbf16>, vector<16x32xf32> -> vector<16x32xf32>
    %cst_61 = arith.constant dense<0.000000e+00> : vector<16x32xf32>
    %123 = tpu.matmul %112, %6, %cst_61 {dimension_numbers = #tpu.dot_dimension_numbers<[1], [0], [0], [1], [0, 0, 1, 1], [], []>} : vector<16x32xbf16>, vector<32x32xbf16>, vector<16x32xf32> -> vector<16x32xf32>
    %124 = arith.addf %122, %123 : vector<16x32xf32>
    %125 = arith.addf %124, %11 : vector<16x32xf32>
    %cst_62 = arith.constant 0.000000e+00 : f32
    %126 = vector.broadcast %cst_62 : f32 to vector<16x32xf32>
    %127 = arith.maximumf %125, %126 : vector<16x32xf32>
    %128 = arith.index_cast %114 : i32 to index
    %c0_63 = arith.constant 0 : index
    %129 = vector.load %arg7[%128, %c0_63] : memref<128x32xf32, #tpu.memory_space<vmem>>, vector<16x32xf32>
    tpu.vector_store %arg7[%128, %c0_63], %127 {strides = array<i32>} : memref<128x32xf32, #tpu.memory_space<vmem>>, vector<16x32xf32>,
    %130 = arith.truncf %127 : vector<16x32xf32> to vector<16x32xbf16>
    %c6_i32 = arith.constant 6 : i32
    %c16_i32_64 = arith.constant 16 : i32
    %131 = arith.muli %c6_i32, %c16_i32_64 : i32
    %132 = tpu.assume_multiple %131, 16 : i32
    %133 = arith.index_cast %132 : i32 to index
    %c0_65 = arith.constant 0 : index
    %134 = vector.load %arg7[%133, %c0_65] : memref<128x32xf32, #tpu.memory_space<vmem>>, vector<16x32xf32>
    %cst_66 = arith.constant dense<0.000000e+00> : vector<16x32xf32>
    %135 = tpu.matmul %121, %2, %cst_66 {dimension_numbers = #tpu.dot_dimension_numbers<[1], [0], [0], [1], [0, 0, 1, 1], [], []>} : vector<16x32xbf16>, vector<32x32xbf16>, vector<16x32xf32> -> vector<16x32xf32>
    %136 = arith.addf %134, %135 : vector<16x32xf32>
    %cst_67 = arith.constant 0.000000e+00 : f32
    %137 = vector.broadcast %cst_67 : f32 to vector<16x32xf32>
    %138 = arith.maximumf %136, %137 : vector<16x32xf32>
    %139 = arith.truncf %138 : vector<16x32xf32> to vector<16x32xbf16>
    %cst_68 = arith.constant dense<0.000000e+00> : vector<16x32xf32>
    %140 = tpu.matmul %139, %4, %cst_68 {dimension_numbers = #tpu.dot_dimension_numbers<[1], [0], [0], [1], [0, 0, 1, 1], [], []>} : vector<16x32xbf16>, vector<32x32xbf16>, vector<16x32xf32> -> vector<16x32xf32>
    %cst_69 = arith.constant dense<0.000000e+00> : vector<16x32xf32>
    %141 = tpu.matmul %130, %6, %cst_69 {dimension_numbers = #tpu.dot_dimension_numbers<[1], [0], [0], [1], [0, 0, 1, 1], [], []>} : vector<16x32xbf16>, vector<32x32xbf16>, vector<16x32xf32> -> vector<16x32xf32>
    %142 = arith.addf %140, %141 : vector<16x32xf32>
    %143 = arith.addf %142, %11 : vector<16x32xf32>
    %cst_70 = arith.constant 0.000000e+00 : f32
    %144 = vector.broadcast %cst_70 : f32 to vector<16x32xf32>
    %145 = arith.maximumf %143, %144 : vector<16x32xf32>
    %146 = arith.index_cast %132 : i32 to index
    %c0_71 = arith.constant 0 : index
    %147 = vector.load %arg7[%146, %c0_71] : memref<128x32xf32, #tpu.memory_space<vmem>>, vector<16x32xf32>
    tpu.vector_store %arg7[%146, %c0_71], %145 {strides = array<i32>} : memref<128x32xf32, #tpu.memory_space<vmem>>, vector<16x32xf32>,
    %148 = arith.truncf %145 : vector<16x32xf32> to vector<16x32xbf16>
    %c7_i32 = arith.constant 7 : i32
    %c16_i32_72 = arith.constant 16 : i32
    %149 = arith.muli %c7_i32, %c16_i32_72 : i32
    %150 = tpu.assume_multiple %149, 16 : i32
    %151 = arith.index_cast %150 : i32 to index
    %c0_73 = arith.constant 0 : index
    %152 = vector.load %arg7[%151, %c0_73] : memref<128x32xf32, #tpu.memory_space<vmem>>, vector<16x32xf32>
    %cst_74 = arith.constant dense<0.000000e+00> : vector<16x32xf32>
    %153 = tpu.matmul %139, %2, %cst_74 {dimension_numbers = #tpu.dot_dimension_numbers<[1], [0], [0], [1], [0, 0, 1, 1], [], []>} : vector<16x32xbf16>, vector<32x32xbf16>, vector<16x32xf32> -> vector<16x32xf32>
    %154 = arith.addf %152, %153 : vector<16x32xf32>
    %cst_75 = arith.constant 0.000000e+00 : f32
    %155 = vector.broadcast %cst_75 : f32 to vector<16x32xf32>
    %156 = arith.maximumf %154, %155 : vector<16x32xf32>
    %157 = arith.truncf %156 : vector<16x32xf32> to vector<16x32xbf16>
    %cst_76 = arith.constant dense<0.000000e+00> : vector<16x32xf32>
    %158 = tpu.matmul %157, %4, %cst_76 {dimension_numbers = #tpu.dot_dimension_numbers<[1], [0], [0], [1], [0, 0, 1, 1], [], []>} : vector<16x32xbf16>, vector<32x32xbf16>, vector<16x32xf32> -> vector<16x32xf32>
    %cst_77 = arith.constant dense<0.000000e+00> : vector<16x32xf32>
    %159 = tpu.matmul %148, %6, %cst_77 {dimension_numbers = #tpu.dot_dimension_numbers<[1], [0], [0], [1], [0, 0, 1, 1], [], []>} : vector<16x32xbf16>, vector<32x32xbf16>, vector<16x32xf32> -> vector<16x32xf32>
    %160 = arith.addf %158, %159 : vector<16x32xf32>
    %161 = arith.addf %160, %11 : vector<16x32xf32>
    %cst_78 = arith.constant 0.000000e+00 : f32
    %162 = vector.broadcast %cst_78 : f32 to vector<16x32xf32>
    %163 = arith.maximumf %161, %162 : vector<16x32xf32>
    %164 = arith.index_cast %150 : i32 to index
    %c0_79 = arith.constant 0 : index
    %165 = vector.load %arg7[%164, %c0_79] : memref<128x32xf32, #tpu.memory_space<vmem>>, vector<16x32xf32>
    tpu.vector_store %arg7[%164, %c0_79], %163 {strides = array<i32>} : memref<128x32xf32, #tpu.memory_space<vmem>>, vector<16x32xf32>,
    %166 = arith.truncf %163 : vector<16x32xf32> to vector<16x32xbf16>
    %c8_i32 = arith.constant 8 : i32
    %c0_80 = arith.constant 0 : index
    %c0_81 = arith.constant 0 : index
    %167 = vector.load %arg7[%c0_80, %c0_81] : memref<128x32xf32, #tpu.memory_space<vmem>>, vector<128x32xf32>
    %168 = vector.broadcast %12 : vector<1x32xf32> to vector<128x32xf32>
    %169 = arith.mulf %167, %168 : vector<128x32xf32>
    %cst_82 = arith.constant dense<0.000000e+00> : vector<128xf32>
    %170 = vector.multi_reduction <add>, %169, %cst_82 [1] : vector<128x32xf32> to vector<128xf32>
    %171 = vector.shape_cast %170 : vector<128xf32> to vector<128x1xf32>
    %172 = vector.broadcast %13 : vector<1x1xf32> to vector<128x1xf32>
    %173 = arith.addf %171, %172 : vector<128x1xf32>
    %174 = vector.shape_cast %173 : vector<128x1xf32> to vector<1x128x1xf32>
    %cst_83 = arith.constant dense<0xFF800000> : vector<1xf32>
    %175 = vector.multi_reduction <maximumf>, %174, %cst_83 [1, 2] : vector<1x128x1xf32> to vector<1xf32>
    %176 = vector.shape_cast %175 : vector<1xf32> to vector<1x1x1xf32>
    %177 = vector.extract %176[0, 0, 0] : f32 from vector<1x1x1xf32>
    %178 = vector.broadcast %177 : f32 to vector<128x1xf32>
    %179 = arith.subf %173, %178 : vector<128x1xf32>
    %180 = math.exp %179 : vector<128x1xf32>
    %c0_84 = arith.constant 0 : index
    %c0_85 = arith.constant 0 : index
    %c0_86 = arith.constant 0 : index
    %181 = vector.load %arg2[%c0_84, %c0_85, %c0_86] : memref<1x128x1xf32, #tpu.memory_space<vmem>>, vector<1x128x1xf32>
    %182 = vector.shape_cast %181 : vector<1x128x1xf32> to vector<128x1xf32>
    %183 = arith.mulf %180, %182 : vector<128x1xf32>
    %184 = tpu.iota {dimensions = array<i32: 0>} : vector<8x128xi32>
    %185 = tpu.iota {dimensions = array<i32: 1>} : vector<8x128xi32>
    %c16_i32_87 = arith.constant 16 : i32
    %186 = vector.broadcast %c16_i32_87 : i32 to vector<8x128xi32>
    %187 = arith.muli %184, %186 : vector<8x128xi32>
    %188 = arith.cmpi sge, %185, %187 : vector<8x128xi32>
    %c1_i32_88 = arith.constant 1 : i32
    %189 = vector.broadcast %c1_i32_88 : i32 to vector<8x128xi32>
    %190 = arith.addi %184, %189 : vector<8x128xi32>
    %c16_i32_89 = arith.constant 16 : i32
    %191 = vector.broadcast %c16_i32_89 : i32 to vector<8x128xi32>
    %192 = arith.muli %190, %191 : vector<8x128xi32>
    %193 = arith.cmpi slt, %185, %192 : vector<8x128xi32>
    %194 = arith.andi %188, %193 : vector<8x128xi1>
    %195 = arith.extui %194 : vector<8x128xi1> to vector<8x128xi32>
    %196 = arith.sitofp %195 : vector<8x128xi32> to vector<8x128xf32>
    %cst_90 = arith.constant dense<0.000000e+00> : vector<8x1xf32>
    %197 = tpu.matmul %196, %183, %cst_90 {dimension_numbers = #tpu.dot_dimension_numbers<[1], [0], [0], [1], [0, 0, 1, 1], [], []>} : vector<8x128xf32>, vector<128x1xf32>, vector<8x1xf32> -> vector<8x1xf32>
    %198 = vector.broadcast %183 : vector<128x1xf32> to vector<128x32xf32>
    %199 = arith.mulf %198, %167 : vector<128x32xf32>
    %cst_91 = arith.constant dense<0.000000e+00> : vector<8x32xf32>
    %200 = tpu.matmul %196, %199, %cst_91 {dimension_numbers = #tpu.dot_dimension_numbers<[1], [0], [0], [1], [0, 0, 1, 1], [], []>} : vector<8x128xf32>, vector<128x32xf32>, vector<8x32xf32> -> vector<8x32xf32>
    %201 = vector.broadcast %197 : vector<8x1xf32> to vector<8x32xf32>
    %202 = arith.divf %200, %201 : vector<8x32xf32>
    %cst_92 = arith.constant dense<0.000000e+00> : vector<8x8xf32>
    %203 = tpu.matmul %202, %7, %cst_92 {dimension_numbers = #tpu.dot_dimension_numbers<[1], [1], [0], [0], [0, 0, 1, 0], [], []>} : vector<8x32xf32>, vector<8x32xf32>, vector<8x8xf32> -> vector<8x8xf32>
    %204 = vector.broadcast %14 : vector<1x8xf32> to vector<8x8xf32>
    %205 = arith.addf %203, %204 : vector<8x8xf32>
    %c0_93 = arith.constant 0 : index
    %c0_94 = arith.constant 0 : index
    %c0_95 = arith.constant 0 : index
    %206 = vector.load %arg3[%c0_93, %c0_94, %c0_95] : memref<1x8x4xf32, #tpu.memory_space<vmem>>, vector<1x8x4xf32>
    %207 = vector.shape_cast %206 : vector<1x8x4xf32> to vector<8x4xf32>
    %cst_96 = arith.constant dense<0.000000e+00> : vector<8x8xf32>
    %208 = tpu.matmul %205, %205, %cst_96 {dimension_numbers = #tpu.dot_dimension_numbers<[1], [1], [0], [0], [0, 0, 1, 0], [], []>} : vector<8x8xf32>, vector<8x8xf32>, vector<8x8xf32> -> vector<8x8xf32>
    %209 = tpu.iota {dimensions = array<i32: 0>} : vector<8x8xi32>
    %210 = tpu.iota {dimensions = array<i32: 1>} : vector<8x8xi32>
    %211 = arith.cmpi eq, %209, %210 : vector<8x8xi32>
    %212 = arith.mulf %205, %205 : vector<8x8xf32>
    %cst_97 = arith.constant dense<0.000000e+00> : vector<8xf32>
    %213 = vector.multi_reduction <add>, %212, %cst_97 [1] : vector<8x8xf32> to vector<8xf32>
    %214 = vector.shape_cast %213 : vector<8xf32> to vector<8x1xf32>
    %cst_98 = arith.constant 0.000000e+00 : f32
    %215 = vector.broadcast %cst_98 : f32 to vector<8x8xf32>
    %216 = arith.select %211, %208, %215 : vector<8x8xi1>, vector<8x8xf32>
    %cst_99 = arith.constant dense<0.000000e+00> : vector<8xf32>
    %217 = vector.multi_reduction <add>, %216, %cst_99 [0] : vector<8x8xf32> to vector<8xf32>
    %218 = vector.shape_cast %217 : vector<8xf32> to vector<1x8xf32>
    %cst_100 = arith.constant -2.000000e+00 : f32
    %219 = vector.broadcast %cst_100 : f32 to vector<8x8xf32>
    %220 = arith.mulf %219, %208 : vector<8x8xf32>
    %221 = vector.broadcast %218 : vector<1x8xf32> to vector<8x8xf32>
    %222 = arith.addf %220, %221 : vector<8x8xf32>
    %223 = vector.broadcast %214 : vector<8x1xf32> to vector<8x8xf32>
    %224 = arith.addf %222, %223 : vector<8x8xf32>
    %cst_101 = arith.constant -5.000000e-01 : f32
    %225 = vector.broadcast %cst_101 : f32 to vector<8x8xf32>
    %226 = arith.mulf %225, %224 : vector<8x8xf32>
    %227 = math.exp %226 : vector<8x8xf32>
    %cst_102 = arith.constant 0.000000e+00 : f32
    %228 = vector.broadcast %cst_102 : f32 to vector<8x8xf32>
    %229 = arith.select %211, %228, %227 : vector<8x8xi1>, vector<8x8xf32>
    %cst_103 = arith.constant dense<0.000000e+00> : vector<8x4xf32>
    %230 = tpu.matmul %229, %207, %cst_103 {dimension_numbers = #tpu.dot_dimension_numbers<[1], [0], [0], [1], [0, 0, 1, 1], [], []>} : vector<8x8xf32>, vector<8x4xf32>, vector<8x4xf32> -> vector<8x4xf32>
    %cst_104 = arith.constant 9.99999997E-7 : f32
    %231 = vector.broadcast %cst_104 : f32 to vector<8x4xf32>
    %232 = arith.addf %230, %231 : vector<8x4xf32>
    %cst_105 = arith.constant dense<0.000000e+00> : vector<8xf32>
    %233 = vector.multi_reduction <add>, %232, %cst_105 [1] : vector<8x4xf32> to vector<8xf32>
    %234 = vector.shape_cast %233 : vector<8xf32> to vector<8x1xf32>
    %235 = math.log %232 : vector<8x4xf32>
    %236 = math.log %234 : vector<8x1xf32>
    %237 = vector.broadcast %236 : vector<8x1xf32> to vector<8x4xf32>
    %238 = arith.subf %235, %237 : vector<8x4xf32>
    %c0_106 = arith.constant 0 : index
    %c0_107 = arith.constant 0 : index
    %c0_108 = arith.constant 0 : index
    %239 = vector.load %arg5[%c0_106, %c0_107, %c0_108] : memref<1x8x4xf32, #tpu.memory_space<vmem>>, vector<1x8x4xf32>
    %240 = vector.shape_cast %239 : vector<1x8x4xf32> to vector<8x4xf32>
    %241 = vector.shape_cast %238 : vector<8x4xf32> to vector<1x8x4xf32>
    tpu.vector_store %arg5[%c0_106, %c0_107, %c0_108], %241 {strides = array<i32>} : memref<1x8x4xf32, #tpu.memory_space<vmem>>, vector<1x8x4xf32>,
    %242 = arith.mulf %238, %207 : vector<8x4xf32>
    %cst_109 = arith.constant dense<0.000000e+00> : vector<8xf32>
    %243 = vector.multi_reduction <add>, %242, %cst_109 [1] : vector<8x4xf32> to vector<8xf32>
    %244 = vector.shape_cast %243 : vector<8xf32> to vector<8x1xf32>
    %cst_110 = arith.constant dense<0.000000e+00> : vector<1xf32>
    %245 = vector.multi_reduction <add>, %244, %cst_110 [0] : vector<8x1xf32> to vector<1xf32>
    %246 = vector.shape_cast %245 : vector<1xf32> to vector<1x1xf32>
    %cst_111 = arith.constant 0.000000e+00 : f32
    %247 = vector.broadcast %cst_111 : f32 to vector<1x1xf32>
    %248 = arith.subf %247, %246 : vector<1x1xf32>
    %c0_112 = arith.constant 0 : index
    %c0_113 = arith.constant 0 : index
    %c0_114 = arith.constant 0 : index
    %249 = vector.load %arg6[%c0_112, %c0_113, %c0_114] : memref<1x1x1xf32, #tpu.memory_space<vmem>>, vector<1x1x1xf32>
    %250 = vector.shape_cast %249 : vector<1x1x1xf32> to vector<1x1xf32>
    %251 = vector.shape_cast %248 : vector<1x1xf32> to vector<1x1x1xf32>
    tpu.vector_store %arg6[%c0_112, %c0_113, %c0_114], %251 {strides = array<i32>} : memref<1x1x1xf32, #tpu.memory_space<vmem>>, vector<1x1x1xf32>,
    return
  }
  func.func @transform_0(%arg0: i32) -> (i32, i32, i32) {
    %c0_i32 = arith.constant 0 : i32
    %c0_i32_0 = arith.constant 0 : i32
    %c0_i32_1 = arith.constant 0 : i32
    return %arg0, %c0_i32, %c0_i32_0 : i32, i32, i32
  }
  func.func @transform_1(%arg0: i32) -> (i32, i32, i32) {
    %c0_i32 = arith.constant 0 : i32
    %c0_i32_0 = arith.constant 0 : i32
    %c0_i32_1 = arith.constant 0 : i32
    return %arg0, %c0_i32, %c0_i32_0 : i32, i32, i32
  }
  func.func @transform_2(%arg0: i32) -> (i32, i32, i32) {
    %c0_i32 = arith.constant 0 : i32
    %c0_i32_0 = arith.constant 0 : i32
    %c0_i32_1 = arith.constant 0 : i32
    return %arg0, %c0_i32, %c0_i32_0 : i32, i32, i32
  }
  func.func @transform_3(%arg0: i32) -> (i32, i32) {
    %c0_i32 = arith.constant 0 : i32
    %c0_i32_0 = arith.constant 0 : i32
    %c0_i32_1 = arith.constant 0 : i32
    return %c0_i32, %c0_i32_0 : i32, i32
  }
  func.func @transform_4(%arg0: i32) -> (i32, i32, i32) {
    %c0_i32 = arith.constant 0 : i32
    %c0_i32_0 = arith.constant 0 : i32
    %c0_i32_1 = arith.constant 0 : i32
    return %arg0, %c0_i32, %c0_i32_0 : i32, i32, i32
  }
  func.func @transform_5(%arg0: i32) -> (i32, i32, i32) {
    %c0_i32 = arith.constant 0 : i32
    %c0_i32_0 = arith.constant 0 : i32
    %c0_i32_1 = arith.constant 0 : i32
    return %arg0, %c0_i32, %c0_i32_0 : i32, i32, i32
  }
}

</mosaic_0001>

<llo_original>
// kernel: forward_batched.1
$region0: #{forward_batched.1}
  #allocation0 [shape = 'u32[]', space=smem, size = 0x4, offset = 0x4, fixed_abs, tag = 'smem constant byte address 0x4 - core index']
  #allocation1 [shape = 'u32[144,128]{1,0:T(1,128)}', space=vmem, size = 0x12000, scoped, tag = 'internal scratch']
  #allocation2 [shape = 'f32[128,32]{1,0:T(8,128)}', space=vmem, size = 0x10000, scoped, tag = 'scratch operand']
  %s0 = inlined_call_operand.vmem [shape: f32[2,128,32], index: 0, kind: input, shape index: {}]
  %s1 = inlined_call_operand.vmem [shape: f32[2,128,1], index: 1, kind: input, shape index: {}]
  %s2 = inlined_call_operand.vmem [shape: f32[2,8,4], index: 2, kind: input, shape index: {}]
  %s3 = inlined_call_operand.vmem [shape: f32[144,32], index: 3, kind: input, shape index: {}]
  %s4 = inlined_call_operand.vmem [shape: f32[2,8,4], index: 4, kind: output, shape index: {0}]
  %s5 = inlined_call_operand.vmem [shape: f32[2,1,1], index: 5, kind: output, shape index: {1}]
  %6 = xla_tuple %s4, %s5
  %s7 = sld [smem:[#allocation0]]
  $region57: #{forward_batched.1} parent=0
    _
  %s9 = ssub.s32 1, %s7
  %s10 = scalar_select 0, %s9, %s7
  loop: start=0, step=1, limit=4
  $region2: #{forward_batched.1} parent=0 // loop_pre_header
    _
  $region3: #{forward_batched.1} parent=0 // loop_header
    %s12 = sphi 0, %s16
    %p13 = scmp.ge.s32.totalorder %s12, 4
    %s22 = sphi 0, %s24
    %s25 = sphi 0, %s22
    %s26 = sphi 0, %s25
    %s42 = sphi 0, %s26
    %s48 = sphi 0, %s50
    %s51 = sphi 0, %s48
    %s52 = sphi 0, %s51
    %s68 = sphi 0, %s52
    %s74 = sphi 0, %s76
    %s77 = sphi 0, %s74
    %s78 = sphi 0, %s77
    %s94 = sphi 0, %s78
    %s98 = sphi 0, %s98
    %s100 = sphi 0, %s98
    %s101 = sphi 0, %s100
    %s115 = sphi 0, %s101
    %s121 = sphi 0, %s123
    %s124 = sphi 0, %s121
    %s125 = sphi 0, %s124
    %s141 = sphi 0, %s125
    %s147 = sphi 0, %s149
    %s150 = sphi 0, %s147
    %s151 = sphi 0, %s150
    %s167 = sphi 0, %s151
  $region4: #{forward_batched.1} parent=0 // loop_header_branch
    %15 = sbr.rel (%p13) target = $region8
  $region5: #{forward_batched.1} parent=0 // loop_body
    %s17 = ssub.s32 %s12, 1
    %s18 = ssub.s32 %s12, 2
    %s19 = sadd.s32 %s12, 1
    %s20 = ssub.s32 %s12, %s19
    %p21 = scmp.eq.s32.totalorder %s20, 0
    %s23 = sadd.s32 %s22, 1
    %s24 = scalar_select %p21, %s22, %s23
    %p27 = pneg %p21
    %p28 = scmp.eq.s32.totalorder %s12, 1
    %p29 = por %p27, %p28
    %p30 = scmp.ne.s32.totalorder %s22, %s25
    %p31 = scmp.eq.s32.totalorder %s12, 0
    %p32 = por %p30, %p31
    %p33 = scmp.ne.s32.totalorder %s22, %s25
    %p34 = scmp.eq.s32.totalorder %s17, 1
    %p35 = por %p33, %p34
    %p36 = scmp.ne.s32.totalorder %s25, %s26
    %p37 = scmp.eq.s32.totalorder %s17, 0
    %p38 = por %p36, %p37
    %p39 = scmp.ne.s32.totalorder %s25, %s26
    %p40 = scmp.eq.s32.totalorder %s18, 1
    %p41 = por %p39, %p40
    %p43 = scmp.ne.s32.totalorder %s26, %s42
    %p44 = scmp.eq.s32.totalorder %s18, 0
    %p45 = por %p43, %p44
    %s46 = ssub.s32 %s12, %s19
    %p47 = scmp.eq.s32.totalorder %s46, 0
    %s49 = sadd.s32 %s48, 1
    %s50 = scalar_select %p47, %s48, %s49
    %p53 = pneg %p47
    %p54 = scmp.eq.s32.totalorder %s12, 1
    %p55 = por %p53, %p54
    %p56 = scmp.ne.s32.totalorder %s48, %s51
    %p57 = scmp.eq.s32.totalorder %s12, 0
    %p58 = por %p56, %p57
    %p59 = scmp.ne.s32.totalorder %s48, %s51
    %p60 = scmp.eq.s32.totalorder %s17, 1
    %p61 = por %p59, %p60
    %p62 = scmp.ne.s32.totalorder %s51, %s52
    %p63 = scmp.eq.s32.totalorder %s17, 0
    %p64 = por %p62, %p63
    %p65 = scmp.ne.s32.totalorder %s51, %s52
    %p66 = scmp.eq.s32.totalorder %s18, 1
    %p67 = por %p65, %p66
    %p69 = scmp.ne.s32.totalorder %s52, %s68
    %p70 = scmp.eq.s32.totalorder %s18, 0
    %p71 = por %p69, %p70
    %s72 = ssub.s32 %s12, %s19
    %p73 = scmp.eq.s32.totalorder %s72, 0
    %s75 = sadd.s32 %s74, 1
    %s76 = scalar_select %p73, %s74, %s75
    %p79 = pneg %p73
    %p80 = scmp.eq.s32.totalorder %s12, 1
    %p81 = por %p79, %p80
    %p82 = scmp.ne.s32.totalorder %s74, %s77
    %p83 = scmp.eq.s32.totalorder %s12, 0
    %p84 = por %p82, %p83
    %p85 = scmp.ne.s32.totalorder %s74, %s77
    %p86 = scmp.eq.s32.totalorder %s17, 1
    %p87 = por %p85, %p86
    %p88 = scmp.ne.s32.totalorder %s77, %s78
    %p89 = scmp.eq.s32.totalorder %s17, 0
    %p90 = por %p88, %p89
    %p91 = scmp.ne.s32.totalorder %s77, %s78
    %p92 = scmp.eq.s32.totalorder %s18, 1
    %p93 = por %p91, %p92
    %p95 = scmp.ne.s32.totalorder %s78, %s94
    %p96 = scmp.eq.s32.totalorder %s18, 0
    %p97 = por %p95, %p96
    %s99 = sadd.s32 %s98, 1
    %p102 = scmp.eq.s32.totalorder %s12, 1
    %p103 = scmp.ne.s32.totalorder %s98, %s100
    %p104 = scmp.eq.s32.totalorder %s12, 0
    %p105 = por %p103, %p104
    %p106 = scmp.ne.s32.totalorder %s98, %s100
    %p107 = scmp.eq.s32.totalorder %s17, 1
    %p108 = por %p106, %p107
    %p109 = scmp.ne.s32.totalorder %s100, %s101
    %p110 = scmp.eq.s32.totalorder %s17, 0
    %p111 = por %p109, %p110
    %p112 = scmp.ne.s32.totalorder %s100, %s101
    %p113 = scmp.eq.s32.totalorder %s18, 1
    %p114 = por %p112, %p113
    %p116 = scmp.ne.s32.totalorder %s101, %s115
    %p117 = scmp.eq.s32.totalorder %s18, 0
    %p118 = por %p116, %p117
    %s119 = ssub.s32 %s12, %s19
    %p120 = scmp.eq.s32.totalorder %s119, 0
    %s122 = sadd.s32 %s121, 1
    %s123 = scalar_select %p120, %s121, %s122
    %p126 = pneg %p120
    %p127 = scmp.eq.s32.totalorder %s12, 1
    %p128 = por %p126, %p127
    %p129 = scmp.ne.s32.totalorder %s121, %s124
    %p130 = scmp.eq.s32.totalorder %s12, 0
    %p131 = por %p129, %p130
    %p132 = scmp.ne.s32.totalorder %s121, %s124
    %p133 = scmp.eq.s32.totalorder %s17, 1
    %p134 = por %p132, %p133
    %p135 = scmp.ne.s32.totalorder %s124, %s125
    %p136 = scmp.eq.s32.totalorder %s17, 0
    %p137 = por %p135, %p136
    %p138 = scmp.ne.s32.totalorder %s124, %s125
    %p139 = scmp.eq.s32.totalorder %s18, 1
    %p140 = por %p138, %p139
    %p142 = scmp.ne.s32.totalorder %s125, %s141
    %p143 = scmp.eq.s32.totalorder %s18, 0
    %p144 = por %p142, %p143
    %s145 = ssub.s32 %s12, %s19
    %p146 = scmp.eq.s32.totalorder %s145, 0
    %s148 = sadd.s32 %s147, 1
    %s149 = scalar_select %p146, %s147, %s148
    %p152 = pneg %p146
    %p153 = scmp.eq.s32.totalorder %s12, 1
    %p154 = por %p152, %p153
    %p155 = scmp.ne.s32.totalorder %s147, %s150
    %p156 = scmp.eq.s32.totalorder %s12, 0
    %p157 = por %p155, %p156
    %p158 = scmp.ne.s32.totalorder %s147, %s150
    %p159 = scmp.eq.s32.totalorder %s17, 1
    %p160 = por %p158, %p159
    %p161 = scmp.ne.s32.totalorder %s150, %s151
    %p162 = scmp.eq.s32.totalorder %s17, 0
    %p163 = por %p161, %p162
    %p164 = scmp.ne.s32.totalorder %s150, %s151
    %p165 = scmp.eq.s32.totalorder %s18, 1
    %p166 = por %p164, %p165
    %p168 = scmp.ne.s32.totalorder %s151, %s167
    %p169 = scmp.eq.s32.totalorder %s18, 0
    %p170 = por %p168, %p169
    %p171 = scmp.le.s32.totalorder 1, %s12
    %p172 = scmp.lt.s32.totalorder %s12, 3
    %p173 = pnand %p171, %p172
    %p174 = pneg %p173
    // Predicated region
    $region9: #{forward_batched.1} parent=5 // pred_check
      _
    $region10: #{forward_batched.1} parent=5 // pred_check_branch
      %176 = sbr.rel (%p173) target = $region12
    $region11: #{forward_batched.1} parent=5 // pred_region
      %s177 = ssub.s32 %s12, 1
      // Predicated region
      $region13: #{forward_batched.1} parent=11 // pred_check
        %p178 = pneg %p111
      $region14: #{forward_batched.1} parent=11 // pred_check_branch
        %180 = sbr.rel (%p178) target = $region16
      $region15: #{forward_batched.1} parent=11 // pred_region
        _
      $region16: #{forward_batched.1} parent=11 // pred_fallthru
        _
    $region12: #{forward_batched.1} parent=5 // pred_fallthru
      _
    %p181 = scmp.lt.s32.totalorder %s12, 2
    // Predicated region
    $region17: #{forward_batched.1} parent=5 // pred_check
      %p182 = pneg %p181
    $region18: #{forward_batched.1} parent=5 // pred_check_branch
      %184 = sbr.rel (%p182) target = $region20
    $region19: #{forward_batched.1} parent=5 // pred_region
      // Predicated region
      $region21: #{forward_batched.1} parent=19 // pred_check
        %p185 = pneg %p32
      $region22: #{forward_batched.1} parent=19 // pred_check_branch
        %187 = sbr.rel (%p185) target = $region24
      $region23: #{forward_batched.1} parent=19 // pred_region
        %p188 = scmp.lt.s32.totalorder %s12, 1
        %s189 = scalar_select %p188, %s12, 1
        %s190 = smul.addr %s189, 16
        %s191 = smul.addr %s190, 8
        %s192 = scalar_lea.vmem %s0, %s191
      $region24: #{forward_batched.1} parent=19 // pred_fallthru
        _
      // Predicated region
      $region25: #{forward_batched.1} parent=19 // pred_check
        %p193 = pneg %p58
      $region26: #{forward_batched.1} parent=19 // pred_check_branch
        %195 = sbr.rel (%p193) target = $region28
      $region27: #{forward_batched.1} parent=19 // pred_region
        %p196 = scmp.lt.s32.totalorder %s12, 1
        %s197 = scalar_select %p196, %s12, 1
        %s198 = smul.addr %s197, 16
        %s199 = smul.addr %s198, 8
        %s200 = scalar_lea.vmem %s1, %s199
      $region28: #{forward_batched.1} parent=19 // pred_fallthru
        _
      // Predicated region
      $region29: #{forward_batched.1} parent=19 // pred_check
        %p201 = pneg %p84
      $region30: #{forward_batched.1} parent=19 // pred_check_branch
        %203 = sbr.rel (%p201) target = $region32
      $region31: #{forward_batched.1} parent=19 // pred_region
        %p204 = scmp.lt.s32.totalorder %s12, 1
        %s205 = scalar_select %p204, %s12, 1
        %s206 = smul.addr %s205, 8
        %s207 = scalar_lea.vmem %s2, %s206
      $region32: #{forward_batched.1} parent=19 // pred_fallthru
        _
    $region20: #{forward_batched.1} parent=5 // pred_fallthru
      _
    %p208 = scmp.le.s32.totalorder 1, %s12
    %p209 = scmp.lt.s32.totalorder %s12, 3
    %p210 = pnand %p208, %p209
    %p211 = pneg %p210
    // Predicated region
    $region33: #{forward_batched.1} parent=5 // pred_check
      _
    $region34: #{forward_batched.1} parent=5 // pred_check_branch
      %213 = sbr.rel (%p210) target = $region36
    $region35: #{forward_batched.1} parent=5 // pred_region
      %s214 = ssub.s32 %s12, 1
      %p215 = scmp.lt.s32.totalorder %s17, 1
      %s216 = scalar_select %p215, %s17, 1
      %s217 = smul.addr %s216, 16
      %s218 = smul.addr %s217, 8
      %s219 = scalar_lea.vmem %s0, %s218
      %p220 = pneg %p38
      %p221 = pneg %p35
      %p222 = scmp.lt.s32.totalorder %s17, 1
      %s223 = scalar_select %p222, %s17, 1
      %s224 = smul.addr %s223, 16
      %s225 = smul.addr %s224, 8
      %s226 = scalar_lea.vmem %s1, %s225
      %p227 = pneg %p64
      %p228 = pneg %p61
      %p229 = scmp.lt.s32.totalorder %s17, 1
      %s230 = scalar_select %p229, %s17, 1
      %s231 = smul.addr %s230, 8
      %s232 = scalar_lea.vmem %s2, %s231
      %p233 = pneg %p90
      %p234 = pneg %p87
      %p235 = pneg %p111
      %p236 = pneg %p108
      %p237 = pneg %p137
      %p238 = pneg %p134
      %p239 = scmp.lt.s32.totalorder %s17, 1
      %s240 = scalar_select %p239, %s17, 1
      %s241 = smul.addr %s240, 8
      %s242 = scalar_lea.vmem %s4, %s241
      %p243 = pneg %p163
      %p244 = pneg %p160
      %p245 = scmp.lt.s32.totalorder %s17, 1
      %s246 = scalar_select %p245, %s17, 1
      %s247 = scalar_lea.vmem %s5, %s246
      %p248 = scmp.lt.s32.totalorder %s17, 1
      %s249 = scalar_select %p248, %s17, 1
      %s250 = smul.addr %s249, 16
      %s251 = smul.addr %s250, 8
      %s252 = scalar_lea.vmem %s0, %s251
      %p253 = scmp.lt.s32.totalorder %s17, 1
      %s254 = scalar_select %p253, %s17, 1
      %s255 = smul.addr %s254, 16
      %s256 = smul.addr %s255, 8
      %s257 = scalar_lea.vmem %s1, %s256
      %p258 = scmp.lt.s32.totalorder %s17, 1
      %s259 = scalar_select %p258, %s17, 1
      %s260 = smul.addr %s259, 8
      %s261 = scalar_lea.vmem %s2, %s260
      %p262 = scmp.lt.s32.totalorder %s17, 1
      %s263 = scalar_select %p262, %s17, 1
      %s264 = smul.addr %s263, 8
      %s265 = scalar_lea.vmem %s4, %s264
      %p266 = scmp.lt.s32.totalorder %s17, 1
      %s267 = scalar_select %p266, %s17, 1
      %s268 = scalar_lea.vmem %s5, %s267
      %v270 = vld [vmem:[%s3] sm:$0xff]
      %v271 = vld [vmem:[%s3 + $0x8] sm:$0xff]
      %v272 = vld [vmem:[%s3 + $0x10] sm:$0xff]
      %v273 = vld [vmem:[%s3 + $0x18] sm:$0xff]
      %v274 = vld [vmem:[%s3 + $0x20] sm:$0xff]
      %v275 = vld [vmem:[%s3 + $0x28] sm:$0xff]
      %v276 = vld [vmem:[%s3 + $0x30] sm:$0xff]
      %v277 = vld [vmem:[%s3 + $0x38] sm:$0xff]
      %v278 = vpack.c.bf16 %v275, %v274
      %v279 = vpack.c.bf16 %v277, %v276
      %v280 = vld [vmem:[%s3 + $0x40] sm:$0xff]
      %v281 = vld [vmem:[%s3 + $0x48] sm:$0xff]
      %v282 = vld [vmem:[%s3 + $0x50] sm:$0xff]
      %v283 = vld [vmem:[%s3 + $0x58] sm:$0xff]
      %v284 = vpack.c.bf16 %v281, %v280
      %v285 = vpack.c.bf16 %v283, %v282
      %v286 = vld [vmem:[%s3 + $0x60] sm:$0xff]
      %v287 = vld [vmem:[%s3 + $0x68] sm:$0xff]
      %v288 = vld [vmem:[%s3 + $0x70] sm:$0xff]
      %v289 = vld [vmem:[%s3 + $0x78] sm:$0xff]
      %v290 = vpack.c.bf16 %v287, %v286
      %v291 = vpack.c.bf16 %v289, %v288
      %v292 = vld [vmem:[%s3 + $0x80] sm:$0xff]
      %v293 = vld [vmem:[%s3 + $0x88] sm:$0x1]
      %v294 = vld [vmem:[%s3 + $0x89] sm:$0x1]
      %v295 = vlaneseq
      %v296 = vshrl.u32 %v295, 7
      %v297 = vsub.s32 0, %v296
      %v298 = vrot.slane %v294, %v297
      %v299 = vld [vmem:[%s3 + $0x8a] sm:$0x1]
      %v300 = vld [vmem:[%s3 + $0x8b] sm:$0x1]
      %v301 = vld [vmem:[%s3 + $0x8c] sm:$0x1]
      %v302 = vld [vmem:[%s252] sm:$0xff]
      %v303 = vld [vmem:[%s252 + $0x8] sm:$0xff]
      %v304 = vld [vmem:[%s252 + $0x10] sm:$0xff]
      %v305 = vld [vmem:[%s252 + $0x18] sm:$0xff]
      %v306 = vld [vmem:[%s252 + $0x20] sm:$0xff]
      %v307 = vld [vmem:[%s252 + $0x28] sm:$0xff]
      %v308 = vld [vmem:[%s252 + $0x30] sm:$0xff]
      %v309 = vld [vmem:[%s252 + $0x38] sm:$0xff]
      %v310 = vld [vmem:[%s252 + $0x40] sm:$0xff]
      %v311 = vld [vmem:[%s252 + $0x48] sm:$0xff]
      %v312 = vld [vmem:[%s252 + $0x50] sm:$0xff]
      %v313 = vld [vmem:[%s252 + $0x58] sm:$0xff]
      %v314 = vld [vmem:[%s252 + $0x60] sm:$0xff]
      %v315 = vld [vmem:[%s252 + $0x68] sm:$0xff]
      %v316 = vld [vmem:[%s252 + $0x70] sm:$0xff]
      %v317 = vld [vmem:[%s252 + $0x78] sm:$0xff]
      %v318 = vlaneseq
      %v319 = vshrl.u32 %v318, 7
      %v320 = vsub.s32 0, %v319
      %v321 = vrot.slane %v293, %v320
      %vm322 = vcmask 261120
      %v324 = vsel %vm322, %v302, 0
      %v327 = vsel %vm322, %v303, 0
      %v330 = vsel %vm322, %v304, 0
      %v333 = vsel %vm322, %v305, 0
      %v336 = vsel %vm322, %v306, 0
      %v339 = vsel %vm322, %v307, 0
      %v342 = vsel %vm322, %v308, 0
      %v345 = vsel %vm322, %v309, 0
      %v348 = vsel %vm322, %v310, 0
      %v351 = vsel %vm322, %v311, 0
      %v354 = vsel %vm322, %v312, 0
      %v357 = vsel %vm322, %v313, 0
      %v360 = vsel %vm322, %v314, 0
      %v363 = vsel %vm322, %v315, 0
      %v366 = vsel %vm322, %v316, 0
      %v369 = vsel %vm322, %v317, 0
      %371 = vmatprep.subr.mxu0 0.0
      %372 = vmatpush1.msra.mxu0 %v270
      %373 = vmatprep.subr.mxu0 0.0
      %374 = vmatpush1.msra.mxu0 %v271
      %375 = vmatprep.subr.mxu0 0.0
      %376 = vmatpush1.msra.mxu0 %v272
      %377 = vmatprep.subr.mxu0 0.0
      %378 = vmatpush1.msra.mxu0 %v273
      %379 = vmatprep.subr.mxu0 0.0
      %380 = vmatpush1.msra.mxu0 0.0
      %381 = vmatprep.subr.mxu0 0.0
      %382 = vmatpush1.msra.mxu0 0.0
      %383 = vmatprep.subr.mxu0 0.0
      %384 = vmatpush1.msra.mxu0 0.0
      %385 = vmatprep.subr.mxu0 0.0
      %386 = vmatpush1.msra.mxu0 0.0
      %387 = vmatprep.subr.mxu0 0.0
      %388 = vmatpush1.msra.mxu0 0.0
      %389 = vmatprep.subr.mxu0 0.0
      %390 = vmatpush1.msra.mxu0 0.0
      %391 = vmatprep.subr.mxu0 0.0
      %392 = vmatpush1.msra.mxu0 0.0
      %393 = vmatprep.subr.mxu0 0.0
      %394 = vmatpush1.msra.mxu0 0.0
      %395 = vmatprep.subr.mxu0 0.0
      %396 = vmatpush1.msra.mxu0 0.0
      %397 = vmatprep.subr.mxu0 0.0
      %398 = vmatpush1.msra.mxu0 0.0
      %399 = vmatprep.subr.mxu0 0.0
      %400 = vmatpush1.msra.mxu0 0.0
      %401 = vmatprep.subr.mxu0 0.0
      %402 = vmatpush1.msra.mxu0 0.0
      %403 = vmatprep.subr.mxu0 0.0
      %404 = vmatpush1.msra.mxu0 0.0
      %405 = vmatprep.subr.mxu0 0.0
      %406 = vmatpush1.msra.mxu0 0.0
      %407 = vmatprep.subr.mxu0 0.0
      %408 = vmatpush1.msra.mxu0 0.0
      %409 = vmatprep.subr.mxu0 0.0
      %410 = vmatpush1.msra.mxu0 0.0
      %411 = vmatprep.subr.mxu0 0.0
      %412 = vmatpush1.msra.mxu0 0.0
      %413 = vmatprep.subr.mxu0 0.0
      %414 = vmatpush1.msra.mxu0 0.0
      %415 = vmatprep.subr.mxu0 0.0
      %416 = vmatpush1.msra.mxu0 0.0
      %417 = vmatprep.subr.mxu0 0.0
      %418 = vmatpush1.msra.mxu0 0.0
      %419 = vmatprep.subr.mxu0 0.0
      %420 = vmatpush1.msra.mxu0 0.0
      %421 = vmatprep.subr.mxu0 0.0
      %422 = vmatpush1.msra.mxu0 0.0
      %423 = vmatprep.subr.mxu0 0.0
      %424 = vmatpush1.msra.mxu0 0.0
      %425 = vmatprep.subr.mxu0 0.0
      %426 = vmatpush1.msra.mxu0 0.0
      %427 = vmatprep.subr.mxu0 0.0
      %428 = vmatpush1.msra.mxu0 0.0
      %429 = vmatprep.subr.mxu0 0.0
      %430 = vmatpush1.msra.mxu0 0.0
      %431 = vmatprep.subr.mxu0 0.0
      %432 = vmatpush1.msra.mxu0 0.0
      %433 = vmatprep.subr.mxu0 0.0
      %434 = vmatpush1.msra.mxu0 0.0
      %435 = vmatprep.mubr.f32.mxu0 0.0
      %436 = vmatmul.mubr.f32.gmra.mrb[0].mxu0 %v324
      %v437 = vpop.f32.mrb[0].mxu0
      %v438 = vadd.f32 %v321, %v437
      %v439 = vpop.f32.mrb[0].mxu0
      %440 = vmatprep.mubr.f32.mxu0 0.0
      %441 = vmatmul.mubr.f32.gmra.mrb[0].mxu0 %v327
      %v442 = vpop.f32.mrb[0].mxu0
      %v443 = vadd.f32 %v321, %v442
      %v444 = vpop.f32.mrb[0].mxu0
      %445 = vmatprep.mubr.f32.mxu0 0.0
      %446 = vmatmul.mubr.f32.gmra.mrb[0].mxu0 %v330
      %v447 = vpop.f32.mrb[0].mxu0
      %v448 = vadd.f32 %v321, %v447
      %v449 = vpop.f32.mrb[0].mxu0
      %450 = vmatprep.mubr.f32.mxu0 0.0
      %451 = vmatmul.mubr.f32.gmra.mrb[0].mxu0 %v333
      %v452 = vpop.f32.mrb[0].mxu0
      %v453 = vadd.f32 %v321, %v452
      %v454 = vpop.f32.mrb[0].mxu0
      %455 = vmatprep.mubr.f32.mxu0 0.0
      %456 = vmatmul.mubr.f32.gmra.mrb[0].mxu0 %v336
      %v457 = vpop.f32.mrb[0].mxu0
      %v458 = vadd.f32 %v321, %v457
      %v459 = vpop.f32.mrb[0].mxu0
      %460 = vmatprep.mubr.f32.mxu0 0.0
      %461 = vmatmul.mubr.f32.gmra.mrb[0].mxu0 %v339
      %v462 = vpop.f32.mrb[0].mxu0
      %v463 = vadd.f32 %v321, %v462
      %v464 = vpop.f32.mrb[0].mxu0
      %465 = vmatprep.mubr.f32.mxu0 0.0
      %466 = vmatmul.mubr.f32.gmra.mrb[0].mxu0 %v342
      %v467 = vpop.f32.mrb[0].mxu0
      %v468 = vadd.f32 %v321, %v467
      %v469 = vpop.f32.mrb[0].mxu0
      %470 = vmatprep.mubr.f32.mxu0 0.0
      %471 = vmatmul.mubr.f32.gmra.mrb[0].mxu0 %v345
      %v472 = vpop.f32.mrb[0].mxu0
      %v473 = vadd.f32 %v321, %v472
      %v474 = vpop.f32.mrb[0].mxu0
      %475 = vmatprep.mubr.f32.mxu0 0.0
      %476 = vmatmul.mubr.f32.gmra.mrb[0].mxu0 %v348
      %v477 = vpop.f32.mrb[0].mxu0
      %v478 = vadd.f32 %v321, %v477
      %v479 = vpop.f32.mrb[0].mxu0
      %480 = vmatprep.mubr.f32.mxu0 0.0
      %481 = vmatmul.mubr.f32.gmra.mrb[0].mxu0 %v351
      %v482 = vpop.f32.mrb[0].mxu0
      %v483 = vadd.f32 %v321, %v482
      %v484 = vpop.f32.mrb[0].mxu0
      %485 = vmatprep.mubr.f32.mxu0 0.0
      %486 = vmatmul.mubr.f32.gmra.mrb[0].mxu0 %v354
      %v487 = vpop.f32.mrb[0].mxu0
      %v488 = vadd.f32 %v321, %v487
      %v489 = vpop.f32.mrb[0].mxu0
      %490 = vmatprep.mubr.f32.mxu0 0.0
      %491 = vmatmul.mubr.f32.gmra.mrb[0].mxu0 %v357
      %v492 = vpop.f32.mrb[0].mxu0
      %v493 = vadd.f32 %v321, %v492
      %v494 = vpop.f32.mrb[0].mxu0
      %495 = vmatprep.mubr.f32.mxu0 0.0
      %496 = vmatmul.mubr.f32.gmra.mrb[0].mxu0 %v360
      %v497 = vpop.f32.mrb[0].mxu0
      %v498 = vadd.f32 %v321, %v497
      %v499 = vpop.f32.mrb[0].mxu0
      %500 = vmatprep.mubr.f32.mxu0 0.0
      %501 = vmatmul.mubr.f32.gmra.mrb[0].mxu0 %v363
      %v502 = vpop.f32.mrb[0].mxu0
      %v503 = vadd.f32 %v321, %v502
      %v504 = vpop.f32.mrb[0].mxu0
      %505 = vmatprep.mubr.f32.mxu0 0.0
      %506 = vmatmul.mubr.f32.gmra.mrb[0].mxu0 %v366
      %v507 = vpop.f32.mrb[0].mxu0
      %v508 = vadd.f32 %v321, %v507
      %v509 = vpop.f32.mrb[0].mxu0
      %510 = vmatprep.mubr.f32.mxu0 0.0
      %511 = vmatmul.mubr.f32.gmra.mrb[0].mxu0 %v369
      %v512 = vpop.f32.mrb[0].mxu0
      %v513 = vadd.f32 %v321, %v512
      %v514 = vpop.f32.mrb[0].mxu0
      %515 = vdwg.mxu0
      %516 = vst.msk [vmem:[#allocation2] sm:$0xff] %vm322, %v438
      %517 = vst.msk [vmem:[#allocation2 + $0x8] sm:$0xff] %vm322, %v443
      %518 = vst.msk [vmem:[#allocation2 + $0x10] sm:$0xff] %vm322, %v448
      %519 = vst.msk [vmem:[#allocation2 + $0x18] sm:$0xff] %vm322, %v453
      %520 = vst.msk [vmem:[#allocation2 + $0x20] sm:$0xff] %vm322, %v458
      %521 = vst.msk [vmem:[#allocation2 + $0x28] sm:$0xff] %vm322, %v463
      %522 = vst.msk [vmem:[#allocation2 + $0x30] sm:$0xff] %vm322, %v468
      %523 = vst.msk [vmem:[#allocation2 + $0x38] sm:$0xff] %vm322, %v473
      %524 = vst.msk [vmem:[#allocation2 + $0x40] sm:$0xff] %vm322, %v478
      %525 = vst.msk [vmem:[#allocation2 + $0x48] sm:$0xff] %vm322, %v483
      %526 = vst.msk [vmem:[#allocation2 + $0x50] sm:$0xff] %vm322, %v488
      %527 = vst.msk [vmem:[#allocation2 + $0x58] sm:$0xff] %vm322, %v493
      %528 = vst.msk [vmem:[#allocation2 + $0x60] sm:$0xff] %vm322, %v498
      %529 = vst.msk [vmem:[#allocation2 + $0x68] sm:$0xff] %vm322, %v503
      %530 = vst.msk [vmem:[#allocation2 + $0x70] sm:$0xff] %vm322, %v508
      %531 = vst.msk [vmem:[#allocation2 + $0x78] sm:$0xff] %vm322, %v513
      %v532 = vld [vmem:[#allocation2] sm:$0xff]
      %v533 = vld [vmem:[#allocation2 + $0x8] sm:$0xff]
      %v535 = vsel %vm322, 0, 0
      %537 = vmatprep.subr.bf16.mxu0 0
      %538 = vmatpush1.bf16.msra.mxu0 %v278
      %539 = vmatprep.subr.bf16.mxu0 0
      %540 = vmatpush1.bf16.msra.mxu0 %v279
      %541 = vmatprep.subr.bf16.mxu0 0
      %542 = vmatpush1.bf16.msra.mxu0 0
      %543 = vmatprep.subr.bf16.mxu0 0
      %544 = vmatpush1.bf16.msra.mxu0 0
      %545 = vmatprep.subr.bf16.mxu0 0
      %546 = vmatpush1.bf16.msra.mxu0 0
      %547 = vmatprep.subr.bf16.mxu0 0
      %548 = vmatpush1.bf16.msra.mxu0 0
      %549 = vmatprep.subr.bf16.mxu0 0
      %550 = vmatpush1.bf16.msra.mxu0 0
      %551 = vmatprep.subr.bf16.mxu0 0
      %552 = vmatpush1.bf16.msra.mxu0 0
      %553 = vmatprep.subr.bf16.mxu0 0
      %554 = vmatpush1.bf16.msra.mxu0 0
      %555 = vmatprep.subr.bf16.mxu0 0
      %556 = vmatpush1.bf16.msra.mxu0 0
      %557 = vmatprep.subr.bf16.mxu0 0
      %558 = vmatpush1.bf16.msra.mxu0 0
      %559 = vmatprep.subr.bf16.mxu0 0
      %560 = vmatpush1.bf16.msra.mxu0 0
      %561 = vmatprep.subr.bf16.mxu0 0
      %562 = vmatpush1.bf16.msra.mxu0 0
      %563 = vmatprep.subr.bf16.mxu0 0
      %564 = vmatpush1.bf16.msra.mxu0 0
      %565 = vmatprep.subr.bf16.mxu0 0
      %566 = vmatpush1.bf16.msra.mxu0 0
      %567 = vmatprep.subr.bf16.mxu0 0
      %568 = vmatpush1.bf16.msra.mxu0 0
      %569 = vmatprep.mubr.bf16.mxu0 0
      %570 = vmatmul.mubr.bf16.gmra.mrb[0].mxu0 %v535
      %v571 = vpop.f32.mrb[0].mxu0
      %v572 = vadd.f32 0.0, %v571
      %v573 = vpop.f32.mrb[0].mxu0
      %v574 = vpop.f32.mrb[0].mxu0
      %v575 = vadd.f32 0.0, %v574
      %v576 = vpop.f32.mrb[0].mxu0
      %577 = vdwg.mxu0
      %v578 = vadd.f32 %v532, %v572
      %v579 = vadd.f32 %v533, %v575
      %v580 = vmax.f32 %v578, 0.0
      %v581 = vmax.f32 %v579, 0.0
      %v582 = vpack.c.bf16 %v581, %v580
      %583 = vmatprep.subr.bf16.mxu0 0
      %584 = vmatpush1.bf16.msra.mxu0 %v290
      %585 = vmatprep.subr.bf16.mxu0 0
      %586 = vmatpush1.bf16.msra.mxu0 %v291
      %587 = vmatprep.subr.bf16.mxu0 0
      %588 = vmatpush1.bf16.msra.mxu0 0
      %589 = vmatprep.subr.bf16.mxu0 0
      %590 = vmatpush1.bf16.msra.mxu0 0
      %591 = vmatprep.subr.bf16.mxu0 0
      %592 = vmatpush1.bf16.msra.mxu0 0
      %593 = vmatprep.subr.bf16.mxu0 0
      %594 = vmatpush1.bf16.msra.mxu0 0
      %595 = vmatprep.subr.bf16.mxu0 0
      %596 = vmatpush1.bf16.msra.mxu0 0
      %597 = vmatprep.subr.bf16.mxu0 0
      %598 = vmatpush1.bf16.msra.mxu0 0
      %599 = vmatprep.subr.bf16.mxu0 0
      %600 = vmatpush1.bf16.msra.mxu0 0
      %601 = vmatprep.subr.bf16.mxu0 0
      %602 = vmatpush1.bf16.msra.mxu0 0
      %603 = vmatprep.subr.bf16.mxu0 0
      %604 = vmatpush1.bf16.msra.mxu0 0
      %605 = vmatprep.subr.bf16.mxu0 0
      %606 = vmatpush1.bf16.msra.mxu0 0
      %607 = vmatprep.subr.bf16.mxu0 0
      %608 = vmatpush1.bf16.msra.mxu0 0
      %609 = vmatprep.subr.bf16.mxu0 0
      %610 = vmatpush1.bf16.msra.mxu0 0
      %611 = vmatprep.subr.bf16.mxu0 0
      %612 = vmatpush1.bf16.msra.mxu0 0
      %613 = vmatprep.subr.bf16.mxu0 0
      %614 = vmatpush1.bf16.msra.mxu0 0
      %615 = vmatprep.mubr.bf16.mxu0 0
      %616 = vmatmul.mubr.bf16.gmra.mrb[0].mxu0 %v535
      %v617 = vpop.f32.mrb[0].mxu0
      %v618 = vadd.f32 0.0, %v617
      %v619 = vpop.f32.mrb[0].mxu0
      %v620 = vpop.f32.mrb[0].mxu0
      %v621 = vadd.f32 0.0, %v620
      %v622 = vpop.f32.mrb[0].mxu0
      %623 = vdwg.mxu0
      %v625 = vsel %vm322, %v582, 0
      %627 = vmatprep.subr.bf16.mxu0 0
      %628 = vmatpush1.bf16.msra.mxu0 %v284
      %629 = vmatprep.subr.bf16.mxu0 0
      %630 = vmatpush1.bf16.msra.mxu0 %v285
      %631 = vmatprep.subr.bf16.mxu0 0
      %632 = vmatpush1.bf16.msra.mxu0 0
      %633 = vmatprep.subr.bf16.mxu0 0
      %634 = vmatpush1.bf16.msra.mxu0 0
      %635 = vmatprep.subr.bf16.mxu0 0
      %636 = vmatpush1.bf16.msra.mxu0 0
      %637 = vmatprep.subr.bf16.mxu0 0
      %638 = vmatpush1.bf16.msra.mxu0 0
      %639 = vmatprep.subr.bf16.mxu0 0
      %640 = vmatpush1.bf16.msra.mxu0 0
      %641 = vmatprep.subr.bf16.mxu0 0
      %642 = vmatpush1.bf16.msra.mxu0 0
      %643 = vmatprep.subr.bf16.mxu0 0
      %644 = vmatpush1.bf16.msra.mxu0 0
      %645 = vmatprep.subr.bf16.mxu0 0
      %646 = vmatpush1.bf16.msra.mxu0 0
      %647 = vmatprep.subr.bf16.mxu0 0
      %648 = vmatpush1.bf16.msra.mxu0 0
      %649 = vmatprep.subr.bf16.mxu0 0
      %650 = vmatpush1.bf16.msra.mxu0 0
      %651 = vmatprep.subr.bf16.mxu0 0
      %652 = vmatpush1.bf16.msra.mxu0 0
      %653 = vmatprep.subr.bf16.mxu0 0
      %654 = vmatpush1.bf16.msra.mxu0 0
      %655 = vmatprep.subr.bf16.mxu0 0
      %656 = vmatpush1.bf16.msra.mxu0 0
      %657 = vmatprep.subr.bf16.mxu0 0
      %658 = vmatpush1.bf16.msra.mxu0 0
      %659 = vmatprep.mubr.bf16.mxu0 0
      %660 = vmatmul.mubr.bf16.gmra.mrb[0].mxu0 %v625
      %v661 = vpop.f32.mrb[0].mxu0
      %v662 = vadd.f32 %v618, %v661
      %v663 = vpop.f32.mrb[0].mxu0
      %v664 = vpop.f32.mrb[0].mxu0
      %v665 = vadd.f32 %v621, %v664
      %v666 = vpop.f32.mrb[0].mxu0
      %667 = vdwg.mxu0
      %v668 = vadd.f32 %v662, %v298
      %v669 = vadd.f32 %v665, %v298
      %v670 = vmax.f32 %v668, 0.0
      %v671 = vmax.f32 %v669, 0.0
      %672 = vst.msk [vmem:[#allocation2] sm:$0xff] %vm322, %v670
      %673 = vst.msk [vmem:[#allocation2 + $0x8] sm:$0xff] %vm322, %v671
      %v674 = vpack.c.bf16 %v671, %v670
      %s675 = scalar_lea.vmem [#allocation2], 16
      %v676 = vld [vmem:[%s675] sm:$0xff]
      %v677 = vld [vmem:[%s675 + $0x8] sm:$0xff]
      %678 = vmatprep.subr.bf16.mxu0 0
      %679 = vmatpush1.bf16.msra.mxu0 %v278
      %680 = vmatprep.subr.bf16.mxu0 0
      %681 = vmatpush1.bf16.msra.mxu0 %v279
      %682 = vmatprep.subr.bf16.mxu0 0
      %683 = vmatpush1.bf16.msra.mxu0 0
      %684 = vmatprep.subr.bf16.mxu0 0
      %685 = vmatpush1.bf16.msra.mxu0 0
      %686 = vmatprep.subr.bf16.mxu0 0
      %687 = vmatpush1.bf16.msra.mxu0 0
      %688 = vmatprep.subr.bf16.mxu0 0
      %689 = vmatpush1.bf16.msra.mxu0 0
      %690 = vmatprep.subr.bf16.mxu0 0
      %691 = vmatpush1.bf16.msra.mxu0 0
      %692 = vmatprep.subr.bf16.mxu0 0
      %693 = vmatpush1.bf16.msra.mxu0 0
      %694 = vmatprep.subr.bf16.mxu0 0
      %695 = vmatpush1.bf16.msra.mxu0 0
      %696 = vmatprep.subr.bf16.mxu0 0
      %697 = vmatpush1.bf16.msra.mxu0 0
      %698 = vmatprep.subr.bf16.mxu0 0
      %699 = vmatpush1.bf16.msra.mxu0 0
      %700 = vmatprep.subr.bf16.mxu0 0
      %701 = vmatpush1.bf16.msra.mxu0 0
      %702 = vmatprep.subr.bf16.mxu0 0
      %703 = vmatpush1.bf16.msra.mxu0 0
      %704 = vmatprep.subr.bf16.mxu0 0
      %705 = vmatpush1.bf16.msra.mxu0 0
      %706 = vmatprep.subr.bf16.mxu0 0
      %707 = vmatpush1.bf16.msra.mxu0 0
      %708 = vmatprep.subr.bf16.mxu0 0
      %709 = vmatpush1.bf16.msra.mxu0 0
      %710 = vmatprep.mubr.bf16.mxu0 0
      %711 = vmatmul.mubr.bf16.gmra.mrb[0].mxu0 %v625
      %v712 = vpop.f32.mrb[0].mxu0
      %v713 = vadd.f32 0.0, %v712
      %v714 = vpop.f32.mrb[0].mxu0
      %v715 = vpop.f32.mrb[0].mxu0
      %v716 = vadd.f32 0.0, %v715
      %v717 = vpop.f32.mrb[0].mxu0
      %718 = vdwg.mxu0
      %v719 = vadd.f32 %v676, %v713
      %v720 = vadd.f32 %v677, %v716
      %v721 = vmax.f32 %v719, 0.0
      %v722 = vmax.f32 %v720, 0.0
      %v723 = vpack.c.bf16 %v722, %v721
      %v725 = vsel %vm322, %v674, 0
      %727 = vmatprep.subr.bf16.mxu0 0
      %728 = vmatpush1.bf16.msra.mxu0 %v290
      %729 = vmatprep.subr.bf16.mxu0 0
      %730 = vmatpush1.bf16.msra.mxu0 %v291
      %731 = vmatprep.subr.bf16.mxu0 0
      %732 = vmatpush1.bf16.msra.mxu0 0
      %733 = vmatprep.subr.bf16.mxu0 0
      %734 = vmatpush1.bf16.msra.mxu0 0
      %735 = vmatprep.subr.bf16.mxu0 0
      %736 = vmatpush1.bf16.msra.mxu0 0
      %737 = vmatprep.subr.bf16.mxu0 0
      %738 = vmatpush1.bf16.msra.mxu0 0
      %739 = vmatprep.subr.bf16.mxu0 0
      %740 = vmatpush1.bf16.msra.mxu0 0
      %741 = vmatprep.subr.bf16.mxu0 0
      %742 = vmatpush1.bf16.msra.mxu0 0
      %743 = vmatprep.subr.bf16.mxu0 0
      %744 = vmatpush1.bf16.msra.mxu0 0
      %745 = vmatprep.subr.bf16.mxu0 0
      %746 = vmatpush1.bf16.msra.mxu0 0
      %747 = vmatprep.subr.bf16.mxu0 0
      %748 = vmatpush1.bf16.msra.mxu0 0
      %749 = vmatprep.subr.bf16.mxu0 0
      %750 = vmatpush1.bf16.msra.mxu0 0
      %751 = vmatprep.subr.bf16.mxu0 0
      %752 = vmatpush1.bf16.msra.mxu0 0
      %753 = vmatprep.subr.bf16.mxu0 0
      %754 = vmatpush1.bf16.msra.mxu0 0
      %755 = vmatprep.subr.bf16.mxu0 0
      %756 = vmatpush1.bf16.msra.mxu0 0
      %757 = vmatprep.subr.bf16.mxu0 0
      %758 = vmatpush1.bf16.msra.mxu0 0
      %759 = vmatprep.mubr.bf16.mxu0 0
      %760 = vmatmul.mubr.bf16.gmra.mrb[0].mxu0 %v725
      %v761 = vpop.f32.mrb[0].mxu0
      %v762 = vadd.f32 0.0, %v761
      %v763 = vpop.f32.mrb[0].mxu0
      %v764 = vpop.f32.mrb[0].mxu0
      %v765 = vadd.f32 0.0, %v764
      %v766 = vpop.f32.mrb[0].mxu0
      %767 = vdwg.mxu0
      %v769 = vsel %vm322, %v723, 0
      %771 = vmatprep.subr.bf16.mxu0 0
      %772 = vmatpush1.bf16.msra.mxu0 %v284
      %773 = vmatprep.subr.bf16.mxu0 0
      %774 = vmatpush1.bf16.msra.mxu0 %v285
      %775 = vmatprep.subr.bf16.mxu0 0
      %776 = vmatpush1.bf16.msra.mxu0 0
      %777 = vmatprep.subr.bf16.mxu0 0
      %778 = vmatpush1.bf16.msra.mxu0 0
      %779 = vmatprep.subr.bf16.mxu0 0
      %780 = vmatpush1.bf16.msra.mxu0 0
      %781 = vmatprep.subr.bf16.mxu0 0
      %782 = vmatpush1.bf16.msra.mxu0 0
      %783 = vmatprep.subr.bf16.mxu0 0
      %784 = vmatpush1.bf16.msra.mxu0 0
      %785 = vmatprep.subr.bf16.mxu0 0
      %786 = vmatpush1.bf16.msra.mxu0 0
      %787 = vmatprep.subr.bf16.mxu0 0
      %788 = vmatpush1.bf16.msra.mxu0 0
      %789 = vmatprep.subr.bf16.mxu0 0
      %790 = vmatpush1.bf16.msra.mxu0 0
      %791 = vmatprep.subr.bf16.mxu0 0
      %792 = vmatpush1.bf16.msra.mxu0 0
      %793 = vmatprep.subr.bf16.mxu0 0
      %794 = vmatpush1.bf16.msra.mxu0 0
      %795 = vmatprep.subr.bf16.mxu0 0
      %796 = vmatpush1.bf16.msra.mxu0 0
      %797 = vmatprep.subr.bf16.mxu0 0
      %798 = vmatpush1.bf16.msra.mxu0 0
      %799 = vmatprep.subr.bf16.mxu0 0
      %800 = vmatpush1.bf16.msra.mxu0 0
      %801 = vmatprep.subr.bf16.mxu0 0
      %802 = vmatpush1.bf16.msra.mxu0 0
      %803 = vmatprep.mubr.bf16.mxu0 0
      %804 = vmatmul.mubr.bf16.gmra.mrb[0].mxu0 %v769
      %v805 = vpop.f32.mrb[0].mxu0
      %v806 = vadd.f32 %v762, %v805
      %v807 = vpop.f32.mrb[0].mxu0
      %v808 = vpop.f32.mrb[0].mxu0
      %v809 = vadd.f32 %v765, %v808
      %v810 = vpop.f32.mrb[0].mxu0
      %811 = vdwg.mxu0
      %v812 = vadd.f32 %v806, %v298
      %v813 = vadd.f32 %v809, %v298
      %v814 = vmax.f32 %v812, 0.0
      %v815 = vmax.f32 %v813, 0.0
      %816 = vst.msk [vmem:[%s675] sm:$0xff] %vm322, %v814
      %817 = vst.msk [vmem:[%s675 + $0x8] sm:$0xff] %vm322, %v815
      %v818 = vpack.c.bf16 %v815, %v814
      %s819 = scalar_lea.vmem [#allocation2], 32
      %v820 = vld [vmem:[%s819] sm:$0xff]
      %v821 = vld [vmem:[%s819 + $0x8] sm:$0xff]
      %822 = vmatprep.subr.bf16.mxu0 0
      %823 = vmatpush1.bf16.msra.mxu0 %v278
      %824 = vmatprep.subr.bf16.mxu0 0
      %825 = vmatpush1.bf16.msra.mxu0 %v279
      %826 = vmatprep.subr.bf16.mxu0 0
      %827 = vmatpush1.bf16.msra.mxu0 0
      %828 = vmatprep.subr.bf16.mxu0 0
      %829 = vmatpush1.bf16.msra.mxu0 0
      %830 = vmatprep.subr.bf16.mxu0 0
      %831 = vmatpush1.bf16.msra.mxu0 0
      %832 = vmatprep.subr.bf16.mxu0 0
      %833 = vmatpush1.bf16.msra.mxu0 0
      %834 = vmatprep.subr.bf16.mxu0 0
      %835 = vmatpush1.bf16.msra.mxu0 0
      %836 = vmatprep.subr.bf16.mxu0 0
      %837 = vmatpush1.bf16.msra.mxu0 0
      %838 = vmatprep.subr.bf16.mxu0 0
      %839 = vmatpush1.bf16.msra.mxu0 0
      %840 = vmatprep.subr.bf16.mxu0 0
      %841 = vmatpush1.bf16.msra.mxu0 0
      %842 = vmatprep.subr.bf16.mxu0 0
      %843 = vmatpush1.bf16.msra.mxu0 0
      %844 = vmatprep.subr.bf16.mxu0 0
      %845 = vmatpush1.bf16.msra.mxu0 0
      %846 = vmatprep.subr.bf16.mxu0 0
      %847 = vmatpush1.bf16.msra.mxu0 0
      %848 = vmatprep.subr.bf16.mxu0 0
      %849 = vmatpush1.bf16.msra.mxu0 0
      %850 = vmatprep.subr.bf16.mxu0 0
      %851 = vmatpush1.bf16.msra.mxu0 0
      %852 = vmatprep.subr.bf16.mxu0 0
      %853 = vmatpush1.bf16.msra.mxu0 0
      %854 = vmatprep.mubr.bf16.mxu0 0
      %855 = vmatmul.mubr.bf16.gmra.mrb[0].mxu0 %v769
      %v856 = vpop.f32.mrb[0].mxu0
      %v857 = vadd.f32 0.0, %v856
      %v858 = vpop.f32.mrb[0].mxu0
      %v859 = vpop.f32.mrb[0].mxu0
      %v860 = vadd.f32 0.0, %v859
      %v861 = vpop.f32.mrb[0].mxu0
      %862 = vdwg.mxu0
      %v863 = vadd.f32 %v820, %v857
      %v864 = vadd.f32 %v821, %v860
      %v865 = vmax.f32 %v863, 0.0
      %v866 = vmax.f32 %v864, 0.0
      %v867 = vpack.c.bf16 %v866, %v865
      %v869 = vsel %vm322, %v818, 0
      %871 = vmatprep.subr.bf16.mxu0 0
      %872 = vmatpush1.bf16.msra.mxu0 %v290
      %873 = vmatprep.subr.bf16.mxu0 0
      %874 = vmatpush1.bf16.msra.mxu0 %v291
      %875 = vmatprep.subr.bf16.mxu0 0
      %876 = vmatpush1.bf16.msra.mxu0 0
      %877 = vmatprep.subr.bf16.mxu0 0
      %878 = vmatpush1.bf16.msra.mxu0 0
      %879 = vmatprep.subr.bf16.mxu0 0
      %880 = vmatpush1.bf16.msra.mxu0 0
      %881 = vmatprep.subr.bf16.mxu0 0
      %882 = vmatpush1.bf16.msra.mxu0 0
      %883 = vmatprep.subr.bf16.mxu0 0
      %884 = vmatpush1.bf16.msra.mxu0 0
      %885 = vmatprep.subr.bf16.mxu0 0
      %886 = vmatpush1.bf16.msra.mxu0 0
      %887 = vmatprep.subr.bf16.mxu0 0
      %888 = vmatpush1.bf16.msra.mxu0 0
      %889 = vmatprep.subr.bf16.mxu0 0
      %890 = vmatpush1.bf16.msra.mxu0 0
      %891 = vmatprep.subr.bf16.mxu0 0
      %892 = vmatpush1.bf16.msra.mxu0 0
      %893 = vmatprep.subr.bf16.mxu0 0
      %894 = vmatpush1.bf16.msra.mxu0 0
      %895 = vmatprep.subr.bf16.mxu0 0
      %896 = vmatpush1.bf16.msra.mxu0 0
      %897 = vmatprep.subr.bf16.mxu0 0
      %898 = vmatpush1.bf16.msra.mxu0 0
      %899 = vmatprep.subr.bf16.mxu0 0
      %900 = vmatpush1.bf16.msra.mxu0 0
      %901 = vmatprep.subr.bf16.mxu0 0
      %902 = vmatpush1.bf16.msra.mxu0 0
      %903 = vmatprep.mubr.bf16.mxu0 0
      %904 = vmatmul.mubr.bf16.gmra.mrb[0].mxu0 %v869
      %v905 = vpop.f32.mrb[0].mxu0
      %v906 = vadd.f32 0.0, %v905
      %v907 = vpop.f32.mrb[0].mxu0
      %v908 = vpop.f32.mrb[0].mxu0
      %v909 = vadd.f32 0.0, %v908
      %v910 = vpop.f32.mrb[0].mxu0
      %911 = vdwg.mxu0
      %v913 = vsel %vm322, %v867, 0
      %915 = vmatprep.subr.bf16.mxu0 0
      %916 = vmatpush1.bf16.msra.mxu0 %v284
      %917 = vmatprep.subr.bf16.mxu0 0
      %918 = vmatpush1.bf16.msra.mxu0 %v285
      %919 = vmatprep.subr.bf16.mxu0 0
      %920 = vmatpush1.bf16.msra.mxu0 0
      %921 = vmatprep.subr.bf16.mxu0 0
      %922 = vmatpush1.bf16.msra.mxu0 0
      %923 = vmatprep.subr.bf16.mxu0 0
      %924 = vmatpush1.bf16.msra.mxu0 0
      %925 = vmatprep.subr.bf16.mxu0 0
      %926 = vmatpush1.bf16.msra.mxu0 0
      %927 = vmatprep.subr.bf16.mxu0 0
      %928 = vmatpush1.bf16.msra.mxu0 0
      %929 = vmatprep.subr.bf16.mxu0 0
      %930 = vmatpush1.bf16.msra.mxu0 0
      %931 = vmatprep.subr.bf16.mxu0 0
      %932 = vmatpush1.bf16.msra.mxu0 0
      %933 = vmatprep.subr.bf16.mxu0 0
      %934 = vmatpush1.bf16.msra.mxu0 0
      %935 = vmatprep.subr.bf16.mxu0 0
      %936 = vmatpush1.bf16.msra.mxu0 0
      %937 = vmatprep.subr.bf16.mxu0 0
      %938 = vmatpush1.bf16.msra.mxu0 0
      %939 = vmatprep.subr.bf16.mxu0 0
      %940 = vmatpush1.bf16.msra.mxu0 0
      %941 = vmatprep.subr.bf16.mxu0 0
      %942 = vmatpush1.bf16.msra.mxu0 0
      %943 = vmatprep.subr.bf16.mxu0 0
      %944 = vmatpush1.bf16.msra.mxu0 0
      %945 = vmatprep.subr.bf16.mxu0 0
      %946 = vmatpush1.bf16.msra.mxu0 0
      %947 = vmatprep.mubr.bf16.mxu0 0
      %948 = vmatmul.mubr.bf16.gmra.mrb[0].mxu0 %v913
      %v949 = vpop.f32.mrb[0].mxu0
      %v950 = vadd.f32 %v906, %v949
      %v951 = vpop.f32.mrb[0].mxu0
      %v952 = vpop.f32.mrb[0].mxu0
      %v953 = vadd.f32 %v909, %v952
      %v954 = vpop.f32.mrb[0].mxu0
      %955 = vdwg.mxu0
      %v956 = vadd.f32 %v950, %v298
      %v957 = vadd.f32 %v953, %v298
      %v958 = vmax.f32 %v956, 0.0
      %v959 = vmax.f32 %v957, 0.0
      %960 = vst.msk [vmem:[%s819] sm:$0xff] %vm322, %v958
      %961 = vst.msk [vmem:[%s819 + $0x8] sm:$0xff] %vm322, %v959
      %v962 = vpack.c.bf16 %v959, %v958
      %s963 = scalar_lea.vmem [#allocation2], 48
      %v964 = vld [vmem:[%s963] sm:$0xff]
      %v965 = vld [vmem:[%s963 + $0x8] sm:$0xff]
      %966 = vmatprep.subr.bf16.mxu0 0
      %967 = vmatpush1.bf16.msra.mxu0 %v278
      %968 = vmatprep.subr.bf16.mxu0 0
      %969 = vmatpush1.bf16.msra.mxu0 %v279
      %970 = vmatprep.subr.bf16.mxu0 0
      %971 = vmatpush1.bf16.msra.mxu0 0
      %972 = vmatprep.subr.bf16.mxu0 0
      %973 = vmatpush1.bf16.msra.mxu0 0
      %974 = vmatprep.subr.bf16.mxu0 0
      %975 = vmatpush1.bf16.msra.mxu0 0
      %976 = vmatprep.subr.bf16.mxu0 0
      %977 = vmatpush1.bf16.msra.mxu0 0
      %978 = vmatprep.subr.bf16.mxu0 0
      %979 = vmatpush1.bf16.msra.mxu0 0
      %980 = vmatprep.subr.bf16.mxu0 0
      %981 = vmatpush1.bf16.msra.mxu0 0
      %982 = vmatprep.subr.bf16.mxu0 0
      %983 = vmatpush1.bf16.msra.mxu0 0
      %984 = vmatprep.subr.bf16.mxu0 0
      %985 = vmatpush1.bf16.msra.mxu0 0
      %986 = vmatprep.subr.bf16.mxu0 0
      %987 = vmatpush1.bf16.msra.mxu0 0
      %988 = vmatprep.subr.bf16.mxu0 0
      %989 = vmatpush1.bf16.msra.mxu0 0
      %990 = vmatprep.subr.bf16.mxu0 0
      %991 = vmatpush1.bf16.msra.mxu0 0
      %992 = vmatprep.subr.bf16.mxu0 0
      %993 = vmatpush1.bf16.msra.mxu0 0
      %994 = vmatprep.subr.bf16.mxu0 0
      %995 = vmatpush1.bf16.msra.mxu0 0
      %996 = vmatprep.subr.bf16.mxu0 0
      %997 = vmatpush1.bf16.msra.mxu0 0
      %998 = vmatprep.mubr.bf16.mxu0 0
      %999 = vmatmul.mubr.bf16.gmra.mrb[0].mxu0 %v913
      %v1000 = vpop.f32.mrb[0].mxu0
      %v1001 = vadd.f32 0.0, %v1000
      %v1002 = vpop.f32.mrb[0].mxu0
      %v1003 = vpop.f32.mrb[0].mxu0
      %v1004 = vadd.f32 0.0, %v1003
      %v1005 = vpop.f32.mrb[0].mxu0
      %1006 = vdwg.mxu0
      %v1007 = vadd.f32 %v964, %v1001
      %v1008 = vadd.f32 %v965, %v1004
      %v1009 = vmax.f32 %v1007, 0.0
      %v1010 = vmax.f32 %v1008, 0.0
      %v1011 = vpack.c.bf16 %v1010, %v1009
      %v1013 = vsel %vm322, %v962, 0
      %1015 = vmatprep.subr.bf16.mxu0 0
      %1016 = vmatpush1.bf16.msra.mxu0 %v290
      %1017 = vmatprep.subr.bf16.mxu0 0
      %1018 = vmatpush1.bf16.msra.mxu0 %v291
      %1019 = vmatprep.subr.bf16.mxu0 0
      %1020 = vmatpush1.bf16.msra.mxu0 0
      %1021 = vmatprep.subr.bf16.mxu0 0
      %1022 = vmatpush1.bf16.msra.mxu0 0
      %1023 = vmatprep.subr.bf16.mxu0 0
      %1024 = vmatpush1.bf16.msra.mxu0 0
      %1025 = vmatprep.subr.bf16.mxu0 0
      %1026 = vmatpush1.bf16.msra.mxu0 0
      %1027 = vmatprep.subr.bf16.mxu0 0
      %1028 = vmatpush1.bf16.msra.mxu0 0
      %1029 = vmatprep.subr.bf16.mxu0 0
      %1030 = vmatpush1.bf16.msra.mxu0 0
      %1031 = vmatprep.subr.bf16.mxu0 0
      %1032 = vmatpush1.bf16.msra.mxu0 0
      %1033 = vmatprep.subr.bf16.mxu0 0
      %1034 = vmatpush1.bf16.msra.mxu0 0
      %1035 = vmatprep.subr.bf16.mxu0 0
      %1036 = vmatpush1.bf16.msra.mxu0 0
      %1037 = vmatprep.subr.bf16.mxu0 0
      %1038 = vmatpush1.bf16.msra.mxu0 0
      %1039 = vmatprep.subr.bf16.mxu0 0
      %1040 = vmatpush1.bf16.msra.mxu0 0
      %1041 = vmatprep.subr.bf16.mxu0 0
      %1042 = vmatpush1.bf16.msra.mxu0 0
      %1043 = vmatprep.subr.bf16.mxu0 0
      %1044 = vmatpush1.bf16.msra.mxu0 0
      %1045 = vmatprep.subr.bf16.mxu0 0
      %1046 = vmatpush1.bf16.msra.mxu0 0
      %1047 = vmatprep.mubr.bf16.mxu0 0
      %1048 = vmatmul.mubr.bf16.gmra.mrb[0].mxu0 %v1013
      %v1049 = vpop.f32.mrb[0].mxu0
      %v1050 = vadd.f32 0.0, %v1049
      %v1051 = vpop.f32.mrb[0].mxu0
      %v1052 = vpop.f32.mrb[0].mxu0
      %v1053 = vadd.f32 0.0, %v1052
      %v1054 = vpop.f32.mrb[0].mxu0
      %1055 = vdwg.mxu0
      %v1057 = vsel %vm322, %v1011, 0
      %1059 = vmatprep.subr.bf16.mxu0 0
      %1060 = vmatpush1.bf16.msra.mxu0 %v284
      %1061 = vmatprep.subr.bf16.mxu0 0
      %1062 = vmatpush1.bf16.msra.mxu0 %v285
      %1063 = vmatprep.subr.bf16.mxu0 0
      %1064 = vmatpush1.bf16.msra.mxu0 0
      %1065 = vmatprep.subr.bf16.mxu0 0
      %1066 = vmatpush1.bf16.msra.mxu0 0
      %1067 = vmatprep.subr.bf16.mxu0 0
      %1068 = vmatpush1.bf16.msra.mxu0 0
      %1069 = vmatprep.subr.bf16.mxu0 0
      %1070 = vmatpush1.bf16.msra.mxu0 0
      %1071 = vmatprep.subr.bf16.mxu0 0
      %1072 = vmatpush1.bf16.msra.mxu0 0
      %1073 = vmatprep.subr.bf16.mxu0 0
      %1074 = vmatpush1.bf16.msra.mxu0 0
      %1075 = vmatprep.subr.bf16.mxu0 0
      %1076 = vmatpush1.bf16.msra.mxu0 0
      %1077 = vmatprep.subr.bf16.mxu0 0
      %1078 = vmatpush1.bf16.msra.mxu0 0
      %1079 = vmatprep.subr.bf16.mxu0 0
      %1080 = vmatpush1.bf16.msra.mxu0 0
      %1081 = vmatprep.subr.bf16.mxu0 0
      %1082 = vmatpush1.bf16.msra.mxu0 0
      %1083 = vmatprep.subr.bf16.mxu0 0
      %1084 = vmatpush1.bf16.msra.mxu0 0
      %1085 = vmatprep.subr.bf16.mxu0 0
      %1086 = vmatpush1.bf16.msra.mxu0 0
      %1087 = vmatprep.subr.bf16.mxu0 0
      %1088 = vmatpush1.bf16.msra.mxu0 0
      %1089 = vmatprep.subr.bf16.mxu0 0
      %1090 = vmatpush1.bf16.msra.mxu0 0
      %1091 = vmatprep.mubr.bf16.mxu0 0
      %1092 = vmatmul.mubr.bf16.gmra.mrb[0].mxu0 %v1057
      %v1093 = vpop.f32.mrb[0].mxu0
      %v1094 = vadd.f32 %v1050, %v1093
      %v1095 = vpop.f32.mrb[0].mxu0
      %v1096 = vpop.f32.mrb[0].mxu0
      %v1097 = vadd.f32 %v1053, %v1096
      %v1098 = vpop.f32.mrb[0].mxu0
      %1099 = vdwg.mxu0
      %v1100 = vadd.f32 %v1094, %v298
      %v1101 = vadd.f32 %v1097, %v298
      %v1102 = vmax.f32 %v1100, 0.0
      %v1103 = vmax.f32 %v1101, 0.0
      %1104 = vst.msk [vmem:[%s963] sm:$0xff] %vm322, %v1102
      %1105 = vst.msk [vmem:[%s963 + $0x8] sm:$0xff] %vm322, %v1103
      %v1106 = vpack.c.bf16 %v1103, %v1102
      %s1107 = scalar_lea.vmem [#allocation2], 64
      %v1108 = vld [vmem:[%s1107] sm:$0xff]
      %v1109 = vld [vmem:[%s1107 + $0x8] sm:$0xff]
      %1110 = vmatprep.subr.bf16.mxu0 0
      %1111 = vmatpush1.bf16.msra.mxu0 %v278
      %1112 = vmatprep.subr.bf16.mxu0 0
      %1113 = vmatpush1.bf16.msra.mxu0 %v279
      %1114 = vmatprep.subr.bf16.mxu0 0
      %1115 = vmatpush1.bf16.msra.mxu0 0
      %1116 = vmatprep.subr.bf16.mxu0 0
      %1117 = vmatpush1.bf16.msra.mxu0 0
      %1118 = vmatprep.subr.bf16.mxu0 0
      %1119 = vmatpush1.bf16.msra.mxu0 0
      %1120 = vmatprep.subr.bf16.mxu0 0
      %1121 = vmatpush1.bf16.msra.mxu0 0
      %1122 = vmatprep.subr.bf16.mxu0 0
      %1123 = vmatpush1.bf16.msra.mxu0 0
      %1124 = vmatprep.subr.bf16.mxu0 0
      %1125 = vmatpush1.bf16.msra.mxu0 0
      %1126 = vmatprep.subr.bf16.mxu0 0
      %1127 = vmatpush1.bf16.msra.mxu0 0
      %1128 = vmatprep.subr.bf16.mxu0 0
      %1129 = vmatpush1.bf16.msra.mxu0 0
      %1130 = vmatprep.subr.bf16.mxu0 0
      %1131 = vmatpush1.bf16.msra.mxu0 0
      %1132 = vmatprep.subr.bf16.mxu0 0
      %1133 = vmatpush1.bf16.msra.mxu0 0
      %1134 = vmatprep.subr.bf16.mxu0 0
      %1135 = vmatpush1.bf16.msra.mxu0 0
      %1136 = vmatprep.subr.bf16.mxu0 0
      %1137 = vmatpush1.bf16.msra.mxu0 0
      %1138 = vmatprep.subr.bf16.mxu0 0
      %1139 = vmatpush1.bf16.msra.mxu0 0
      %1140 = vmatprep.subr.bf16.mxu0 0
      %1141 = vmatpush1.bf16.msra.mxu0 0
      %1142 = vmatprep.mubr.bf16.mxu0 0
      %1143 = vmatmul.mubr.bf16.gmra.mrb[0].mxu0 %v1057
      %v1144 = vpop.f32.mrb[0].mxu0
      %v1145 = vadd.f32 0.0, %v1144
      %v1146 = vpop.f32.mrb[0].mxu0
      %v1147 = vpop.f32.mrb[0].mxu0
      %v1148 = vadd.f32 0.0, %v1147
      %v1149 = vpop.f32.mrb[0].mxu0
      %1150 = vdwg.mxu0
      %v1151 = vadd.f32 %v1108, %v1145
      %v1152 = vadd.f32 %v1109, %v1148
      %v1153 = vmax.f32 %v1151, 0.0
      %v1154 = vmax.f32 %v1152, 0.0
      %v1155 = vpack.c.bf16 %v1154, %v1153
      %v1157 = vsel %vm322, %v1106, 0
      %1159 = vmatprep.subr.bf16.mxu0 0
      %1160 = vmatpush1.bf16.msra.mxu0 %v290
      %1161 = vmatprep.subr.bf16.mxu0 0
      %1162 = vmatpush1.bf16.msra.mxu0 %v291
      %1163 = vmatprep.subr.bf16.mxu0 0
      %1164 = vmatpush1.bf16.msra.mxu0 0
      %1165 = vmatprep.subr.bf16.mxu0 0
      %1166 = vmatpush1.bf16.msra.mxu0 0
      %1167 = vmatprep.subr.bf16.mxu0 0
      %1168 = vmatpush1.bf16.msra.mxu0 0
      %1169 = vmatprep.subr.bf16.mxu0 0
      %1170 = vmatpush1.bf16.msra.mxu0 0
      %1171 = vmatprep.subr.bf16.mxu0 0
      %1172 = vmatpush1.bf16.msra.mxu0 0
      %1173 = vmatprep.subr.bf16.mxu0 0
      %1174 = vmatpush1.bf16.msra.mxu0 0
      %1175 = vmatprep.subr.bf16.mxu0 0
      %1176 = vmatpush1.bf16.msra.mxu0 0
      %1177 = vmatprep.subr.bf16.mxu0 0
      %1178 = vmatpush1.bf16.msra.mxu0 0
      %1179 = vmatprep.subr.bf16.mxu0 0
      %1180 = vmatpush1.bf16.msra.mxu0 0
      %1181 = vmatprep.subr.bf16.mxu0 0
      %1182 = vmatpush1.bf16.msra.mxu0 0
      %1183 = vmatprep.subr.bf16.mxu0 0
      %1184 = vmatpush1.bf16.msra.mxu0 0
      %1185 = vmatprep.subr.bf16.mxu0 0
      %1186 = vmatpush1.bf16.msra.mxu0 0
      %1187 = vmatprep.subr.bf16.mxu0 0
      %1188 = vmatpush1.bf16.msra.mxu0 0
      %1189 = vmatprep.subr.bf16.mxu0 0
      %1190 = vmatpush1.bf16.msra.mxu0 0
      %1191 = vmatprep.mubr.bf16.mxu0 0
      %1192 = vmatmul.mubr.bf16.gmra.mrb[0].mxu0 %v1157
      %v1193 = vpop.f32.mrb[0].mxu0
      %v1194 = vadd.f32 0.0, %v1193
      %v1195 = vpop.f32.mrb[0].mxu0
      %v1196 = vpop.f32.mrb[0].mxu0
      %v1197 = vadd.f32 0.0, %v1196
      %v1198 = vpop.f32.mrb[0].mxu0
      %1199 = vdwg.mxu0
      %v1201 = vsel %vm322, %v1155, 0
      %1203 = vmatprep.subr.bf16.mxu0 0
      %1204 = vmatpush1.bf16.msra.mxu0 %v284
      %1205 = vmatprep.subr.bf16.mxu0 0
      %1206 = vmatpush1.bf16.msra.mxu0 %v285
      %1207 = vmatprep.subr.bf16.mxu0 0
      %1208 = vmatpush1.bf16.msra.mxu0 0
      %1209 = vmatprep.subr.bf16.mxu0 0
      %1210 = vmatpush1.bf16.msra.mxu0 0
      %1211 = vmatprep.subr.bf16.mxu0 0
      %1212 = vmatpush1.bf16.msra.mxu0 0
      %1213 = vmatprep.subr.bf16.mxu0 0
      %1214 = vmatpush1.bf16.msra.mxu0 0
      %1215 = vmatprep.subr.bf16.mxu0 0
      %1216 = vmatpush1.bf16.msra.mxu0 0
      %1217 = vmatprep.subr.bf16.mxu0 0
      %1218 = vmatpush1.bf16.msra.mxu0 0
      %1219 = vmatprep.subr.bf16.mxu0 0
      %1220 = vmatpush1.bf16.msra.mxu0 0
      %1221 = vmatprep.subr.bf16.mxu0 0
      %1222 = vmatpush1.bf16.msra.mxu0 0
      %1223 = vmatprep.subr.bf16.mxu0 0
      %1224 = vmatpush1.bf16.msra.mxu0 0
      %1225 = vmatprep.subr.bf16.mxu0 0
      %1226 = vmatpush1.bf16.msra.mxu0 0
      %1227 = vmatprep.subr.bf16.mxu0 0
      %1228 = vmatpush1.bf16.msra.mxu0 0
      %1229 = vmatprep.subr.bf16.mxu0 0
      %1230 = vmatpush1.bf16.msra.mxu0 0
      %1231 = vmatprep.subr.bf16.mxu0 0
      %1232 = vmatpush1.bf16.msra.mxu0 0
      %1233 = vmatprep.subr.bf16.mxu0 0
      %1234 = vmatpush1.bf16.msra.mxu0 0
      %1235 = vmatprep.mubr.bf16.mxu0 0
      %1236 = vmatmul.mubr.bf16.gmra.mrb[0].mxu0 %v1201
      %v1237 = vpop.f32.mrb[0].mxu0
      %v1238 = vadd.f32 %v1194, %v1237
      %v1239 = vpop.f32.mrb[0].mxu0
      %v1240 = vpop.f32.mrb[0].mxu0
      %v1241 = vadd.f32 %v1197, %v1240
      %v1242 = vpop.f32.mrb[0].mxu0
      %1243 = vdwg.mxu0
      %v1244 = vadd.f32 %v1238, %v298
      %v1245 = vadd.f32 %v1241, %v298
      %v1246 = vmax.f32 %v1244, 0.0
      %v1247 = vmax.f32 %v1245, 0.0
      %1248 = vst.msk [vmem:[%s1107] sm:$0xff] %vm322, %v1246
      %1249 = vst.msk [vmem:[%s1107 + $0x8] sm:$0xff] %vm322, %v1247
      %v1250 = vpack.c.bf16 %v1247, %v1246
      %s1251 = scalar_lea.vmem [#allocation2], 80
      %v1252 = vld [vmem:[%s1251] sm:$0xff]
      %v1253 = vld [vmem:[%s1251 + $0x8] sm:$0xff]
      %1254 = vmatprep.subr.bf16.mxu0 0
      %1255 = vmatpush1.bf16.msra.mxu0 %v278
      %1256 = vmatprep.subr.bf16.mxu0 0
      %1257 = vmatpush1.bf16.msra.mxu0 %v279
      %1258 = vmatprep.subr.bf16.mxu0 0
      %1259 = vmatpush1.bf16.msra.mxu0 0
      %1260 = vmatprep.subr.bf16.mxu0 0
      %1261 = vmatpush1.bf16.msra.mxu0 0
      %1262 = vmatprep.subr.bf16.mxu0 0
      %1263 = vmatpush1.bf16.msra.mxu0 0
      %1264 = vmatprep.subr.bf16.mxu0 0
      %1265 = vmatpush1.bf16.msra.mxu0 0
      %1266 = vmatprep.subr.bf16.mxu0 0
      %1267 = vmatpush1.bf16.msra.mxu0 0
      %1268 = vmatprep.subr.bf16.mxu0 0
      %1269 = vmatpush1.bf16.msra.mxu0 0
      %1270 = vmatprep.subr.bf16.mxu0 0
      %1271 = vmatpush1.bf16.msra.mxu0 0
      %1272 = vmatprep.subr.bf16.mxu0 0
      %1273 = vmatpush1.bf16.msra.mxu0 0
      %1274 = vmatprep.subr.bf16.mxu0 0
      %1275 = vmatpush1.bf16.msra.mxu0 0
      %1276 = vmatprep.subr.bf16.mxu0 0
      %1277 = vmatpush1.bf16.msra.mxu0 0
      %1278 = vmatprep.subr.bf16.mxu0 0
      %1279 = vmatpush1.bf16.msra.mxu0 0
      %1280 = vmatprep.subr.bf16.mxu0 0
      %1281 = vmatpush1.bf16.msra.mxu0 0
      %1282 = vmatprep.subr.bf16.mxu0 0
      %1283 = vmatpush1.bf16.msra.mxu0 0
      %1284 = vmatprep.subr.bf16.mxu0 0
      %1285 = vmatpush1.bf16.msra.mxu0 0
      %1286 = vmatprep.mubr.bf16.mxu0 0
      %1287 = vmatmul.mubr.bf16.gmra.mrb[0].mxu0 %v1201
      %v1288 = vpop.f32.mrb[0].mxu0
      %v1289 = vadd.f32 0.0, %v1288
      %v1290 = vpop.f32.mrb[0].mxu0
      %v1291 = vpop.f32.mrb[0].mxu0
      %v1292 = vadd.f32 0.0, %v1291
      %v1293 = vpop.f32.mrb[0].mxu0
      %1294 = vdwg.mxu0
      %v1295 = vadd.f32 %v1252, %v1289
      %v1296 = vadd.f32 %v1253, %v1292
      %v1297 = vmax.f32 %v1295, 0.0
      %v1298 = vmax.f32 %v1296, 0.0
      %v1299 = vpack.c.bf16 %v1298, %v1297
      %v1301 = vsel %vm322, %v1250, 0
      %1303 = vmatprep.subr.bf16.mxu0 0
      %1304 = vmatpush1.bf16.msra.mxu0 %v290
      %1305 = vmatprep.subr.bf16.mxu0 0
      %1306 = vmatpush1.bf16.msra.mxu0 %v291
      %1307 = vmatprep.subr.bf16.mxu0 0
      %1308 = vmatpush1.bf16.msra.mxu0 0
      %1309 = vmatprep.subr.bf16.mxu0 0
      %1310 = vmatpush1.bf16.msra.mxu0 0
      %1311 = vmatprep.subr.bf16.mxu0 0
      %1312 = vmatpush1.bf16.msra.mxu0 0
      %1313 = vmatprep.subr.bf16.mxu0 0
      %1314 = vmatpush1.bf16.msra.mxu0 0
      %1315 = vmatprep.subr.bf16.mxu0 0
      %1316 = vmatpush1.bf16.msra.mxu0 0
      %1317 = vmatprep.subr.bf16.mxu0 0
      %1318 = vmatpush1.bf16.msra.mxu0 0
      %1319 = vmatprep.subr.bf16.mxu0 0
      %1320 = vmatpush1.bf16.msra.mxu0 0
      %1321 = vmatprep.subr.bf16.mxu0 0
      %1322 = vmatpush1.bf16.msra.mxu0 0
      %1323 = vmatprep.subr.bf16.mxu0 0
      %1324 = vmatpush1.bf16.msra.mxu0 0
      %1325 = vmatprep.subr.bf16.mxu0 0
      %1326 = vmatpush1.bf16.msra.mxu0 0
      %1327 = vmatprep.subr.bf16.mxu0 0
      %1328 = vmatpush1.bf16.msra.mxu0 0
      %1329 = vmatprep.subr.bf16.mxu0 0
      %1330 = vmatpush1.bf16.msra.mxu0 0
      %1331 = vmatprep.subr.bf16.mxu0 0
      %1332 = vmatpush1.bf16.msra.mxu0 0
      %1333 = vmatprep.subr.bf16.mxu0 0
      %1334 = vmatpush1.bf16.msra.mxu0 0
      %1335 = vmatprep.mubr.bf16.mxu0 0
      %1336 = vmatmul.mubr.bf16.gmra.mrb[0].mxu0 %v1301
      %v1337 = vpop.f32.mrb[0].mxu0
      %v1338 = vadd.f32 0.0, %v1337
      %v1339 = vpop.f32.mrb[0].mxu0
      %v1340 = vpop.f32.mrb[0].mxu0
      %v1341 = vadd.f32 0.0, %v1340
      %v1342 = vpop.f32.mrb[0].mxu0
      %1343 = vdwg.mxu0
      %v1345 = vsel %vm322, %v1299, 0
      %1347 = vmatprep.subr.bf16.mxu0 0
      %1348 = vmatpush1.bf16.msra.mxu0 %v284
      %1349 = vmatprep.subr.bf16.mxu0 0
      %1350 = vmatpush1.bf16.msra.mxu0 %v285
      %1351 = vmatprep.subr.bf16.mxu0 0
      %1352 = vmatpush1.bf16.msra.mxu0 0
      %1353 = vmatprep.subr.bf16.mxu0 0
      %1354 = vmatpush1.bf16.msra.mxu0 0
      %1355 = vmatprep.subr.bf16.mxu0 0
      %1356 = vmatpush1.bf16.msra.mxu0 0
      %1357 = vmatprep.subr.bf16.mxu0 0
      %1358 = vmatpush1.bf16.msra.mxu0 0
      %1359 = vmatprep.subr.bf16.mxu0 0
      %1360 = vmatpush1.bf16.msra.mxu0 0
      %1361 = vmatprep.subr.bf16.mxu0 0
      %1362 = vmatpush1.bf16.msra.mxu0 0
      %1363 = vmatprep.subr.bf16.mxu0 0
      %1364 = vmatpush1.bf16.msra.mxu0 0
      %1365 = vmatprep.subr.bf16.mxu0 0
      %1366 = vmatpush1.bf16.msra.mxu0 0
      %1367 = vmatprep.subr.bf16.mxu0 0
      %1368 = vmatpush1.bf16.msra.mxu0 0
      %1369 = vmatprep.subr.bf16.mxu0 0
      %1370 = vmatpush1.bf16.msra.mxu0 0
      %1371 = vmatprep.subr.bf16.mxu0 0
      %1372 = vmatpush1.bf16.msra.mxu0 0
      %1373 = vmatprep.subr.bf16.mxu0 0
      %1374 = vmatpush1.bf16.msra.mxu0 0
      %1375 = vmatprep.subr.bf16.mxu0 0
      %1376 = vmatpush1.bf16.msra.mxu0 0
      %1377 = vmatprep.subr.bf16.mxu0 0
      %1378 = vmatpush1.bf16.msra.mxu0 0
      %1379 = vmatprep.mubr.bf16.mxu0 0
      %1380 = vmatmul.mubr.bf16.gmra.mrb[0].mxu0 %v1345
      %v1381 = vpop.f32.mrb[0].mxu0
      %v1382 = vadd.f32 %v1338, %v1381
      %v1383 = vpop.f32.mrb[0].mxu0
      %v1384 = vpop.f32.mrb[0].mxu0
      %v1385 = vadd.f32 %v1341, %v1384
      %v1386 = vpop.f32.mrb[0].mxu0
      %1387 = vdwg.mxu0
      %v1388 = vadd.f32 %v1382, %v298
      %v1389 = vadd.f32 %v1385, %v298
      %v1390 = vmax.f32 %v1388, 0.0
      %v1391 = vmax.f32 %v1389, 0.0
      %1392 = vst.msk [vmem:[%s1251] sm:$0xff] %vm322, %v1390
      %1393 = vst.msk [vmem:[%s1251 + $0x8] sm:$0xff] %vm322, %v1391
      %v1394 = vpack.c.bf16 %v1391, %v1390
      %s1395 = scalar_lea.vmem [#allocation2], 96
      %v1396 = vld [vmem:[%s1395] sm:$0xff]
      %v1397 = vld [vmem:[%s1395 + $0x8] sm:$0xff]
      %1398 = vmatprep.subr.bf16.mxu0 0
      %1399 = vmatpush1.bf16.msra.mxu0 %v278
      %1400 = vmatprep.subr.bf16.mxu0 0
      %1401 = vmatpush1.bf16.msra.mxu0 %v279
      %1402 = vmatprep.subr.bf16.mxu0 0
      %1403 = vmatpush1.bf16.msra.mxu0 0
      %1404 = vmatprep.subr.bf16.mxu0 0
      %1405 = vmatpush1.bf16.msra.mxu0 0
      %1406 = vmatprep.subr.bf16.mxu0 0
      %1407 = vmatpush1.bf16.msra.mxu0 0
      %1408 = vmatprep.subr.bf16.mxu0 0
      %1409 = vmatpush1.bf16.msra.mxu0 0
      %1410 = vmatprep.subr.bf16.mxu0 0
      %1411 = vmatpush1.bf16.msra.mxu0 0
      %1412 = vmatprep.subr.bf16.mxu0 0
      %1413 = vmatpush1.bf16.msra.mxu0 0
      %1414 = vmatprep.subr.bf16.mxu0 0
      %1415 = vmatpush1.bf16.msra.mxu0 0
      %1416 = vmatprep.subr.bf16.mxu0 0
      %1417 = vmatpush1.bf16.msra.mxu0 0
      %1418 = vmatprep.subr.bf16.mxu0 0
      %1419 = vmatpush1.bf16.msra.mxu0 0
      %1420 = vmatprep.subr.bf16.mxu0 0
      %1421 = vmatpush1.bf16.msra.mxu0 0
      %1422 = vmatprep.subr.bf16.mxu0 0
      %1423 = vmatpush1.bf16.msra.mxu0 0
      %1424 = vmatprep.subr.bf16.mxu0 0
      %1425 = vmatpush1.bf16.msra.mxu0 0
      %1426 = vmatprep.subr.bf16.mxu0 0
      %1427 = vmatpush1.bf16.msra.mxu0 0
      %1428 = vmatprep.subr.bf16.mxu0 0
      %1429 = vmatpush1.bf16.msra.mxu0 0
      %1430 = vmatprep.mubr.bf16.mxu0 0
      %1431 = vmatmul.mubr.bf16.gmra.mrb[0].mxu0 %v1345
      %v1432 = vpop.f32.mrb[0].mxu0
      %v1433 = vadd.f32 0.0, %v1432
      %v1434 = vpop.f32.mrb[0].mxu0
      %v1435 = vpop.f32.mrb[0].mxu0
      %v1436 = vadd.f32 0.0, %v1435
      %v1437 = vpop.f32.mrb[0].mxu0
      %1438 = vdwg.mxu0
      %v1439 = vadd.f32 %v1396, %v1433
      %v1440 = vadd.f32 %v1397, %v1436
      %v1441 = vmax.f32 %v1439, 0.0
      %v1442 = vmax.f32 %v1440, 0.0
      %v1443 = vpack.c.bf16 %v1442, %v1441
      %v1445 = vsel %vm322, %v1394, 0
      %1447 = vmatprep.subr.bf16.mxu0 0
      %1448 = vmatpush1.bf16.msra.mxu0 %v290
      %1449 = vmatprep.subr.bf16.mxu0 0
      %1450 = vmatpush1.bf16.msra.mxu0 %v291
      %1451 = vmatprep.subr.bf16.mxu0 0
      %1452 = vmatpush1.bf16.msra.mxu0 0
      %1453 = vmatprep.subr.bf16.mxu0 0
      %1454 = vmatpush1.bf16.msra.mxu0 0
      %1455 = vmatprep.subr.bf16.mxu0 0
      %1456 = vmatpush1.bf16.msra.mxu0 0
      %1457 = vmatprep.subr.bf16.mxu0 0
      %1458 = vmatpush1.bf16.msra.mxu0 0
      %1459 = vmatprep.subr.bf16.mxu0 0
      %1460 = vmatpush1.bf16.msra.mxu0 0
      %1461 = vmatprep.subr.bf16.mxu0 0
      %1462 = vmatpush1.bf16.msra.mxu0 0
      %1463 = vmatprep.subr.bf16.mxu0 0
      %1464 = vmatpush1.bf16.msra.mxu0 0
      %1465 = vmatprep.subr.bf16.mxu0 0
      %1466 = vmatpush1.bf16.msra.mxu0 0
      %1467 = vmatprep.subr.bf16.mxu0 0
      %1468 = vmatpush1.bf16.msra.mxu0 0
      %1469 = vmatprep.subr.bf16.mxu0 0
      %1470 = vmatpush1.bf16.msra.mxu0 0
      %1471 = vmatprep.subr.bf16.mxu0 0
      %1472 = vmatpush1.bf16.msra.mxu0 0
      %1473 = vmatprep.subr.bf16.mxu0 0
      %1474 = vmatpush1.bf16.msra.mxu0 0
      %1475 = vmatprep.subr.bf16.mxu0 0
      %1476 = vmatpush1.bf16.msra.mxu0 0
      %1477 = vmatprep.subr.bf16.mxu0 0
      %1478 = vmatpush1.bf16.msra.mxu0 0
      %1479 = vmatprep.mubr.bf16.mxu0 0
      %1480 = vmatmul.mubr.bf16.gmra.mrb[0].mxu0 %v1445
      %v1481 = vpop.f32.mrb[0].mxu0
      %v1482 = vadd.f32 0.0, %v1481
      %v1483 = vpop.f32.mrb[0].mxu0
      %v1484 = vpop.f32.mrb[0].mxu0
      %v1485 = vadd.f32 0.0, %v1484
      %v1486 = vpop.f32.mrb[0].mxu0
      %1487 = vdwg.mxu0
      %v1489 = vsel %vm322, %v1443, 0
      %1491 = vmatprep.subr.bf16.mxu0 0
      %1492 = vmatpush1.bf16.msra.mxu0 %v284
      %1493 = vmatprep.subr.bf16.mxu0 0
      %1494 = vmatpush1.bf16.msra.mxu0 %v285
      %1495 = vmatprep.subr.bf16.mxu0 0
      %1496 = vmatpush1.bf16.msra.mxu0 0
      %1497 = vmatprep.subr.bf16.mxu0 0
      %1498 = vmatpush1.bf16.msra.mxu0 0
      %1499 = vmatprep.subr.bf16.mxu0 0
      %1500 = vmatpush1.bf16.msra.mxu0 0
      %1501 = vmatprep.subr.bf16.mxu0 0
      %1502 = vmatpush1.bf16.msra.mxu0 0
      %1503 = vmatprep.subr.bf16.mxu0 0
      %1504 = vmatpush1.bf16.msra.mxu0 0
      %1505 = vmatprep.subr.bf16.mxu0 0
      %1506 = vmatpush1.bf16.msra.mxu0 0
      %1507 = vmatprep.subr.bf16.mxu0 0
      %1508 = vmatpush1.bf16.msra.mxu0 0
      %1509 = vmatprep.subr.bf16.mxu0 0
      %1510 = vmatpush1.bf16.msra.mxu0 0
      %1511 = vmatprep.subr.bf16.mxu0 0
      %1512 = vmatpush1.bf16.msra.mxu0 0
      %1513 = vmatprep.subr.bf16.mxu0 0
      %1514 = vmatpush1.bf16.msra.mxu0 0
      %1515 = vmatprep.subr.bf16.mxu0 0
      %1516 = vmatpush1.bf16.msra.mxu0 0
      %1517 = vmatprep.subr.bf16.mxu0 0
      %1518 = vmatpush1.bf16.msra.mxu0 0
      %1519 = vmatprep.subr.bf16.mxu0 0
      %1520 = vmatpush1.bf16.msra.mxu0 0
      %1521 = vmatprep.subr.bf16.mxu0 0
      %1522 = vmatpush1.bf16.msra.mxu0 0
      %1523 = vmatprep.mubr.bf16.mxu0 0
      %1524 = vmatmul.mubr.bf16.gmra.mrb[0].mxu0 %v1489
      %v1525 = vpop.f32.mrb[0].mxu0
      %v1526 = vadd.f32 %v1482, %v1525
      %v1527 = vpop.f32.mrb[0].mxu0
      %v1528 = vpop.f32.mrb[0].mxu0
      %v1529 = vadd.f32 %v1485, %v1528
      %v1530 = vpop.f32.mrb[0].mxu0
      %1531 = vdwg.mxu0
      %v1532 = vadd.f32 %v1526, %v298
      %v1533 = vadd.f32 %v1529, %v298
      %v1534 = vmax.f32 %v1532, 0.0
      %v1535 = vmax.f32 %v1533, 0.0
      %1536 = vst.msk [vmem:[%s1395] sm:$0xff] %vm322, %v1534
      %1537 = vst.msk [vmem:[%s1395 + $0x8] sm:$0xff] %vm322, %v1535
      %v1538 = vpack.c.bf16 %v1535, %v1534
      %s1539 = scalar_lea.vmem [#allocation2], 112
      %v1540 = vld [vmem:[%s1539] sm:$0xff]
      %v1541 = vld [vmem:[%s1539 + $0x8] sm:$0xff]
      %1542 = vmatprep.subr.bf16.mxu0 0
      %1543 = vmatpush1.bf16.msra.mxu0 %v278
      %1544 = vmatprep.subr.bf16.mxu0 0
      %1545 = vmatpush1.bf16.msra.mxu0 %v279
      %1546 = vmatprep.subr.bf16.mxu0 0
      %1547 = vmatpush1.bf16.msra.mxu0 0
      %1548 = vmatprep.subr.bf16.mxu0 0
      %1549 = vmatpush1.bf16.msra.mxu0 0
      %1550 = vmatprep.subr.bf16.mxu0 0
      %1551 = vmatpush1.bf16.msra.mxu0 0
      %1552 = vmatprep.subr.bf16.mxu0 0
      %1553 = vmatpush1.bf16.msra.mxu0 0
      %1554 = vmatprep.subr.bf16.mxu0 0
      %1555 = vmatpush1.bf16.msra.mxu0 0
      %1556 = vmatprep.subr.bf16.mxu0 0
      %1557 = vmatpush1.bf16.msra.mxu0 0
      %1558 = vmatprep.subr.bf16.mxu0 0
      %1559 = vmatpush1.bf16.msra.mxu0 0
      %1560 = vmatprep.subr.bf16.mxu0 0
      %1561 = vmatpush1.bf16.msra.mxu0 0
      %1562 = vmatprep.subr.bf16.mxu0 0
      %1563 = vmatpush1.bf16.msra.mxu0 0
      %1564 = vmatprep.subr.bf16.mxu0 0
      %1565 = vmatpush1.bf16.msra.mxu0 0
      %1566 = vmatprep.subr.bf16.mxu0 0
      %1567 = vmatpush1.bf16.msra.mxu0 0
      %1568 = vmatprep.subr.bf16.mxu0 0
      %1569 = vmatpush1.bf16.msra.mxu0 0
      %1570 = vmatprep.subr.bf16.mxu0 0
      %1571 = vmatpush1.bf16.msra.mxu0 0
      %1572 = vmatprep.subr.bf16.mxu0 0
      %1573 = vmatpush1.bf16.msra.mxu0 0
      %1574 = vmatprep.mubr.bf16.mxu0 0
      %1575 = vmatmul.mubr.bf16.gmra.mrb[0].mxu0 %v1489
      %v1576 = vpop.f32.mrb[0].mxu0
      %v1577 = vadd.f32 0.0, %v1576
      %v1578 = vpop.f32.mrb[0].mxu0
      %v1579 = vpop.f32.mrb[0].mxu0
      %v1580 = vadd.f32 0.0, %v1579
      %v1581 = vpop.f32.mrb[0].mxu0
      %1582 = vdwg.mxu0
      %v1583 = vadd.f32 %v1540, %v1577
      %v1584 = vadd.f32 %v1541, %v1580
      %v1585 = vmax.f32 %v1583, 0.0
      %v1586 = vmax.f32 %v1584, 0.0
      %v1587 = vpack.c.bf16 %v1586, %v1585
      %v1589 = vsel %vm322, %v1538, 0
      %1591 = vmatprep.subr.bf16.mxu0 0
      %1592 = vmatpush1.bf16.msra.mxu0 %v290
      %1593 = vmatprep.subr.bf16.mxu0 0
      %1594 = vmatpush1.bf16.msra.mxu0 %v291
      %1595 = vmatprep.subr.bf16.mxu0 0
      %1596 = vmatpush1.bf16.msra.mxu0 0
      %1597 = vmatprep.subr.bf16.mxu0 0
      %1598 = vmatpush1.bf16.msra.mxu0 0
      %1599 = vmatprep.subr.bf16.mxu0 0
      %1600 = vmatpush1.bf16.msra.mxu0 0
      %1601 = vmatprep.subr.bf16.mxu0 0
      %1602 = vmatpush1.bf16.msra.mxu0 0
      %1603 = vmatprep.subr.bf16.mxu0 0
      %1604 = vmatpush1.bf16.msra.mxu0 0
      %1605 = vmatprep.subr.bf16.mxu0 0
      %1606 = vmatpush1.bf16.msra.mxu0 0
      %1607 = vmatprep.subr.bf16.mxu0 0
      %1608 = vmatpush1.bf16.msra.mxu0 0
      %1609 = vmatprep.subr.bf16.mxu0 0
      %1610 = vmatpush1.bf16.msra.mxu0 0
      %1611 = vmatprep.subr.bf16.mxu0 0
      %1612 = vmatpush1.bf16.msra.mxu0 0
      %1613 = vmatprep.subr.bf16.mxu0 0
      %1614 = vmatpush1.bf16.msra.mxu0 0
      %1615 = vmatprep.subr.bf16.mxu0 0
      %1616 = vmatpush1.bf16.msra.mxu0 0
      %1617 = vmatprep.subr.bf16.mxu0 0
      %1618 = vmatpush1.bf16.msra.mxu0 0
      %1619 = vmatprep.subr.bf16.mxu0 0
      %1620 = vmatpush1.bf16.msra.mxu0 0
      %1621 = vmatprep.subr.bf16.mxu0 0
      %1622 = vmatpush1.bf16.msra.mxu0 0
      %1623 = vmatprep.mubr.bf16.mxu0 0
      %1624 = vmatmul.mubr.bf16.gmra.mrb[0].mxu0 %v1589
      %v1625 = vpop.f32.mrb[0].mxu0
      %v1626 = vadd.f32 0.0, %v1625
      %v1627 = vpop.f32.mrb[0].mxu0
      %v1628 = vpop.f32.mrb[0].mxu0
      %v1629 = vadd.f32 0.0, %v1628
      %v1630 = vpop.f32.mrb[0].mxu0
      %1631 = vdwg.mxu0
      %v1633 = vsel %vm322, %v1587, 0
      %1635 = vmatprep.subr.bf16.mxu0 0
      %1636 = vmatpush1.bf16.msra.mxu0 %v284
      %1637 = vmatprep.subr.bf16.mxu0 0
      %1638 = vmatpush1.bf16.msra.mxu0 %v285
      %1639 = vmatprep.subr.bf16.mxu0 0
      %1640 = vmatpush1.bf16.msra.mxu0 0
      %1641 = vmatprep.subr.bf16.mxu0 0
      %1642 = vmatpush1.bf16.msra.mxu0 0
      %1643 = vmatprep.subr.bf16.mxu0 0
      %1644 = vmatpush1.bf16.msra.mxu0 0
      %1645 = vmatprep.subr.bf16.mxu0 0
      %1646 = vmatpush1.bf16.msra.mxu0 0
      %1647 = vmatprep.subr.bf16.mxu0 0
      %1648 = vmatpush1.bf16.msra.mxu0 0
      %1649 = vmatprep.subr.bf16.mxu0 0
      %1650 = vmatpush1.bf16.msra.mxu0 0
      %1651 = vmatprep.subr.bf16.mxu0 0
      %1652 = vmatpush1.bf16.msra.mxu0 0
      %1653 = vmatprep.subr.bf16.mxu0 0
      %1654 = vmatpush1.bf16.msra.mxu0 0
      %1655 = vmatprep.subr.bf16.mxu0 0
      %1656 = vmatpush1.bf16.msra.mxu0 0
      %1657 = vmatprep.subr.bf16.mxu0 0
      %1658 = vmatpush1.bf16.msra.mxu0 0
      %1659 = vmatprep.subr.bf16.mxu0 0
      %1660 = vmatpush1.bf16.msra.mxu0 0
      %1661 = vmatprep.subr.bf16.mxu0 0
      %1662 = vmatpush1.bf16.msra.mxu0 0
      %1663 = vmatprep.subr.bf16.mxu0 0
      %1664 = vmatpush1.bf16.msra.mxu0 0
      %1665 = vmatprep.subr.bf16.mxu0 0
      %1666 = vmatpush1.bf16.msra.mxu0 0
      %1667 = vmatprep.mubr.bf16.mxu0 0
      %1668 = vmatmul.mubr.bf16.gmra.mrb[0].mxu0 %v1633
      %v1669 = vpop.f32.mrb[0].mxu0
      %v1670 = vadd.f32 %v1626, %v1669
      %v1671 = vpop.f32.mrb[0].mxu0
      %v1672 = vpop.f32.mrb[0].mxu0
      %v1673 = vadd.f32 %v1629, %v1672
      %v1674 = vpop.f32.mrb[0].mxu0
      %1675 = vdwg.mxu0
      %v1676 = vadd.f32 %v1670, %v298
      %v1677 = vadd.f32 %v1673, %v298
      %v1678 = vmax.f32 %v1676, 0.0
      %v1679 = vmax.f32 %v1677, 0.0
      %1680 = vst.msk [vmem:[%s1539] sm:$0xff] %vm322, %v1678
      %1681 = vst.msk [vmem:[%s1539 + $0x8] sm:$0xff] %vm322, %v1679
      %v1682 = vld [vmem:[#allocation2] sm:$0xff]
      %v1683 = vld [vmem:[#allocation2 + $0x8] sm:$0xff]
      %v1684 = vld [vmem:[#allocation2 + $0x10] sm:$0xff]
      %v1685 = vld [vmem:[#allocation2 + $0x18] sm:$0xff]
      %v1686 = vld [vmem:[#allocation2 + $0x20] sm:$0xff]
      %v1687 = vld [vmem:[#allocation2 + $0x28] sm:$0xff]
      %v1688 = vld [vmem:[#allocation2 + $0x30] sm:$0xff]
      %v1689 = vld [vmem:[#allocation2 + $0x38] sm:$0xff]
      %v1690 = vld [vmem:[#allocation2 + $0x40] sm:$0xff]
      %v1691 = vld [vmem:[#allocation2 + $0x48] sm:$0xff]
      %v1692 = vld [vmem:[#allocation2 + $0x50] sm:$0xff]
      %v1693 = vld [vmem:[#allocation2 + $0x58] sm:$0xff]
      %v1694 = vld [vmem:[#allocation2 + $0x60] sm:$0xff]
      %v1695 = vld [vmem:[#allocation2 + $0x68] sm:$0xff]
      %v1696 = vld [vmem:[#allocation2 + $0x70] sm:$0xff]
      %v1697 = vld [vmem:[#allocation2 + $0x78] sm:$0xff]
      %v1698 = vlaneseq
      %v1699 = vshrl.u32 %v1698, 7
      %v1700 = vsub.s32 0, %v1699
      %v1701 = vrot.slane %v299, %v1700
      %v1702 = vmul.f32 %v1682, %v1701
      %v1703 = vmul.f32 %v1683, %v1701
      %v1704 = vmul.f32 %v1684, %v1701
      %v1705 = vmul.f32 %v1685, %v1701
      %v1706 = vmul.f32 %v1686, %v1701
      %v1707 = vmul.f32 %v1687, %v1701
      %v1708 = vmul.f32 %v1688, %v1701
      %v1709 = vmul.f32 %v1689, %v1701
      %v1710 = vmul.f32 %v1690, %v1701
      %v1711 = vmul.f32 %v1691, %v1701
      %v1712 = vmul.f32 %v1692, %v1701
      %v1713 = vmul.f32 %v1693, %v1701
      %v1714 = vmul.f32 %v1694, %v1701
      %v1715 = vmul.f32 %v1695, %v1701
      %v1716 = vmul.f32 %v1696, %v1701
      %v1717 = vmul.f32 %v1697, %v1701
      %v1718 = vsel %vm322, %v1702, 0.0
      %1719 = vadd.xlane.f32.xlu0 %v1718
      %v1720 = vpop.xlane.xlu0 %1719
      %v1721 = vsel %vm322, %v1703, 0.0
      %1722 = vadd.xlane.f32.xlu0 %v1721
      %v1723 = vpop.xlane.xlu0 %1722
      %v1724 = vsel %vm322, %v1704, 0.0
      %1725 = vadd.xlane.f32.xlu0 %v1724
      %v1726 = vpop.xlane.xlu0 %1725
      %v1727 = vsel %vm322, %v1705, 0.0
      %1728 = vadd.xlane.f32.xlu0 %v1727
      %v1729 = vpop.xlane.xlu0 %1728
      %v1730 = vsel %vm322, %v1706, 0.0
      %1731 = vadd.xlane.f32.xlu0 %v1730
      %v1732 = vpop.xlane.xlu0 %1731
      %v1733 = vsel %vm322, %v1707, 0.0
      %1734 = vadd.xlane.f32.xlu0 %v1733
      %v1735 = vpop.xlane.xlu0 %1734
      %v1736 = vsel %vm322, %v1708, 0.0
      %1737 = vadd.xlane.f32.xlu0 %v1736
      %v1738 = vpop.xlane.xlu0 %1737
      %v1739 = vsel %vm322, %v1709, 0.0
      %1740 = vadd.xlane.f32.xlu0 %v1739
      %v1741 = vpop.xlane.xlu0 %1740
      %v1742 = vsel %vm322, %v1710, 0.0
      %1743 = vadd.xlane.f32.xlu0 %v1742
      %v1744 = vpop.xlane.xlu0 %1743
      %v1745 = vsel %vm322, %v1711, 0.0
      %1746 = vadd.xlane.f32.xlu0 %v1745
      %v1747 = vpop.xlane.xlu0 %1746
      %v1748 = vsel %vm322, %v1712, 0.0
      %1749 = vadd.xlane.f32.xlu0 %v1748
      %v1750 = vpop.xlane.xlu0 %1749
      %v1751 = vsel %vm322, %v1713, 0.0
      %1752 = vadd.xlane.f32.xlu0 %v1751
      %v1753 = vpop.xlane.xlu0 %1752
      %v1754 = vsel %vm322, %v1714, 0.0
      %1755 = vadd.xlane.f32.xlu0 %v1754
      %v1756 = vpop.xlane.xlu0 %1755
      %v1757 = vsel %vm322, %v1715, 0.0
      %1758 = vadd.xlane.f32.xlu0 %v1757
      %v1759 = vpop.xlane.xlu0 %1758
      %v1760 = vsel %vm322, %v1716, 0.0
      %1761 = vadd.xlane.f32.xlu0 %v1760
      %v1762 = vpop.xlane.xlu0 %1761
      %v1763 = vsel %vm322, %v1717, 0.0
      %1764 = vadd.xlane.f32.xlu0 %v1763
      %v1765 = vpop.xlane.xlu0 %1764
      %v1766 = vlaneseq
      %v1767 = vshrl.u32 %v1766, 7
      %v1768 = vsub.s32 0, %v1767
      %v1769 = vrot.slane %v300, %v1768
      %v1770 = vadd.f32 %v1720, %v1769
      %v1771 = vadd.f32 %v1723, %v1769
      %v1772 = vadd.f32 %v1726, %v1769
      %v1773 = vadd.f32 %v1729, %v1769
      %v1774 = vadd.f32 %v1732, %v1769
      %v1775 = vadd.f32 %v1735, %v1769
      %v1776 = vadd.f32 %v1738, %v1769
      %v1777 = vadd.f32 %v1741, %v1769
      %v1778 = vadd.f32 %v1744, %v1769
      %v1779 = vadd.f32 %v1747, %v1769
      %v1780 = vadd.f32 %v1750, %v1769
      %v1781 = vadd.f32 %v1753, %v1769
      %v1782 = vadd.f32 %v1756, %v1769
      %v1783 = vadd.f32 %v1759, %v1769
      %v1784 = vadd.f32 %v1762, %v1769
      %v1785 = vadd.f32 %v1765, %v1769
      %vm1786 = vcmask 7168
      %v1787 = vsel %vm1786, %v1770, -inf
      %v1788 = vsel %vm1786, %v1771, -inf
      %v1789 = vsel %vm1786, %v1772, -inf
      %v1790 = vsel %vm1786, %v1773, -inf
      %v1791 = vsel %vm1786, %v1774, -inf
      %v1792 = vmax.f32 %v1787, %v1791
      %v1793 = vsel %vm1786, %v1775, -inf
      %v1794 = vmax.f32 %v1788, %v1793
      %v1795 = vsel %vm1786, %v1776, -inf
      %v1796 = vmax.f32 %v1789, %v1795
      %v1797 = vsel %vm1786, %v1777, -inf
      %v1798 = vmax.f32 %v1790, %v1797
      %v1799 = vsel %vm1786, %v1778, -inf
      %v1800 = vmax.f32 %v1792, %v1799
      %v1801 = vsel %vm1786, %v1779, -inf
      %v1802 = vmax.f32 %v1794, %v1801
      %v1803 = vsel %vm1786, %v1780, -inf
      %v1804 = vmax.f32 %v1796, %v1803
      %v1805 = vsel %vm1786, %v1781, -inf
      %v1806 = vmax.f32 %v1798, %v1805
      %v1807 = vsel %vm1786, %v1782, -inf
      %v1808 = vmax.f32 %v1800, %v1807
      %v1809 = vsel %vm1786, %v1783, -inf
      %v1810 = vmax.f32 %v1802, %v1809
      %v1811 = vsel %vm1786, %v1784, -inf
      %v1812 = vmax.f32 %v1804, %v1811
      %v1813 = vsel %vm1786, %v1785, -inf
      %v1814 = vmax.f32 %v1806, %v1813
      %v1815 = vmax.f32 %v1808, %v1810
      %v1816 = vmax.f32 %v1812, %v1814
      %v1817 = vmax.f32 %v1815, %v1816
      %1818 = vmax.xlane.f32.xlu0 %v1817
      %v1819 = vpop.xlane.xlu0 %1818
      %v1820 = vrot.slane %v1819, 4
      %v1821 = vmax.f32 %v1819, %v1820
      %v1822 = vrot.slane %v1821, 2
      %v1823 = vmax.f32 %v1821, %v1822
      %v1824 = vrot.slane %v1823, 1
      %v1825 = vmax.f32 %v1823, %v1824
      %s1826 = vtos %v1825
      %v1827 = vstv %s1826
      %v1828 = vsub.f32 %v1770, %v1827
      %v1829 = vsub.f32 %v1771, %v1827
      %v1830 = vsub.f32 %v1772, %v1827
      %v1831 = vsub.f32 %v1773, %v1827
      %v1832 = vsub.f32 %v1774, %v1827
      %v1833 = vsub.f32 %v1775, %v1827
      %v1834 = vsub.f32 %v1776, %v1827
      %v1835 = vsub.f32 %v1777, %v1827
      %v1836 = vsub.f32 %v1778, %v1827
      %v1837 = vsub.f32 %v1779, %v1827
      %v1838 = vsub.f32 %v1780, %v1827
      %v1839 = vsub.f32 %v1781, %v1827
      %v1840 = vsub.f32 %v1782, %v1827
      %v1841 = vsub.f32 %v1783, %v1827
      %v1842 = vsub.f32 %v1784, %v1827
      %v1843 = vsub.f32 %v1785, %v1827
      %v1844 = vmul.f32 %v1828, 1.442695
      %v1845 = vpow.pop %v1844
      %v1846 = vmul.f32 %v1829, 1.442695
      %v1847 = vpow.pop %v1846
      %v1848 = vmul.f32 %v1830, 1.442695
      %v1849 = vpow.pop %v1848
      %v1850 = vmul.f32 %v1831, 1.442695
      %v1851 = vpow.pop %v1850
      %v1852 = vmul.f32 %v1832, 1.442695
      %v1853 = vpow.pop %v1852
      %v1854 = vmul.f32 %v1833, 1.442695
      %v1855 = vpow.pop %v1854
      %v1856 = vmul.f32 %v1834, 1.442695
      %v1857 = vpow.pop %v1856
      %v1858 = vmul.f32 %v1835, 1.442695
      %v1859 = vpow.pop %v1858
      %v1860 = vmul.f32 %v1836, 1.442695
      %v1861 = vpow.pop %v1860
      %v1862 = vmul.f32 %v1837, 1.442695
      %v1863 = vpow.pop %v1862
      %v1864 = vmul.f32 %v1838, 1.442695
      %v1865 = vpow.pop %v1864
      %v1866 = vmul.f32 %v1839, 1.442695
      %v1867 = vpow.pop %v1866
      %v1868 = vmul.f32 %v1840, 1.442695
      %v1869 = vpow.pop %v1868
      %v1870 = vmul.f32 %v1841, 1.442695
      %v1871 = vpow.pop %v1870
      %v1872 = vmul.f32 %v1842, 1.442695
      %v1873 = vpow.pop %v1872
      %v1874 = vmul.f32 %v1843, 1.442695
      %v1875 = vpow.pop %v1874
      %v1876 = vld [vmem:[%s257] sm:$0xff]
      %v1877 = vld [vmem:[%s257 + $0x8] sm:$0xff]
      %v1878 = vld [vmem:[%s257 + $0x10] sm:$0xff]
      %v1879 = vld [vmem:[%s257 + $0x18] sm:$0xff]
      %v1880 = vld [vmem:[%s257 + $0x20] sm:$0xff]
      %v1881 = vld [vmem:[%s257 + $0x28] sm:$0xff]
      %v1882 = vld [vmem:[%s257 + $0x30] sm:$0xff]
      %v1883 = vld [vmem:[%s257 + $0x38] sm:$0xff]
      %v1884 = vld [vmem:[%s257 + $0x40] sm:$0xff]
      %v1885 = vld [vmem:[%s257 + $0x48] sm:$0xff]
      %v1886 = vld [vmem:[%s257 + $0x50] sm:$0xff]
      %v1887 = vld [vmem:[%s257 + $0x58] sm:$0xff]
      %v1888 = vld [vmem:[%s257 + $0x60] sm:$0xff]
      %v1889 = vld [vmem:[%s257 + $0x68] sm:$0xff]
      %v1890 = vld [vmem:[%s257 + $0x70] sm:$0xff]
      %v1891 = vld [vmem:[%s257 + $0x78] sm:$0xff]
      %v1892 = vmul.f32 %v1845, %v1876
      %v1893 = vmul.f32 %v1847, %v1877
      %v1894 = vmul.f32 %v1849, %v1878
      %v1895 = vmul.f32 %v1851, %v1879
      %v1896 = vmul.f32 %v1853, %v1880
      %v1897 = vmul.f32 %v1855, %v1881
      %v1898 = vmul.f32 %v1857, %v1882
      %v1899 = vmul.f32 %v1859, %v1883
      %v1900 = vmul.f32 %v1861, %v1884
      %v1901 = vmul.f32 %v1863, %v1885
      %v1902 = vmul.f32 %v1865, %v1886
      %v1903 = vmul.f32 %v1867, %v1887
      %v1904 = vmul.f32 %v1869, %v1888
      %v1905 = vmul.f32 %v1871, %v1889
      %v1906 = vmul.f32 %v1873, %v1890
      %v1907 = vmul.f32 %v1875, %v1891
      %v1908 = vlaneseq
      %v1909 = vshrl.u32 %v1908, 7
      %v1910 = vlaneseq
      %v1911 = vand.u32 %v1910, 127
      %v1912 = vmul.u32 %v1909, 16
      %vm1913 = vcmp.ge.s32.totalorder %v1911, %v1912
      %v1914 = vadd.s32 %v1909, 1
      %v1915 = vmul.u32 %v1914, 16
      %vm1916 = vcmp.lt.s32.totalorder %v1911, %v1915
      %vm1917 = vmand %vm1913, %vm1916
      %v1918 = vsel %vm1917, 1, 0
      %v1919 = vcvt.s32.f32 %v1918
      %1920 = vmatprep.subr.mxu0 0.0
      %1921 = vmatpush1.msra.mxu0 %v1892
      %1922 = vmatprep.subr.mxu0 0.0
      %1923 = vmatpush1.msra.mxu0 %v1893
      %1924 = vmatprep.subr.mxu0 0.0
      %1925 = vmatpush1.msra.mxu0 %v1894
      %1926 = vmatprep.subr.mxu0 0.0
      %1927 = vmatpush1.msra.mxu0 %v1895
      %1928 = vmatprep.subr.mxu0 0.0
      %1929 = vmatpush1.msra.mxu0 %v1896
      %1930 = vmatprep.subr.mxu0 0.0
      %1931 = vmatpush1.msra.mxu0 %v1897
      %1932 = vmatprep.subr.mxu0 0.0
      %1933 = vmatpush1.msra.mxu0 %v1898
      %1934 = vmatprep.subr.mxu0 0.0
      %1935 = vmatpush1.msra.mxu0 %v1899
      %1936 = vmatprep.subr.mxu0 0.0
      %1937 = vmatpush1.msra.mxu0 %v1900
      %1938 = vmatprep.subr.mxu0 0.0
      %1939 = vmatpush1.msra.mxu0 %v1901
      %1940 = vmatprep.subr.mxu0 0.0
      %1941 = vmatpush1.msra.mxu0 %v1902
      %1942 = vmatprep.subr.mxu0 0.0
      %1943 = vmatpush1.msra.mxu0 %v1903
      %1944 = vmatprep.subr.mxu0 0.0
      %1945 = vmatpush1.msra.mxu0 %v1904
      %1946 = vmatprep.subr.mxu0 0.0
      %1947 = vmatpush1.msra.mxu0 %v1905
      %1948 = vmatprep.subr.mxu0 0.0
      %1949 = vmatpush1.msra.mxu0 %v1906
      %1950 = vmatprep.subr.mxu0 0.0
      %1951 = vmatpush1.msra.mxu0 %v1907
      %1952 = vmatprep.subr.mxu0 0.0
      %1953 = vmatpush1.msra.mxu0 0.0
      %1954 = vmatprep.subr.mxu0 0.0
      %1955 = vmatpush1.msra.mxu0 0.0
      %1956 = vmatprep.subr.mxu0 0.0
      %1957 = vmatpush1.msra.mxu0 0.0
      %1958 = vmatprep.subr.mxu0 0.0
      %1959 = vmatpush1.msra.mxu0 0.0
      %1960 = vmatprep.subr.mxu0 0.0
      %1961 = vmatpush1.msra.mxu0 0.0
      %1962 = vmatprep.subr.mxu0 0.0
      %1963 = vmatpush1.msra.mxu0 0.0
      %1964 = vmatprep.subr.mxu0 0.0
      %1965 = vmatpush1.msra.mxu0 0.0
      %1966 = vmatprep.subr.mxu0 0.0
      %1967 = vmatpush1.msra.mxu0 0.0
      %1968 = vmatprep.subr.mxu0 0.0
      %1969 = vmatpush1.msra.mxu0 0.0
      %1970 = vmatprep.subr.mxu0 0.0
      %1971 = vmatpush1.msra.mxu0 0.0
      %1972 = vmatprep.subr.mxu0 0.0
      %1973 = vmatpush1.msra.mxu0 0.0
      %1974 = vmatprep.subr.mxu0 0.0
      %1975 = vmatpush1.msra.mxu0 0.0
      %1976 = vmatprep.subr.mxu0 0.0
      %1977 = vmatpush1.msra.mxu0 0.0
      %1978 = vmatprep.subr.mxu0 0.0
      %1979 = vmatpush1.msra.mxu0 0.0
      %1980 = vmatprep.subr.mxu0 0.0
      %1981 = vmatpush1.msra.mxu0 0.0
      %1982 = vmatprep.subr.mxu0 0.0
      %1983 = vmatpush1.msra.mxu0 0.0
      %1984 = vmatprep.mubr.f32.mxu0 0.0
      %1985 = vmatmul.mubr.f32.gmra.mrb[0].mxu0 %v1919
      %v1986 = vpop.f32.mrb[0].mxu0
      %v1987 = vadd.f32 0.0, %v1986
      %v1988 = vpop.f32.mrb[0].mxu0
      %1989 = vdwg.mxu0
      %1991 = vset.pattern.permute.xlu0 0
      %1992 = vperm.xlu0 %1991, %v1892
      %v1993 = vpop.permute.xlu0 %1992
      %1996 = vset.pattern.permute.xlu0 0
      %1997 = vperm.xlu0 %1996, %v1893
      %v1998 = vpop.permute.xlu0 %1997
      %2001 = vset.pattern.permute.xlu0 0
      %2002 = vperm.xlu0 %2001, %v1894
      %v2003 = vpop.permute.xlu0 %2002
      %2006 = vset.pattern.permute.xlu0 0
      %2007 = vperm.xlu0 %2006, %v1895
      %v2008 = vpop.permute.xlu0 %2007
      %2011 = vset.pattern.permute.xlu0 0
      %2012 = vperm.xlu0 %2011, %v1896
      %v2013 = vpop.permute.xlu0 %2012
      %2016 = vset.pattern.permute.xlu0 0
      %2017 = vperm.xlu0 %2016, %v1897
      %v2018 = vpop.permute.xlu0 %2017
      %2021 = vset.pattern.permute.xlu0 0
      %2022 = vperm.xlu0 %2021, %v1898
      %v2023 = vpop.permute.xlu0 %2022
      %2026 = vset.pattern.permute.xlu0 0
      %2027 = vperm.xlu0 %2026, %v1899
      %v2028 = vpop.permute.xlu0 %2027
      %2031 = vset.pattern.permute.xlu0 0
      %2032 = vperm.xlu0 %2031, %v1900
      %v2033 = vpop.permute.xlu0 %2032
      %2036 = vset.pattern.permute.xlu0 0
      %2037 = vperm.xlu0 %2036, %v1901
      %v2038 = vpop.permute.xlu0 %2037
      %2041 = vset.pattern.permute.xlu0 0
      %2042 = vperm.xlu0 %2041, %v1902
      %v2043 = vpop.permute.xlu0 %2042
      %2046 = vset.pattern.permute.xlu0 0
      %2047 = vperm.xlu0 %2046, %v1903
      %v2048 = vpop.permute.xlu0 %2047
      %2051 = vset.pattern.permute.xlu0 0
      %2052 = vperm.xlu0 %2051, %v1904
      %v2053 = vpop.permute.xlu0 %2052
      %2056 = vset.pattern.permute.xlu0 0
      %2057 = vperm.xlu0 %2056, %v1905
      %v2058 = vpop.permute.xlu0 %2057
      %2061 = vset.pattern.permute.xlu0 0
      %2062 = vperm.xlu0 %2061, %v1906
      %v2063 = vpop.permute.xlu0 %2062
      %2066 = vset.pattern.permute.xlu0 0
      %2067 = vperm.xlu0 %2066, %v1907
      %v2068 = vpop.permute.xlu0 %2067
      %v2070 = vmul.f32 %v1993, %v1682
      %v2071 = vmul.f32 %v1998, %v1683
      %v2072 = vmul.f32 %v2003, %v1684
      %v2073 = vmul.f32 %v2008, %v1685
      %v2074 = vmul.f32 %v2013, %v1686
      %v2075 = vmul.f32 %v2018, %v1687
      %v2076 = vmul.f32 %v2023, %v1688
      %v2077 = vmul.f32 %v2028, %v1689
      %v2078 = vmul.f32 %v2033, %v1690
      %v2079 = vmul.f32 %v2038, %v1691
      %v2080 = vmul.f32 %v2043, %v1692
      %v2081 = vmul.f32 %v2048, %v1693
      %v2082 = vmul.f32 %v2053, %v1694
      %v2083 = vmul.f32 %v2058, %v1695
      %v2084 = vmul.f32 %v2063, %v1696
      %v2085 = vmul.f32 %v2068, %v1697
      %2086 = vmatprep.subr.mxu0 0.0
      %2087 = vmatpush1.msra.mxu0 %v2070
      %2088 = vmatprep.subr.mxu0 0.0
      %2089 = vmatpush1.msra.mxu0 %v2071
      %2090 = vmatprep.subr.mxu0 0.0
      %2091 = vmatpush1.msra.mxu0 %v2072
      %2092 = vmatprep.subr.mxu0 0.0
      %2093 = vmatpush1.msra.mxu0 %v2073
      %2094 = vmatprep.subr.mxu0 0.0
      %2095 = vmatpush1.msra.mxu0 %v2074
      %2096 = vmatprep.subr.mxu0 0.0
      %2097 = vmatpush1.msra.mxu0 %v2075
      %2098 = vmatprep.subr.mxu0 0.0
      %2099 = vmatpush1.msra.mxu0 %v2076
      %2100 = vmatprep.subr.mxu0 0.0
      %2101 = vmatpush1.msra.mxu0 %v2077
      %2102 = vmatprep.subr.mxu0 0.0
      %2103 = vmatpush1.msra.mxu0 %v2078
      %2104 = vmatprep.subr.mxu0 0.0
      %2105 = vmatpush1.msra.mxu0 %v2079
      %2106 = vmatprep.subr.mxu0 0.0
      %2107 = vmatpush1.msra.mxu0 %v2080
      %2108 = vmatprep.subr.mxu0 0.0
      %2109 = vmatpush1.msra.mxu0 %v2081
      %2110 = vmatprep.subr.mxu0 0.0
      %2111 = vmatpush1.msra.mxu0 %v2082
      %2112 = vmatprep.subr.mxu0 0.0
      %2113 = vmatpush1.msra.mxu0 %v2083
      %2114 = vmatprep.subr.mxu0 0.0
      %2115 = vmatpush1.msra.mxu0 %v2084
      %2116 = vmatprep.subr.mxu0 0.0
      %2117 = vmatpush1.msra.mxu0 %v2085
      %2118 = vmatprep.subr.mxu0 0.0
      %2119 = vmatpush1.msra.mxu0 0.0
      %2120 = vmatprep.subr.mxu0 0.0
      %2121 = vmatpush1.msra.mxu0 0.0
      %2122 = vmatprep.subr.mxu0 0.0
      %2123 = vmatpush1.msra.mxu0 0.0
      %2124 = vmatprep.subr.mxu0 0.0
      %2125 = vmatpush1.msra.mxu0 0.0
      %2126 = vmatprep.subr.mxu0 0.0
      %2127 = vmatpush1.msra.mxu0 0.0
      %2128 = vmatprep.subr.mxu0 0.0
      %2129 = vmatpush1.msra.mxu0 0.0
      %2130 = vmatprep.subr.mxu0 0.0
      %2131 = vmatpush1.msra.mxu0 0.0
      %2132 = vmatprep.subr.mxu0 0.0
      %2133 = vmatpush1.msra.mxu0 0.0
      %2134 = vmatprep.subr.mxu0 0.0
      %2135 = vmatpush1.msra.mxu0 0.0
      %2136 = vmatprep.subr.mxu0 0.0
      %2137 = vmatpush1.msra.mxu0 0.0
      %2138 = vmatprep.subr.mxu0 0.0
      %2139 = vmatpush1.msra.mxu0 0.0
      %2140 = vmatprep.subr.mxu0 0.0
      %2141 = vmatpush1.msra.mxu0 0.0
      %2142 = vmatprep.subr.mxu0 0.0
      %2143 = vmatpush1.msra.mxu0 0.0
      %2144 = vmatprep.subr.mxu0 0.0
      %2145 = vmatpush1.msra.mxu0 0.0
      %2146 = vmatprep.subr.mxu0 0.0
      %2147 = vmatpush1.msra.mxu0 0.0
      %2148 = vmatprep.subr.mxu0 0.0
      %2149 = vmatpush1.msra.mxu0 0.0
      %2150 = vmatprep.mubr.f32.mxu0 0.0
      %2151 = vmatmul.mubr.f32.gmra.mrb[0].mxu0 %v1919
      %v2152 = vpop.f32.mrb[0].mxu0
      %v2153 = vadd.f32 0.0, %v2152
      %v2154 = vpop.f32.mrb[0].mxu0
      %2155 = vdwg.mxu0
      %2157 = vset.pattern.permute.xlu0 0
      %2158 = vperm.xlu0 %2157, %v1987
      %v2159 = vpop.permute.xlu0 %2158
      %v2161 = vrcp.pop %v2159
      %v2162 = vmul.f32 %v2153, %v2161
      %v2163 = vlaneseq
      %v2164 = vshrl.u32 %v2163, 7
      %v2165 = vsub.s32 0, %v2164
      %v2166 = vrot.slane %v301, %v2165
      %v2168 = vsel %vm322, %v2162, 0
      %v2171 = vsel %vm322, %v292, 0
      %2173 = vmatprep.subr.mxu0 0.0
      %2174 = vmatpush1.xpose.msra.mxu0 %v2171
      %2175 = vmatprep.subr.mxu0 0.0
      %2176 = vmatpush1.xpose.msra.mxu0 0.0
      %2177 = vmatprep.subr.mxu0 0.0
      %2178 = vmatpush1.xpose.msra.mxu0 0.0
      %2179 = vmatprep.subr.mxu0 0.0
      %2180 = vmatpush1.xpose.msra.mxu0 0.0
      %2181 = vmatprep.subr.mxu0 0.0
      %2182 = vmatpush1.xpose.msra.mxu0 0.0
      %2183 = vmatprep.subr.mxu0 0.0
      %2184 = vmatpush1.xpose.msra.mxu0 0.0
      %2185 = vmatprep.subr.mxu0 0.0
      %2186 = vmatpush1.xpose.msra.mxu0 0.0
      %2187 = vmatprep.subr.mxu0 0.0
      %2188 = vmatpush1.xpose.msra.mxu0 0.0
      %2189 = vmatprep.subr.mxu0 0.0
      %2190 = vmatpush1.xpose.msra.mxu0 0.0
      %2191 = vmatprep.subr.mxu0 0.0
      %2192 = vmatpush1.xpose.msra.mxu0 0.0
      %2193 = vmatprep.subr.mxu0 0.0
      %2194 = vmatpush1.xpose.msra.mxu0 0.0
      %2195 = vmatprep.subr.mxu0 0.0
      %2196 = vmatpush1.xpose.msra.mxu0 0.0
      %2197 = vmatprep.subr.mxu0 0.0
      %2198 = vmatpush1.xpose.msra.mxu0 0.0
      %2199 = vmatprep.subr.mxu0 0.0
      %2200 = vmatpush1.xpose.msra.mxu0 0.0
      %2201 = vmatprep.subr.mxu0 0.0
      %2202 = vmatpush1.xpose.msra.mxu0 0.0
      %2203 = vmatprep.subr.mxu0 0.0
      %2204 = vmatpush1.xpose.msra.mxu0 0.0
      %2205 = vmatprep.subr.mxu0 0.0
      %2206 = vmatpush1.xpose.msra.mxu0 0.0
      %2207 = vmatprep.subr.mxu0 0.0
      %2208 = vmatpush1.xpose.msra.mxu0 0.0
      %2209 = vmatprep.subr.mxu0 0.0
      %2210 = vmatpush1.xpose.msra.mxu0 0.0
      %2211 = vmatprep.subr.mxu0 0.0
      %2212 = vmatpush1.xpose.msra.mxu0 0.0
      %2213 = vmatprep.subr.mxu0 0.0
      %2214 = vmatpush1.xpose.msra.mxu0 0.0
      %2215 = vmatprep.subr.mxu0 0.0
      %2216 = vmatpush1.xpose.msra.mxu0 0.0
      %2217 = vmatprep.subr.mxu0 0.0
      %2218 = vmatpush1.xpose.msra.mxu0 0.0
      %2219 = vmatprep.subr.mxu0 0.0
      %2220 = vmatpush1.xpose.msra.mxu0 0.0
      %2221 = vmatprep.subr.mxu0 0.0
      %2222 = vmatpush1.xpose.msra.mxu0 0.0
      %2223 = vmatprep.subr.mxu0 0.0
      %2224 = vmatpush1.xpose.msra.mxu0 0.0
      %2225 = vmatprep.subr.mxu0 0.0
      %2226 = vmatpush1.xpose.msra.mxu0 0.0
      %2227 = vmatprep.subr.mxu0 0.0
      %2228 = vmatpush1.xpose.msra.mxu0 0.0
      %2229 = vmatprep.subr.mxu0 0.0
      %2230 = vmatpush1.xpose.msra.mxu0 0.0
      %2231 = vmatprep.subr.mxu0 0.0
      %2232 = vmatpush1.xpose.msra.mxu0 0.0
      %2233 = vmatprep.subr.mxu0 0.0
      %2234 = vmatpush1.xpose.msra.mxu0 0.0
      %2235 = vmatprep.subr.mxu0 0.0
      %2236 = vmatpush1.xpose.msra.mxu0 0.0
      %2237 = vmatprep.mubr.f32.mxu0 0.0
      %2238 = vmatmul.mubr.f32.gmra.mrb[0].mxu0 %v2168
      %v2239 = vpop.f32.mrb[0].mxu0
      %v2240 = vadd.f32 %v2166, %v2239
      %v2241 = vpop.f32.mrb[0].mxu0
      %2242 = vdwg.mxu0
      %v2243 = vld [vmem:[%s261] sm:$0xff]
      %vm2244 = vcmask 64512
      %v2246 = vsel %vm2244, %v2240, 0
      %2248 = vmatprep.subr.mxu0 0.0
      %2249 = vmatpush1.xpose.msra.mxu0 %v2246
      %2250 = vmatprep.subr.mxu0 0.0
      %2251 = vmatpush1.xpose.msra.mxu0 0.0
      %2252 = vmatprep.subr.mxu0 0.0
      %2253 = vmatpush1.xpose.msra.mxu0 0.0
      %2254 = vmatprep.subr.mxu0 0.0
      %2255 = vmatpush1.xpose.msra.mxu0 0.0
      %2256 = vmatprep.subr.mxu0 0.0
      %2257 = vmatpush1.xpose.msra.mxu0 0.0
      %2258 = vmatprep.subr.mxu0 0.0
      %2259 = vmatpush1.xpose.msra.mxu0 0.0
      %2260 = vmatprep.subr.mxu0 0.0
      %2261 = vmatpush1.xpose.msra.mxu0 0.0
      %2262 = vmatprep.subr.mxu0 0.0
      %2263 = vmatpush1.xpose.msra.mxu0 0.0
      %2264 = vmatprep.subr.mxu0 0.0
      %2265 = vmatpush1.xpose.msra.mxu0 0.0
      %2266 = vmatprep.subr.mxu0 0.0
      %2267 = vmatpush1.xpose.msra.mxu0 0.0
      %2268 = vmatprep.subr.mxu0 0.0
      %2269 = vmatpush1.xpose.msra.mxu0 0.0
      %2270 = vmatprep.subr.mxu0 0.0
      %2271 = vmatpush1.xpose.msra.mxu0 0.0
      %2272 = vmatprep.subr.mxu0 0.0
      %2273 = vmatpush1.xpose.msra.mxu0 0.0
      %2274 = vmatprep.subr.mxu0 0.0
      %2275 = vmatpush1.xpose.msra.mxu0 0.0
      %2276 = vmatprep.subr.mxu0 0.0
      %2277 = vmatpush1.xpose.msra.mxu0 0.0
      %2278 = vmatprep.subr.mxu0 0.0
      %2279 = vmatpush1.xpose.msra.mxu0 0.0
      %2280 = vmatprep.subr.mxu0 0.0
      %2281 = vmatpush1.xpose.msra.mxu0 0.0
      %2282 = vmatprep.subr.mxu0 0.0
      %2283 = vmatpush1.xpose.msra.mxu0 0.0
      %2284 = vmatprep.subr.mxu0 0.0
      %2285 = vmatpush1.xpose.msra.mxu0 0.0
      %2286 = vmatprep.subr.mxu0 0.0
      %2287 = vmatpush1.xpose.msra.mxu0 0.0
      %2288 = vmatprep.subr.mxu0 0.0
      %2289 = vmatpush1.xpose.msra.mxu0 0.0
      %2290 = vmatprep.subr.mxu0 0.0
      %2291 = vmatpush1.xpose.msra.mxu0 0.0
      %2292 = vmatprep.subr.mxu0 0.0
      %2293 = vmatpush1.xpose.msra.mxu0 0.0
      %2294 = vmatprep.subr.mxu0 0.0
      %2295 = vmatpush1.xpose.msra.mxu0 0.0
      %2296 = vmatprep.subr.mxu0 0.0
      %2297 = vmatpush1.xpose.msra.mxu0 0.0
      %2298 = vmatprep.subr.mxu0 0.0
      %2299 = vmatpush1.xpose.msra.mxu0 0.0
      %2300 = vmatprep.subr.mxu0 0.0
      %2301 = vmatpush1.xpose.msra.mxu0 0.0
      %2302 = vmatprep.subr.mxu0 0.0
      %2303 = vmatpush1.xpose.msra.mxu0 0.0
      %2304 = vmatprep.subr.mxu0 0.0
      %2305 = vmatpush1.xpose.msra.mxu0 0.0
      %2306 = vmatprep.subr.mxu0 0.0
      %2307 = vmatpush1.xpose.msra.mxu0 0.0
      %2308 = vmatprep.subr.mxu0 0.0
      %2309 = vmatpush1.xpose.msra.mxu0 0.0
      %2310 = vmatprep.subr.mxu0 0.0
      %2311 = vmatpush1.xpose.msra.mxu0 0.0
      %2312 = vmatprep.mubr.f32.mxu0 0.0
      %2313 = vmatmul.mubr.f32.gmra.mrb[0].mxu0 %v2246
      %v2314 = vpop.f32.mrb[0].mxu0
      %v2315 = vadd.f32 0.0, %v2314
      %v2316 = vpop.f32.mrb[0].mxu0
      %2317 = vdwg.mxu0
      %vm2318 = vcmp.eq.s32.totalorder %v1909, %v1911
      %v2319 = vmul.f32 %v2240, %v2240
      %v2320 = vsel %vm2244, %v2319, 0.0
      %2321 = vadd.xlane.f32.xlu0 %v2320
      %v2322 = vpop.xlane.xlu0 %2321
      %v2323 = vsel %vm2318, %v2315, 0.0
      %v2324 = vsel %vm2244, %v2323, 0.0
      %v2325 = vrot.slane %v2324, 4
      %v2326 = vadd.f32 %v2324, %v2325
      %v2327 = vrot.slane %v2326, 2
      %v2328 = vadd.f32 %v2326, %v2327
      %v2329 = vrot.slane %v2328, 1
      %v2330 = vadd.f32 %v2328, %v2329
      %v2331 = vmul.f32 %v2315, -2.0
      %v2332 = vadd.f32 %v2331, %v2330
      %v2333 = vadd.f32 %v2332, %v2322
      %v2334 = vmul.f32 %v2333, -0.5
      %v2335 = vmul.f32 %v2334, 1.442695
      %v2336 = vpow.pop %v2335
      %v2337 = vsel %vm2318, 0.0, %v2336
      %v2339 = vsel %vm2244, %v2337, 0
      %2341 = vmatprep.subr.mxu0 0.0
      %2342 = vmatpush1.msra.mxu0 %v2243
      %2343 = vmatprep.subr.mxu0 0.0
      %2344 = vmatpush1.msra.mxu0 0.0
      %2345 = vmatprep.subr.mxu0 0.0
      %2346 = vmatpush1.msra.mxu0 0.0
      %2347 = vmatprep.subr.mxu0 0.0
      %2348 = vmatpush1.msra.mxu0 0.0
      %2349 = vmatprep.subr.mxu0 0.0
      %2350 = vmatpush1.msra.mxu0 0.0
      %2351 = vmatprep.subr.mxu0 0.0
      %2352 = vmatpush1.msra.mxu0 0.0
      %2353 = vmatprep.subr.mxu0 0.0
      %2354 = vmatpush1.msra.mxu0 0.0
      %2355 = vmatprep.subr.mxu0 0.0
      %2356 = vmatpush1.msra.mxu0 0.0
      %2357 = vmatprep.subr.mxu0 0.0
      %2358 = vmatpush1.msra.mxu0 0.0
      %2359 = vmatprep.subr.mxu0 0.0
      %2360 = vmatpush1.msra.mxu0 0.0
      %2361 = vmatprep.subr.mxu0 0.0
      %2362 = vmatpush1.msra.mxu0 0.0
      %2363 = vmatprep.subr.mxu0 0.0
      %2364 = vmatpush1.msra.mxu0 0.0
      %2365 = vmatprep.subr.mxu0 0.0
      %2366 = vmatpush1.msra.mxu0 0.0
      %2367 = vmatprep.subr.mxu0 0.0
      %2368 = vmatpush1.msra.mxu0 0.0
      %2369 = vmatprep.subr.mxu0 0.0
      %2370 = vmatpush1.msra.mxu0 0.0
      %2371 = vmatprep.subr.mxu0 0.0
      %2372 = vmatpush1.msra.mxu0 0.0
      %2373 = vmatprep.subr.mxu0 0.0
      %2374 = vmatpush1.msra.mxu0 0.0
      %2375 = vmatprep.subr.mxu0 0.0
      %2376 = vmatpush1.msra.mxu0 0.0
      %2377 = vmatprep.subr.mxu0 0.0
      %2378 = vmatpush1.msra.mxu0 0.0
      %2379 = vmatprep.subr.mxu0 0.0
      %2380 = vmatpush1.msra.mxu0 0.0
      %2381 = vmatprep.subr.mxu0 0.0
      %2382 = vmatpush1.msra.mxu0 0.0
      %2383 = vmatprep.subr.mxu0 0.0
      %2384 = vmatpush1.msra.mxu0 0.0
      %2385 = vmatprep.subr.mxu0 0.0
      %2386 = vmatpush1.msra.mxu0 0.0
      %2387 = vmatprep.subr.mxu0 0.0
      %2388 = vmatpush1.msra.mxu0 0.0
      %2389 = vmatprep.subr.mxu0 0.0
      %2390 = vmatpush1.msra.mxu0 0.0
      %2391 = vmatprep.subr.mxu0 0.0
      %2392 = vmatpush1.msra.mxu0 0.0
      %2393 = vmatprep.subr.mxu0 0.0
      %2394 = vmatpush1.msra.mxu0 0.0
      %2395 = vmatprep.subr.mxu0 0.0
      %2396 = vmatpush1.msra.mxu0 0.0
      %2397 = vmatprep.subr.mxu0 0.0
      %2398 = vmatpush1.msra.mxu0 0.0
      %2399 = vmatprep.subr.mxu0 0.0
      %2400 = vmatpush1.msra.mxu0 0.0
      %2401 = vmatprep.subr.mxu0 0.0
      %2402 = vmatpush1.msra.mxu0 0.0
      %2403 = vmatprep.subr.mxu0 0.0
      %2404 = vmatpush1.msra.mxu0 0.0
      %2405 = vmatprep.mubr.f32.mxu0 0.0
      %2406 = vmatmul.mubr.f32.gmra.mrb[0].mxu0 %v2339
      %v2407 = vpop.f32.mrb[0].mxu0
      %v2408 = vadd.f32 1e-06, %v2407
      %v2409 = vpop.f32.mrb[0].mxu0
      %2410 = vdwg.mxu0
      %vm2411 = vcmask 31744
      %v2412 = vsel %vm2411, %v2408, 0.0
      %2413 = vadd.xlane.f32.xlu0 %v2412
      %v2414 = vpop.xlane.xlu0 %2413
      %v2415 = vlog2.pop %v2408
      %v2416 = vmul.f32 %v2415, 0.6931472
      %v2417 = vlog2.pop %v2414
      %v2418 = vmul.f32 %v2417, 0.6931472
      %v2419 = vsub.f32 %v2416, %v2418
      %2420 = vst.msk [vmem:[%s265] sm:$0xff] %vm2411, %v2419
      %v2421 = vmul.f32 %v2419, %v2243
      %v2422 = vsel %vm2411, %v2421, 0.0
      %2423 = vadd.xlane.f32.xlu0 %v2422
      %v2424 = vpop.xlane.xlu0 %2423
      %v2425 = vrot.slane %v2424, 4
      %v2426 = vadd.f32 %v2424, %v2425
      %v2427 = vrot.slane %v2426, 2
      %v2428 = vadd.f32 %v2426, %v2427
      %v2429 = vrot.slane %v2428, 1
      %v2430 = vadd.f32 %v2428, %v2429
      %v2431 = vsub.f32 0.0, %v2430
      %vm2432 = vcmask 0
      %2433 = vst.msk [vmem:[%s268] sm:$0x1] %vm2432, %v2431
      %p2434 = scmp.lt.s32.totalorder %s17, 1
      %s2435 = scalar_select %p2434, %s17, 1
      %s2436 = smul.addr %s2435, 8
      %s2437 = scalar_lea.vmem %s4, %s2436
      %p2438 = scmp.lt.s32.totalorder %s17, 1
      %s2439 = scalar_select %p2438, %s17, 1
      %s2440 = scalar_lea.vmem %s5, %s2439
      // Predicated region
      $region37: #{forward_batched.1} parent=35 // pred_check
        %p2441 = pneg %p134
      $region38: #{forward_batched.1} parent=35 // pred_check_branch
        %2443 = sbr.rel (%p2441) target = $region40
      $region39: #{forward_batched.1} parent=35 // pred_region
        _
      $region40: #{forward_batched.1} parent=35 // pred_fallthru
        _
      // Predicated region
      $region41: #{forward_batched.1} parent=35 // pred_check
        %p2444 = pneg %p160
      $region42: #{forward_batched.1} parent=35 // pred_check_branch
        %2446 = sbr.rel (%p2444) target = $region44
      $region43: #{forward_batched.1} parent=35 // pred_region
        _
      $region44: #{forward_batched.1} parent=35 // pred_fallthru
        _
    $region36: #{forward_batched.1} parent=5 // pred_fallthru
      _
    %p2447 = scmp.le.s32.totalorder 2, %s12
    // Predicated region
    $region45: #{forward_batched.1} parent=5 // pred_check
      %p2448 = pneg %p2447
    $region46: #{forward_batched.1} parent=5 // pred_check_branch
      %2450 = sbr.rel (%p2448) target = $region48
    $region47: #{forward_batched.1} parent=5 // pred_region
      %s2451 = ssub.s32 %s12, 2
      // Predicated region
      $region49: #{forward_batched.1} parent=47 // pred_check
        %p2452 = pneg %p140
      $region50: #{forward_batched.1} parent=47 // pred_check_branch
        %2454 = sbr.rel (%p2452) target = $region52
      $region51: #{forward_batched.1} parent=47 // pred_region
        %p2455 = scmp.lt.s32.totalorder %s18, 1
        %s2456 = scalar_select %p2455, %s18, 1
        %s2457 = smul.addr %s2456, 8
        %s2458 = scalar_lea.vmem %s4, %s2457
      $region52: #{forward_batched.1} parent=47 // pred_fallthru
        _
      // Predicated region
      $region53: #{forward_batched.1} parent=47 // pred_check
        %p2459 = pneg %p166
      $region54: #{forward_batched.1} parent=47 // pred_check_branch
        %2461 = sbr.rel (%p2459) target = $region56
      $region55: #{forward_batched.1} parent=47 // pred_region
        %p2462 = scmp.lt.s32.totalorder %s18, 1
        %s2463 = scalar_select %p2462, %s18, 1
        %s2464 = scalar_lea.vmem %s5, %s2463
      $region56: #{forward_batched.1} parent=47 // pred_fallthru
        _
    $region48: #{forward_batched.1} parent=5 // pred_fallthru
      _
  $region6: #{forward_batched.1} parent=0 // loop_footer
    %s16 = sadd.s32 1, %s12
  $region7: #{forward_batched.1} parent=0 // loop_footer_branch
    %11 = sbr.rel target = $region3
  $region8: #{forward_batched.1} parent=0 // loop_exit
    _

</llo_original>
